<compile_context>
chip_gen: v7x
topology: tpu7x:2x2x1
jax: 0.10.0
libtpu: 0.0.40
codegen_flags: <defaults>
</compile_context>

<pallas_src>
import jax
import jax.numpy as jnp
import numpy as np
from jax.experimental import pallas as pl
from jax.experimental.pallas import tpu as pltpu

EPS = 1e-5  # torch.nn.LayerNorm default eps


def _round_up(x, m):
    return ((x + m - 1) // m) * m


def _cdiv(a, b):
    return (a + b - 1) // b


def _pick_tile(bp, tile_poly):
    tile = max(8, min(_round_up(int(tile_poly), 8), _round_up(bp, 8)))
    steps = _cdiv(bp, tile)
    # Prefer an even number of grid steps so both v7x TensorCores get balanced
    # work under dimension_semantics=("parallel",) (harmless on v5e/v6e).
    if steps % 2 == 1 and bp > 8:
        steps += 1
        tile = max(8, _round_up(_cdiv(bp, steps), 8))
    return tile


def _layernorm_ref(x, g, b):
    mu = jnp.mean(x, axis=-1, keepdims=True)
    var = jnp.mean((x - mu) ** 2, axis=-1, keepdims=True)
    return (x - mu) * jax.lax.rsqrt(var + EPS) * g + b


def _make_kernel(P, H, OUT):
    PH = P * H
    f32, bf16 = jnp.float32, jnp.bfloat16

    def kernel(x_ref, mpts_ref, valid_ref, w1_ref, w2_ref, w3a_ref, w3b_ref,
               w4_ref, w5_ref, w6_ref, stats_ref, exp_ref, vec_ref, out_ref):
        # packed bias / LayerNorm params (static slices of one small f32 block);
        # rows 0..11 are tiled x P to PH lanes, row 12 = b5 (H), row 13 = b6 (OUT)
        b1 = vec_ref[0:1, :PH];   g1 = vec_ref[1:2, :PH];   be1 = vec_ref[2:3, :PH]
        b2 = vec_ref[3:4, :PH];   g2 = vec_ref[4:5, :PH];   be2 = vec_ref[5:6, :PH]
        b3 = vec_ref[6:7, :PH];   g3 = vec_ref[7:8, :PH];   be3 = vec_ref[8:9, :PH]
        b4 = vec_ref[9:10, :PH];  g4 = vec_ref[10:11, :PH]; be4 = vec_ref[11:12, :PH]
        b5 = vec_ref[12:13, :H]
        b6 = vec_ref[13:14, :OUT]

        S = stats_ref[...]  # block-diagonal (1/H)*ones: per-32-lane-group mean via MXU

        def ln(h, g, b):
            # two-pass (centered) LayerNorm; stats matmuls ride the idle MXU
            mu = jnp.dot(h.astype(bf16), S, preferred_element_type=f32)
            d = h - mu
            var = jnp.dot((d * d).astype(bf16), S, preferred_element_type=f32)
            return d * jax.lax.rsqrt(var + EPS) * g + b

        def pool_bcast(h):
            # max over the P groups of H lanes, result replicated into every group
            z = h
            if (P & (P - 1)) == 0:                 # log2 roll ladder
                s = PH // 2
                while s >= H:
                    z = jnp.maximum(z, pltpu.roll(z, shift=s, axis=1))
                    s //= 2
            else:                                   # generic fallback
                for k in range(1, P):
                    z = jnp.maximum(z, pltpu.roll(h, shift=k * H, axis=1))
            return z

        # lane-expanded per-point mask, {0,1} exactly (tiny K=P matmul instead of
        # an HBM-heavy precomputed (rows, PH) mask or an in-kernel lane repeat)
        m_lane = jnp.dot(mpts_ref[...], exp_ref[...], preferred_element_type=f32)

        x = x_ref[...]                              # already bf16 on the wire

        # ---- fc1: Linear -> LN -> ReLU -> Linear -> LN -> ReLU (per point) ----
        h = jnp.dot(x, w1_ref[...], preferred_element_type=f32) + b1
        h = jnp.maximum(ln(h, g1, be1), 0.0)
        h = jnp.dot(h.astype(bf16), w2_ref[...], preferred_element_type=f32) + b2
        h = jnp.maximum(ln(h, g2, be2), 0.0)
        h = h * m_lane          # "scatter into zeros" semantics of the torch code

        pooled = pool_bcast(h)                      # per-polyline max, all groups

        # ---- fc2: concat-free first Linear (block-diag W3a on h, W3b on pooled) ----
        h = (jnp.dot(h.astype(bf16), w3a_ref[...], preferred_element_type=f32)
             + jnp.dot(pooled.astype(bf16), w3b_ref[...], preferred_element_type=f32)
             + b3)
        h = jnp.maximum(ln(h, g3, be3), 0.0)
        h = jnp.dot(h.astype(bf16), w4_ref[...], preferred_element_type=f32) + b4
        h = jnp.maximum(ln(h, g4, be4), 0.0)
        h = h * m_lane

        feat = pool_bcast(h)                        # (tile, PH), replicated per group

        # ---- fc_out: zero-padded (PH, H) weight selects group 0 of the replicated
        #      feature (no value slicing), then Linear -> ReLU -> Linear ----
        o = jnp.dot(feat.astype(bf16), w5_ref[...], preferred_element_type=f32) + b5
        o = jnp.maximum(o, 0.0)
        o = jnp.dot(o.astype(bf16), w6_ref[...], preferred_element_type=f32) + b6
        # TODO(synk): OUT=64 < 128 lanes -> masked vst; repack only if stores show
        # up on the profile (reviewer: measure first).
        out_ref[...] = o * valid_ref[...]

    return kernel


def polyline_net(polylines, polylines_mask, params, *, tile_poly=512):
    """polylines: (bs, poly_num, point_num, C); polylines_mask: (bs, poly_num, point_num)."""
    bs, PN, P, C = polylines.shape
    BP = bs * PN
    H = params["w1"].shape[1]
    OUT = params["w6"].shape[1]
    PC, PH = P * C, P * H
    VL = max(PH, OUT)

    tile = _pick_tile(BP, tile_poly)
    BP_pad = _round_up(BP, tile)
    grid = (BP_pad // tile,)
    pad = BP_pad - BP

    f32, bf16 = jnp.float32, jnp.bfloat16

    # ---- inputs: one polyline per row, all P points packed along lanes, bf16 ----
    x = polylines.reshape(BP, PC).astype(bf16)
    m = polylines_mask.reshape(BP, P).astype(bf16)
    valid = (jnp.sum(polylines_mask.reshape(BP, P).astype(f32), axis=1,
                     keepdims=True) > 0).astype(f32)
    if pad:                                  # padded polylines: mask 0, valid 0 -> output 0
        x = jnp.pad(x, ((0, pad), (0, 0)))
        m = jnp.pad(m, ((0, pad), (0, 0)))
        valid = jnp.pad(valid, ((0, pad), (0, 0)))

    # ---- weights: block-diagonal so all P points share one lane-dense matmul ----
    eyeP = jnp.eye(P, dtype=f32)
    bd = lambda w: jnp.kron(eyeP, w.astype(f32)).astype(bf16)
    w1b = bd(params["w1"])                                    # (P*C, P*H)
    w2b = bd(params["w2"])                                    # (P*H, P*H)
    w3ab = bd(params["w3"][:H])                               # acts on per-point h
    w3bb = bd(params["w3"][H:])                               # acts on pooled (broadcast)
    w4b = bd(params["w4"])
    w5w = jnp.pad(params["w5"].astype(f32), ((0, PH - H), (0, 0))).astype(bf16)  # (P*H, H)
    w6 = params["w6"].astype(bf16)                            # (H, OUT)
    stats = jnp.kron(eyeP, jnp.full((H, H), 1.0 / H, f32)).astype(bf16)          # LN group mean
    expand = jnp.kron(eyeP, jnp.ones((1, H), f32)).astype(bf16)                  # (P, P*H) mask expander

    # ---- 14 bias / LayerNorm vectors, tiled x P, packed into one f32 block ----
    def tile_vec(name, reps):
        v = jnp.tile(params[name].reshape(1, -1).astype(f32), (1, reps))
        return jnp.pad(v, ((0, 0), (0, VL - v.shape[1])))

    vecs = jnp.concatenate(
        [tile_vec(n, P) for n in ("b1", "g1", "be1", "b2", "g2", "be2",
                                  "b3", "g3", "be3", "b4", "g4", "be4")]
        + [tile_vec("b5", 1), tile_vec("b6", 1)], axis=0)     # (14, VL)

    def full(a):
        return pl.BlockSpec(a.shape, lambda i: (0, 0))

    # right-sized scoped VMEM: ~a dozen live (tile, PH) f32 activations + weights
    act_bytes = 4 * tile * PH
    vmem_limit = int(max(16 * act_bytes + (6 << 20), 12 << 20))

    out = pl.pallas_call(
        _make_kernel(P, H, OUT),
        out_shape=jax.ShapeDtypeStruct((BP_pad, OUT), jnp.float32),
        grid_spec=pltpu.PrefetchScalarGridSpec(
            num_scalar_prefetch=0,
            grid=grid,
            in_specs=[
                pl.BlockSpec((tile, PC), lambda i: (i, 0)),    # packed points (bf16)
                pl.BlockSpec((tile, P), lambda i: (i, 0)),     # per-point mask
                pl.BlockSpec((tile, 1), lambda i: (i, 0)),     # per-polyline valid
                full(w1b), full(w2b), full(w3ab), full(w3bb), full(w4b),
                full(w5w), full(w6), full(stats), full(expand), full(vecs),
            ],
            out_specs=pl.BlockSpec((tile, OUT), lambda i: (i, 0)),
        ),
        compiler_params=pltpu.CompilerParams(
            dimension_semantics=("parallel",),
            vmem_limit_bytes=vmem_limit,
        ),
    )(x, m, valid, w1b, w2b, w3ab, w3bb, w4b, w5w, w6, stats, expand, vecs)

    return out[:BP].reshape(bs, PN, OUT)


def ref_forward(polylines, polylines_mask, p):
    """Pure-JAX f32 reference reproducing the PyTorch masked-scatter semantics."""
    x = polylines.astype(jnp.float32)
    m = polylines_mask.astype(jnp.float32)[..., None]
    h = jnp.maximum(_layernorm_ref(x @ p["w1"] + p["b1"], p["g1"], p["be1"]), 0.0)
    h = jnp.maximum(_layernorm_ref(h @ p["w2"] + p["b2"], p["g2"], p["be2"]), 0.0)
    h = h * m
    pooled = jnp.max(h, axis=2)
    cat = jnp.concatenate([h, jnp.broadcast_to(pooled[:, :, None, :], h.shape)], axis=-1)
    h = jnp.maximum(_layernorm_ref(cat @ p["w3"] + p["b3"], p["g3"], p["be3"]), 0.0)
    h = jnp.maximum(_layernorm_ref(h @ p["w4"] + p["b4"], p["g4"], p["be4"]), 0.0)
    h = h * m
    feat = jnp.max(h, axis=2)
    o = jnp.maximum(feat @ p["w5"] + p["b5"], 0.0)
    o = o @ p["w6"] + p["b6"]
    valid = (jnp.sum(polylines_mask.astype(jnp.float32), axis=-1, keepdims=True) > 0).astype(o.dtype)
    return o * valid


def init_params(key, input_size, hidden_size, out_size):
    ks = jax.random.split(key, 24)

    def lin(k, i, o):
        return 0.05 * jax.random.normal(k, (i, o), jnp.float32)

    def vec(k, o, base):
        return base + 0.05 * jax.random.normal(k, (1, o), jnp.float32)

    H, C, O = hidden_size, input_size, out_size
    return dict(
        w1=lin(ks[0], C, H),      b1=vec(ks[1], H, 0.0),
        g1=vec(ks[2], H, 1.0),    be1=vec(ks[3], H, 0.0),
        w2=lin(ks[4], H, H),      b2=vec(ks[5], H, 0.0),
        g2=vec(ks[6], H, 1.0),    be2=vec(ks[7], H, 0.0),
        w3=lin(ks[8], 2 * H, H),  b3=vec(ks[9], H, 0.0),
        g3=vec(ks[10], H, 1.0),   be3=vec(ks[11], H, 0.0),
        w4=lin(ks[12], H, H),     b4=vec(ks[13], H, 0.0),
        g4=vec(ks[14], H, 1.0),   be4=vec(ks[15], H, 0.0),
        w5=lin(ks[16], H, H),     b5=vec(ks[17], H, 0.0),
        w6=lin(ks[18], H, O),     b6=vec(ks[19], O, 0.0),
    )


if __name__ == "__main__":
    key = jax.random.PRNGKey(0)
    k_x, k_m, k_p = jax.random.split(key, 3)

    bs, poly_num, point_num, C = 2, 40, 8, 16
    hidden, out_size = 32, 64

    polylines = jax.random.normal(k_x, (bs, poly_num, point_num, C), jnp.float32)
    mask = jax.random.bernoulli(k_m, 0.7, (bs, poly_num, point_num))
    # exercise the "fully invalid polyline" and "fully valid polyline" paths
    mask = mask.at[0, 0, :].set(False)
    mask = mask.at[0, 1, :].set(True)

    params = init_params(k_p, C, hidden, out_size)
    ref = jax.block_until_ready(ref_forward(polylines, mask, params))

    # explicit small tile: wrapper rounds to an even grid (BP=80 -> tile 24, 4 steps)
    out = jax.block_until_ready(polyline_net(polylines, mask, params, tile_poly=32))
    np.testing.assert_allclose(np.asarray(out), np.asarray(ref), rtol=5e-2, atol=5e-2)

    # default (large) tile: wrapper auto-caps to 2 balanced grid steps for BP=80
    out2 = jax.block_until_ready(polyline_net(polylines, mask, params))
    np.testing.assert_allclose(np.asarray(out2), np.asarray(ref), rtol=5e-2, atol=5e-2)

    print("KERNEL_OK")
</pallas_src>

<mosaic_0001>
module attributes {stable_mosaic.version = 11 : i64} {
  func.func @kernel(%arg0: i32, %arg1: memref<24x128xbf16, #tpu.memory_space<vmem>>, %arg2: memref<24x8xbf16, #tpu.memory_space<vmem>>, %arg3: memref<24x1xf32, #tpu.memory_space<vmem>>, %arg4: memref<128x256xbf16, #tpu.memory_space<vmem>>, %arg5: memref<256x256xbf16, #tpu.memory_space<vmem>>, %arg6: memref<256x256xbf16, #tpu.memory_space<vmem>>, %arg7: memref<256x256xbf16, #tpu.memory_space<vmem>>, %arg8: memref<256x256xbf16, #tpu.memory_space<vmem>>, %arg9: memref<256x32xbf16, #tpu.memory_space<vmem>>, %arg10: memref<32x64xbf16, #tpu.memory_space<vmem>>, %arg11: memref<256x256xbf16, #tpu.memory_space<vmem>>, %arg12: memref<8x256xbf16, #tpu.memory_space<vmem>>, %arg13: memref<14x256xf32, #tpu.memory_space<vmem>>, %arg14: memref<24x64xf32, #tpu.memory_space<vmem>>) attributes {dimension_semantics = [#tpu.dimension_semantics<parallel>], iteration_bounds = array<i64: 4>, scalar_prefetch = 0 : i64, scratch_operands = 0 : i64, tpu.core_type = #tpu.core_type<tc>, window_params = [{transform_indices = @transform_0, window_bounds = array<i64: 24, 128>}, {transform_indices = @transform_1, window_bounds = array<i64: 24, 8>}, {transform_indices = @transform_2, window_bounds = array<i64: 24, 1>}, {pipeline_mode = #tpu.pipeline_mode<synchronous>, transform_indices = @transform_3, window_bounds = array<i64: 128, 256>}, {pipeline_mode = #tpu.pipeline_mode<synchronous>, transform_indices = @transform_4, window_bounds = array<i64: 256, 256>}, {pipeline_mode = #tpu.pipeline_mode<synchronous>, transform_indices = @transform_5, window_bounds = array<i64: 256, 256>}, {pipeline_mode = #tpu.pipeline_mode<synchronous>, transform_indices = @transform_6, window_bounds = array<i64: 256, 256>}, {pipeline_mode = #tpu.pipeline_mode<synchronous>, transform_indices = @transform_7, window_bounds = array<i64: 256, 256>}, {pipeline_mode = #tpu.pipeline_mode<synchronous>, transform_indices = @transform_8, window_bounds = array<i64: 256, 32>}, {pipeline_mode = #tpu.pipeline_mode<synchronous>, transform_indices = @transform_9, window_bounds = array<i64: 32, 64>}, {pipeline_mode = #tpu.pipeline_mode<synchronous>, transform_indices = @transform_10, window_bounds = array<i64: 256, 256>}, {pipeline_mode = #tpu.pipeline_mode<synchronous>, transform_indices = @transform_11, window_bounds = array<i64: 8, 256>}, {pipeline_mode = #tpu.pipeline_mode<synchronous>, transform_indices = @transform_12, window_bounds = array<i64: 14, 256>}, {transform_indices = @transform_13, window_bounds = array<i64: 24, 64>}]} {
    %c0 = arith.constant 0 : index
    %c0_0 = arith.constant 0 : index
    %0 = vector.load %arg13[%c0, %c0_0] : memref<14x256xf32, #tpu.memory_space<vmem>>, vector<1x256xf32>
    %c1 = arith.constant 1 : index
    %c0_1 = arith.constant 0 : index
    %1 = vector.load %arg13[%c1, %c0_1] : memref<14x256xf32, #tpu.memory_space<vmem>>, vector<1x256xf32>
    %c2 = arith.constant 2 : index
    %c0_2 = arith.constant 0 : index
    %2 = vector.load %arg13[%c2, %c0_2] : memref<14x256xf32, #tpu.memory_space<vmem>>, vector<1x256xf32>
    %c3 = arith.constant 3 : index
    %c0_3 = arith.constant 0 : index
    %3 = vector.load %arg13[%c3, %c0_3] : memref<14x256xf32, #tpu.memory_space<vmem>>, vector<1x256xf32>
    %c4 = arith.constant 4 : index
    %c0_4 = arith.constant 0 : index
    %4 = vector.load %arg13[%c4, %c0_4] : memref<14x256xf32, #tpu.memory_space<vmem>>, vector<1x256xf32>
    %c5 = arith.constant 5 : index
    %c0_5 = arith.constant 0 : index
    %5 = vector.load %arg13[%c5, %c0_5] : memref<14x256xf32, #tpu.memory_space<vmem>>, vector<1x256xf32>
    %c6 = arith.constant 6 : index
    %c0_6 = arith.constant 0 : index
    %6 = vector.load %arg13[%c6, %c0_6] : memref<14x256xf32, #tpu.memory_space<vmem>>, vector<1x256xf32>
    %c7 = arith.constant 7 : index
    %c0_7 = arith.constant 0 : index
    %7 = vector.load %arg13[%c7, %c0_7] : memref<14x256xf32, #tpu.memory_space<vmem>>, vector<1x256xf32>
    %c8 = arith.constant 8 : index
    %c0_8 = arith.constant 0 : index
    %8 = vector.load %arg13[%c8, %c0_8] : memref<14x256xf32, #tpu.memory_space<vmem>>, vector<1x256xf32>
    %c9 = arith.constant 9 : index
    %c0_9 = arith.constant 0 : index
    %9 = vector.load %arg13[%c9, %c0_9] : memref<14x256xf32, #tpu.memory_space<vmem>>, vector<1x256xf32>
    %c10 = arith.constant 10 : index
    %c0_10 = arith.constant 0 : index
    %10 = vector.load %arg13[%c10, %c0_10] : memref<14x256xf32, #tpu.memory_space<vmem>>, vector<1x256xf32>
    %c11 = arith.constant 11 : index
    %c0_11 = arith.constant 0 : index
    %11 = vector.load %arg13[%c11, %c0_11] : memref<14x256xf32, #tpu.memory_space<vmem>>, vector<1x256xf32>
    %c12 = arith.constant 12 : index
    %c0_12 = arith.constant 0 : index
    %12 = vector.load %arg13[%c12, %c0_12] : memref<14x256xf32, #tpu.memory_space<vmem>>, vector<1x32xf32>
    %c13 = arith.constant 13 : index
    %c0_13 = arith.constant 0 : index
    %13 = vector.load %arg13[%c13, %c0_13] : memref<14x256xf32, #tpu.memory_space<vmem>>, vector<1x64xf32>
    %c0_14 = arith.constant 0 : index
    %c0_15 = arith.constant 0 : index
    %14 = vector.load %arg11[%c0_14, %c0_15] : memref<256x256xbf16, #tpu.memory_space<vmem>>, vector<256x256xbf16>
    %c0_16 = arith.constant 0 : index
    %c0_17 = arith.constant 0 : index
    %15 = vector.load %arg2[%c0_16, %c0_17] : memref<24x8xbf16, #tpu.memory_space<vmem>>, vector<24x8xbf16>
    %c0_18 = arith.constant 0 : index
    %c0_19 = arith.constant 0 : index
    %16 = vector.load %arg12[%c0_18, %c0_19] : memref<8x256xbf16, #tpu.memory_space<vmem>>, vector<8x256xbf16>
    %cst = arith.constant dense<0.000000e+00> : vector<24x256xf32>
    %17 = tpu.matmul %15, %16, %cst {dimension_numbers = #tpu.dot_dimension_numbers<[1], [0], [0], [1], [0, 0, 1, 1], [], []>} : vector<24x8xbf16>, vector<8x256xbf16>, vector<24x256xf32> -> vector<24x256xf32>
    %c0_20 = arith.constant 0 : index
    %c0_21 = arith.constant 0 : index
    %18 = vector.load %arg1[%c0_20, %c0_21] : memref<24x128xbf16, #tpu.memory_space<vmem>>, vector<24x128xbf16>
    %c0_22 = arith.constant 0 : index
    %c0_23 = arith.constant 0 : index
    %19 = vector.load %arg4[%c0_22, %c0_23] : memref<128x256xbf16, #tpu.memory_space<vmem>>, vector<128x256xbf16>
    %cst_24 = arith.constant dense<0.000000e+00> : vector<24x256xf32>
    %20 = tpu.matmul %18, %19, %cst_24 {dimension_numbers = #tpu.dot_dimension_numbers<[1], [0], [0], [1], [0, 0, 1, 1], [], []>} : vector<24x128xbf16>, vector<128x256xbf16>, vector<24x256xf32> -> vector<24x256xf32>
    %21 = vector.broadcast %0 : vector<1x256xf32> to vector<24x256xf32>
    %22 = arith.addf %20, %21 : vector<24x256xf32>
    %23 = arith.truncf %22 : vector<24x256xf32> to vector<24x256xbf16>
    %cst_25 = arith.constant dense<0.000000e+00> : vector<24x256xf32>
    %24 = tpu.matmul %23, %14, %cst_25 {dimension_numbers = #tpu.dot_dimension_numbers<[1], [0], [0], [1], [0, 0, 1, 1], [], []>} : vector<24x256xbf16>, vector<256x256xbf16>, vector<24x256xf32> -> vector<24x256xf32>
    %25 = arith.subf %22, %24 : vector<24x256xf32>
    %26 = arith.mulf %25, %25 : vector<24x256xf32>
    %27 = arith.truncf %26 : vector<24x256xf32> to vector<24x256xbf16>
    %cst_26 = arith.constant dense<0.000000e+00> : vector<24x256xf32>
    %28 = tpu.matmul %27, %14, %cst_26 {dimension_numbers = #tpu.dot_dimension_numbers<[1], [0], [0], [1], [0, 0, 1, 1], [], []>} : vector<24x256xbf16>, vector<256x256xbf16>, vector<24x256xf32> -> vector<24x256xf32>
    %cst_27 = arith.constant 9.99999974E-6 : f32
    %29 = vector.broadcast %cst_27 : f32 to vector<24x256xf32>
    %30 = arith.addf %28, %29 : vector<24x256xf32>
    %31 = math.rsqrt %30 : vector<24x256xf32>
    %32 = arith.mulf %25, %31 : vector<24x256xf32>
    %33 = vector.broadcast %1 : vector<1x256xf32> to vector<24x256xf32>
    %34 = arith.mulf %32, %33 : vector<24x256xf32>
    %35 = vector.broadcast %2 : vector<1x256xf32> to vector<24x256xf32>
    %36 = arith.addf %34, %35 : vector<24x256xf32>
    %cst_28 = arith.constant 0.000000e+00 : f32
    %37 = vector.broadcast %cst_28 : f32 to vector<24x256xf32>
    %38 = arith.maximumf %36, %37 : vector<24x256xf32>
    %39 = arith.truncf %38 : vector<24x256xf32> to vector<24x256xbf16>
    %c0_29 = arith.constant 0 : index
    %c0_30 = arith.constant 0 : index
    %40 = vector.load %arg5[%c0_29, %c0_30] : memref<256x256xbf16, #tpu.memory_space<vmem>>, vector<256x256xbf16>
    %cst_31 = arith.constant dense<0.000000e+00> : vector<24x256xf32>
    %41 = tpu.matmul %39, %40, %cst_31 {dimension_numbers = #tpu.dot_dimension_numbers<[1], [0], [0], [1], [0, 0, 1, 1], [], []>} : vector<24x256xbf16>, vector<256x256xbf16>, vector<24x256xf32> -> vector<24x256xf32>
    %42 = vector.broadcast %3 : vector<1x256xf32> to vector<24x256xf32>
    %43 = arith.addf %41, %42 : vector<24x256xf32>
    %44 = arith.truncf %43 : vector<24x256xf32> to vector<24x256xbf16>
    %cst_32 = arith.constant dense<0.000000e+00> : vector<24x256xf32>
    %45 = tpu.matmul %44, %14, %cst_32 {dimension_numbers = #tpu.dot_dimension_numbers<[1], [0], [0], [1], [0, 0, 1, 1], [], []>} : vector<24x256xbf16>, vector<256x256xbf16>, vector<24x256xf32> -> vector<24x256xf32>
    %46 = arith.subf %43, %45 : vector<24x256xf32>
    %47 = arith.mulf %46, %46 : vector<24x256xf32>
    %48 = arith.truncf %47 : vector<24x256xf32> to vector<24x256xbf16>
    %cst_33 = arith.constant dense<0.000000e+00> : vector<24x256xf32>
    %49 = tpu.matmul %48, %14, %cst_33 {dimension_numbers = #tpu.dot_dimension_numbers<[1], [0], [0], [1], [0, 0, 1, 1], [], []>} : vector<24x256xbf16>, vector<256x256xbf16>, vector<24x256xf32> -> vector<24x256xf32>
    %cst_34 = arith.constant 9.99999974E-6 : f32
    %50 = vector.broadcast %cst_34 : f32 to vector<24x256xf32>
    %51 = arith.addf %49, %50 : vector<24x256xf32>
    %52 = math.rsqrt %51 : vector<24x256xf32>
    %53 = arith.mulf %46, %52 : vector<24x256xf32>
    %54 = vector.broadcast %4 : vector<1x256xf32> to vector<24x256xf32>
    %55 = arith.mulf %53, %54 : vector<24x256xf32>
    %56 = vector.broadcast %5 : vector<1x256xf32> to vector<24x256xf32>
    %57 = arith.addf %55, %56 : vector<24x256xf32>
    %cst_35 = arith.constant 0.000000e+00 : f32
    %58 = vector.broadcast %cst_35 : f32 to vector<24x256xf32>
    %59 = arith.maximumf %57, %58 : vector<24x256xf32>
    %60 = arith.mulf %59, %17 : vector<24x256xf32>
    %c128_i32 = arith.constant 128 : i32
    %61 = tpu.dynamic_rotate %60 by %c128_i32 dim 1 : vector<24x256xf32>, i32 -> vector<24x256xf32>
    %62 = arith.maximumf %60, %61 : vector<24x256xf32>
    %c64_i32 = arith.constant 64 : i32
    %63 = tpu.dynamic_rotate %62 by %c64_i32 dim 1 : vector<24x256xf32>, i32 -> vector<24x256xf32>
    %64 = arith.maximumf %62, %63 : vector<24x256xf32>
    %c32_i32 = arith.constant 32 : i32
    %65 = tpu.dynamic_rotate %64 by %c32_i32 dim 1 : vector<24x256xf32>, i32 -> vector<24x256xf32>
    %66 = arith.maximumf %64, %65 : vector<24x256xf32>
    %67 = arith.truncf %60 : vector<24x256xf32> to vector<24x256xbf16>
    %c0_36 = arith.constant 0 : index
    %c0_37 = arith.constant 0 : index
    %68 = vector.load %arg6[%c0_36, %c0_37] : memref<256x256xbf16, #tpu.memory_space<vmem>>, vector<256x256xbf16>
    %cst_38 = arith.constant dense<0.000000e+00> : vector<24x256xf32>
    %69 = tpu.matmul %67, %68, %cst_38 {dimension_numbers = #tpu.dot_dimension_numbers<[1], [0], [0], [1], [0, 0, 1, 1], [], []>} : vector<24x256xbf16>, vector<256x256xbf16>, vector<24x256xf32> -> vector<24x256xf32>
    %70 = arith.truncf %66 : vector<24x256xf32> to vector<24x256xbf16>
    %c0_39 = arith.constant 0 : index
    %c0_40 = arith.constant 0 : index
    %71 = vector.load %arg7[%c0_39, %c0_40] : memref<256x256xbf16, #tpu.memory_space<vmem>>, vector<256x256xbf16>
    %cst_41 = arith.constant dense<0.000000e+00> : vector<24x256xf32>
    %72 = tpu.matmul %70, %71, %cst_41 {dimension_numbers = #tpu.dot_dimension_numbers<[1], [0], [0], [1], [0, 0, 1, 1], [], []>} : vector<24x256xbf16>, vector<256x256xbf16>, vector<24x256xf32> -> vector<24x256xf32>
    %73 = arith.addf %69, %72 : vector<24x256xf32>
    %74 = vector.broadcast %6 : vector<1x256xf32> to vector<24x256xf32>
    %75 = arith.addf %73, %74 : vector<24x256xf32>
    %76 = arith.truncf %75 : vector<24x256xf32> to vector<24x256xbf16>
    %cst_42 = arith.constant dense<0.000000e+00> : vector<24x256xf32>
    %77 = tpu.matmul %76, %14, %cst_42 {dimension_numbers = #tpu.dot_dimension_numbers<[1], [0], [0], [1], [0, 0, 1, 1], [], []>} : vector<24x256xbf16>, vector<256x256xbf16>, vector<24x256xf32> -> vector<24x256xf32>
    %78 = arith.subf %75, %77 : vector<24x256xf32>
    %79 = arith.mulf %78, %78 : vector<24x256xf32>
    %80 = arith.truncf %79 : vector<24x256xf32> to vector<24x256xbf16>
    %cst_43 = arith.constant dense<0.000000e+00> : vector<24x256xf32>
    %81 = tpu.matmul %80, %14, %cst_43 {dimension_numbers = #tpu.dot_dimension_numbers<[1], [0], [0], [1], [0, 0, 1, 1], [], []>} : vector<24x256xbf16>, vector<256x256xbf16>, vector<24x256xf32> -> vector<24x256xf32>
    %cst_44 = arith.constant 9.99999974E-6 : f32
    %82 = vector.broadcast %cst_44 : f32 to vector<24x256xf32>
    %83 = arith.addf %81, %82 : vector<24x256xf32>
    %84 = math.rsqrt %83 : vector<24x256xf32>
    %85 = arith.mulf %78, %84 : vector<24x256xf32>
    %86 = vector.broadcast %7 : vector<1x256xf32> to vector<24x256xf32>
    %87 = arith.mulf %85, %86 : vector<24x256xf32>
    %88 = vector.broadcast %8 : vector<1x256xf32> to vector<24x256xf32>
    %89 = arith.addf %87, %88 : vector<24x256xf32>
    %cst_45 = arith.constant 0.000000e+00 : f32
    %90 = vector.broadcast %cst_45 : f32 to vector<24x256xf32>
    %91 = arith.maximumf %89, %90 : vector<24x256xf32>
    %92 = arith.truncf %91 : vector<24x256xf32> to vector<24x256xbf16>
    %c0_46 = arith.constant 0 : index
    %c0_47 = arith.constant 0 : index
    %93 = vector.load %arg8[%c0_46, %c0_47] : memref<256x256xbf16, #tpu.memory_space<vmem>>, vector<256x256xbf16>
    %cst_48 = arith.constant dense<0.000000e+00> : vector<24x256xf32>
    %94 = tpu.matmul %92, %93, %cst_48 {dimension_numbers = #tpu.dot_dimension_numbers<[1], [0], [0], [1], [0, 0, 1, 1], [], []>} : vector<24x256xbf16>, vector<256x256xbf16>, vector<24x256xf32> -> vector<24x256xf32>
    %95 = vector.broadcast %9 : vector<1x256xf32> to vector<24x256xf32>
    %96 = arith.addf %94, %95 : vector<24x256xf32>
    %97 = arith.truncf %96 : vector<24x256xf32> to vector<24x256xbf16>
    %cst_49 = arith.constant dense<0.000000e+00> : vector<24x256xf32>
    %98 = tpu.matmul %97, %14, %cst_49 {dimension_numbers = #tpu.dot_dimension_numbers<[1], [0], [0], [1], [0, 0, 1, 1], [], []>} : vector<24x256xbf16>, vector<256x256xbf16>, vector<24x256xf32> -> vector<24x256xf32>
    %99 = arith.subf %96, %98 : vector<24x256xf32>
    %100 = arith.mulf %99, %99 : vector<24x256xf32>
    %101 = arith.truncf %100 : vector<24x256xf32> to vector<24x256xbf16>
    %cst_50 = arith.constant dense<0.000000e+00> : vector<24x256xf32>
    %102 = tpu.matmul %101, %14, %cst_50 {dimension_numbers = #tpu.dot_dimension_numbers<[1], [0], [0], [1], [0, 0, 1, 1], [], []>} : vector<24x256xbf16>, vector<256x256xbf16>, vector<24x256xf32> -> vector<24x256xf32>
    %cst_51 = arith.constant 9.99999974E-6 : f32
    %103 = vector.broadcast %cst_51 : f32 to vector<24x256xf32>
    %104 = arith.addf %102, %103 : vector<24x256xf32>
    %105 = math.rsqrt %104 : vector<24x256xf32>
    %106 = arith.mulf %99, %105 : vector<24x256xf32>
    %107 = vector.broadcast %10 : vector<1x256xf32> to vector<24x256xf32>
    %108 = arith.mulf %106, %107 : vector<24x256xf32>
    %109 = vector.broadcast %11 : vector<1x256xf32> to vector<24x256xf32>
    %110 = arith.addf %108, %109 : vector<24x256xf32>
    %cst_52 = arith.constant 0.000000e+00 : f32
    %111 = vector.broadcast %cst_52 : f32 to vector<24x256xf32>
    %112 = arith.maximumf %110, %111 : vector<24x256xf32>
    %113 = arith.mulf %112, %17 : vector<24x256xf32>
    %c128_i32_53 = arith.constant 128 : i32
    %114 = tpu.dynamic_rotate %113 by %c128_i32_53 dim 1 : vector<24x256xf32>, i32 -> vector<24x256xf32>
    %115 = arith.maximumf %113, %114 : vector<24x256xf32>
    %c64_i32_54 = arith.constant 64 : i32
    %116 = tpu.dynamic_rotate %115 by %c64_i32_54 dim 1 : vector<24x256xf32>, i32 -> vector<24x256xf32>
    %117 = arith.maximumf %115, %116 : vector<24x256xf32>
    %c32_i32_55 = arith.constant 32 : i32
    %118 = tpu.dynamic_rotate %117 by %c32_i32_55 dim 1 : vector<24x256xf32>, i32 -> vector<24x256xf32>
    %119 = arith.maximumf %117, %118 : vector<24x256xf32>
    %120 = arith.truncf %119 : vector<24x256xf32> to vector<24x256xbf16>
    %c0_56 = arith.constant 0 : index
    %c0_57 = arith.constant 0 : index
    %121 = vector.load %arg9[%c0_56, %c0_57] : memref<256x32xbf16, #tpu.memory_space<vmem>>, vector<256x32xbf16>
    %cst_58 = arith.constant dense<0.000000e+00> : vector<24x32xf32>
    %122 = tpu.matmul %120, %121, %cst_58 {dimension_numbers = #tpu.dot_dimension_numbers<[1], [0], [0], [1], [0, 0, 1, 1], [], []>} : vector<24x256xbf16>, vector<256x32xbf16>, vector<24x32xf32> -> vector<24x32xf32>
    %123 = vector.broadcast %12 : vector<1x32xf32> to vector<24x32xf32>
    %124 = arith.addf %122, %123 : vector<24x32xf32>
    %cst_59 = arith.constant 0.000000e+00 : f32
    %125 = vector.broadcast %cst_59 : f32 to vector<24x32xf32>
    %126 = arith.maximumf %124, %125 : vector<24x32xf32>
    %127 = arith.truncf %126 : vector<24x32xf32> to vector<24x32xbf16>
    %c0_60 = arith.constant 0 : index
    %c0_61 = arith.constant 0 : index
    %128 = vector.load %arg10[%c0_60, %c0_61] : memref<32x64xbf16, #tpu.memory_space<vmem>>, vector<32x64xbf16>
    %cst_62 = arith.constant dense<0.000000e+00> : vector<24x64xf32>
    %129 = tpu.matmul %127, %128, %cst_62 {dimension_numbers = #tpu.dot_dimension_numbers<[1], [0], [0], [1], [0, 0, 1, 1], [], []>} : vector<24x32xbf16>, vector<32x64xbf16>, vector<24x64xf32> -> vector<24x64xf32>
    %130 = vector.broadcast %13 : vector<1x64xf32> to vector<24x64xf32>
    %131 = arith.addf %129, %130 : vector<24x64xf32>
    %c0_63 = arith.constant 0 : index
    %c0_64 = arith.constant 0 : index
    %132 = vector.load %arg3[%c0_63, %c0_64] : memref<24x1xf32, #tpu.memory_space<vmem>>, vector<24x1xf32>
    %133 = vector.broadcast %132 : vector<24x1xf32> to vector<24x64xf32>
    %134 = arith.mulf %131, %133 : vector<24x64xf32>
    %c0_65 = arith.constant 0 : index
    %c0_66 = arith.constant 0 : index
    %135 = vector.load %arg14[%c0_65, %c0_66] : memref<24x64xf32, #tpu.memory_space<vmem>>, vector<24x64xf32>
    tpu.vector_store %arg14[%c0_65, %c0_66], %134 {strides = array<i32>} : memref<24x64xf32, #tpu.memory_space<vmem>>, vector<24x64xf32>,
    return
  }
  func.func @transform_0(%arg0: i32) -> (i32, i32) {
    %c0_i32 = arith.constant 0 : i32
    %c0_i32_0 = arith.constant 0 : i32
    return %arg0, %c0_i32 : i32, i32
  }
  func.func @transform_1(%arg0: i32) -> (i32, i32) {
    %c0_i32 = arith.constant 0 : i32
    %c0_i32_0 = arith.constant 0 : i32
    return %arg0, %c0_i32 : i32, i32
  }
  func.func @transform_2(%arg0: i32) -> (i32, i32) {
    %c0_i32 = arith.constant 0 : i32
    %c0_i32_0 = arith.constant 0 : i32
    return %arg0, %c0_i32 : i32, i32
  }
  func.func @transform_3(%arg0: i32) -> (i32, i32) {
    %c0_i32 = arith.constant 0 : i32
    %c0_i32_0 = arith.constant 0 : i32
    %c0_i32_1 = arith.constant 0 : i32
    return %c0_i32, %c0_i32_0 : i32, i32
  }
  func.func @transform_4(%arg0: i32) -> (i32, i32) {
    %c0_i32 = arith.constant 0 : i32
    %c0_i32_0 = arith.constant 0 : i32
    %c0_i32_1 = arith.constant 0 : i32
    return %c0_i32, %c0_i32_0 : i32, i32
  }
  func.func @transform_5(%arg0: i32) -> (i32, i32) {
    %c0_i32 = arith.constant 0 : i32
    %c0_i32_0 = arith.constant 0 : i32
    %c0_i32_1 = arith.constant 0 : i32
    return %c0_i32, %c0_i32_0 : i32, i32
  }
  func.func @transform_6(%arg0: i32) -> (i32, i32) {
    %c0_i32 = arith.constant 0 : i32
    %c0_i32_0 = arith.constant 0 : i32
    %c0_i32_1 = arith.constant 0 : i32
    return %c0_i32, %c0_i32_0 : i32, i32
  }
  func.func @transform_7(%arg0: i32) -> (i32, i32) {
    %c0_i32 = arith.constant 0 : i32
    %c0_i32_0 = arith.constant 0 : i32
    %c0_i32_1 = arith.constant 0 : i32
    return %c0_i32, %c0_i32_0 : i32, i32
  }
  func.func @transform_8(%arg0: i32) -> (i32, i32) {
    %c0_i32 = arith.constant 0 : i32
    %c0_i32_0 = arith.constant 0 : i32
    %c0_i32_1 = arith.constant 0 : i32
    return %c0_i32, %c0_i32_0 : i32, i32
  }
  func.func @transform_9(%arg0: i32) -> (i32, i32) {
    %c0_i32 = arith.constant 0 : i32
    %c0_i32_0 = arith.constant 0 : i32
    %c0_i32_1 = arith.constant 0 : i32
    return %c0_i32, %c0_i32_0 : i32, i32
  }
  func.func @transform_10(%arg0: i32) -> (i32, i32) {
    %c0_i32 = arith.constant 0 : i32
    %c0_i32_0 = arith.constant 0 : i32
    %c0_i32_1 = arith.constant 0 : i32
    return %c0_i32, %c0_i32_0 : i32, i32
  }
  func.func @transform_11(%arg0: i32) -> (i32, i32) {
    %c0_i32 = arith.constant 0 : i32
    %c0_i32_0 = arith.constant 0 : i32
    %c0_i32_1 = arith.constant 0 : i32
    return %c0_i32, %c0_i32_0 : i32, i32
  }
  func.func @transform_12(%arg0: i32) -> (i32, i32) {
    %c0_i32 = arith.constant 0 : i32
    %c0_i32_0 = arith.constant 0 : i32
    %c0_i32_1 = arith.constant 0 : i32
    return %c0_i32, %c0_i32_0 : i32, i32
  }
  func.func @transform_13(%arg0: i32) -> (i32, i32) {
    %c0_i32 = arith.constant 0 : i32
    %c0_i32_0 = arith.constant 0 : i32
    return %arg0, %c0_i32 : i32, i32
  }
}

</mosaic_0001>

<llo_original>
// kernel: tpu_custom_call.1
$region0: #{tpu_custom_call.1}
  #allocation0 [shape = 'u32[]', space=smem, size = 0x4, offset = 0x4, fixed_abs, tag = 'smem constant byte address 0x4 - core index']
  #allocation1 [shape = 'u32[144,128]{1,0:T(1,128)}', space=vmem, size = 0x12000, scoped, tag = 'internal scratch']
  %s0 = inlined_call_operand.vmem [shape: bf16[96,128], index: 0, kind: input, shape index: {}]
  %s1 = inlined_call_operand.vmem [shape: bf16[96,8], index: 1, kind: input, shape index: {}]
  %s2 = inlined_call_operand.vmem [shape: f32[96,1], index: 2, kind: input, shape index: {}]
  %s3 = inlined_call_operand.hbm [shape: bf16[128,256], index: 3, kind: input, shape index: {}]
  %s4 = inlined_call_operand.vmem [shape: bf16[256,256], index: 4, kind: input, shape index: {}]
  %s5 = inlined_call_operand.hbm [shape: bf16[256,256], index: 5, kind: input, shape index: {}]
  %s6 = inlined_call_operand.hbm [shape: bf16[256,256], index: 6, kind: input, shape index: {}]
  %s7 = inlined_call_operand.hbm [shape: bf16[256,256], index: 7, kind: input, shape index: {}]
  %s8 = inlined_call_operand.vmem [shape: bf16[256,32], index: 8, kind: input, shape index: {}]
  %s9 = inlined_call_operand.hbm [shape: bf16[32,64], index: 9, kind: input, shape index: {}]
  %s10 = inlined_call_operand.hbm [shape: bf16[256,256], index: 10, kind: input, shape index: {}]
  %s11 = inlined_call_operand.vmem [shape: bf16[8,256], index: 11, kind: input, shape index: {}]
  %s12 = inlined_call_operand.vmem [shape: f32[14,256], index: 12, kind: input, shape index: {}]
  %s13 = inlined_call_operand.vmem [shape: f32[96,64], index: 13, kind: output, shape index: {}]
  %s14 = sld [smem:[#allocation0]]
  $region109: #{tpu_custom_call.1} parent=0
    _
  %s16 = ssub.s32 1, %s14
  %s17 = scalar_select 0, %s16, %s14
  $region1: #{tpu_custom_call.1} parent=0
    #allocation2 [shape = 'u8[65536]{0}', space=vmem, size = 0x10000, scoped, tag = 'input window, operand 3, single buffered']
    #allocation3 [shape = 's32[2]{0}', space=sflag, size = 0x8, scoped, tag = 'scoped memory for tpu_custom_call.1']
    #allocation4 [shape = 'u8[131072]{0}', space=vmem, size = 0x20000, scoped, tag = 'input window, operand 5, single buffered']
    #allocation5 [shape = 's32[1]{0}', space=sflag, size = 0x4, scoped, tag = 'scoped memory for tpu_custom_call.1']
    #allocation6 [shape = 'u8[131072]{0}', space=vmem, size = 0x20000, scoped, tag = 'input window, operand 6, single buffered']
    #allocation7 [shape = 'u8[131072]{0}', space=vmem, size = 0x20000, scoped, tag = 'input window, operand 7, single buffered']
    #allocation8 [shape = 's32[1]{0}', space=sflag, size = 0x4, scoped, tag = 'scoped memory for tpu_custom_call.1']
    #allocation9 [shape = 'u8[8192]{0}', space=vmem, size = 0x2000, scoped, tag = 'input window, operand 9, single buffered']
    #allocation10 [shape = 'u8[131072]{0}', space=vmem, size = 0x20000, scoped, tag = 'input window, operand 10, single buffered']
    #allocation11 [shape = 's32[1]{0}', space=sflag, size = 0x4, scoped, tag = 'scoped memory for tpu_custom_call.1']
    %18 = vsyncpa [#allocation3], 0
    %19 = vsyncpa [#allocation5], 0
    %20 = vsyncpa [#allocation8], 0
    %21 = vsyncpa [#allocation11], 0
    loop: start=0, step=1, limit=6
    $region2: #{tpu_custom_call.1} parent=1 // loop_pre_header
      _
    $region3: #{tpu_custom_call.1} parent=1 // loop_header
      %s23 = sphi 0, %s27
      %p24 = scmp.ge.s32.totalorder %s23, 6
      %s33 = sphi 0, %s35
      %s36 = sphi 0, %s33
      %s37 = sphi 0, %s36
      %s53 = sphi 0, %s37
      %s59 = sphi 0, %s61
      %s62 = sphi 0, %s59
      %s63 = sphi 0, %s62
      %s79 = sphi 0, %s63
      %s85 = sphi 0, %s87
      %s88 = sphi 0, %s85
      %s89 = sphi 0, %s88
      %s105 = sphi 0, %s89
      %s109 = sphi 0, %s109
      %s111 = sphi 0, %s109
      %s112 = sphi 0, %s111
      %s126 = sphi 0, %s112
      %s130 = sphi 0, %s130
      %s132 = sphi 0, %s130
      %s133 = sphi 0, %s132
      %s147 = sphi 0, %s133
      %s151 = sphi 0, %s151
      %s153 = sphi 0, %s151
      %s154 = sphi 0, %s153
      %s168 = sphi 0, %s154
      %s172 = sphi 0, %s172
      %s174 = sphi 0, %s172
      %s175 = sphi 0, %s174
      %s189 = sphi 0, %s175
      %s193 = sphi 0, %s193
      %s195 = sphi 0, %s193
      %s196 = sphi 0, %s195
      %s210 = sphi 0, %s196
      %s214 = sphi 0, %s214
      %s216 = sphi 0, %s214
      %s217 = sphi 0, %s216
      %s231 = sphi 0, %s217
      %s235 = sphi 0, %s235
      %s237 = sphi 0, %s235
      %s238 = sphi 0, %s237
      %s252 = sphi 0, %s238
      %s256 = sphi 0, %s256
      %s258 = sphi 0, %s256
      %s259 = sphi 0, %s258
      %s273 = sphi 0, %s259
      %s277 = sphi 0, %s277
      %s279 = sphi 0, %s277
      %s280 = sphi 0, %s279
      %s294 = sphi 0, %s280
      %s298 = sphi 0, %s298
      %s300 = sphi 0, %s298
      %s301 = sphi 0, %s300
      %s315 = sphi 0, %s301
      %s321 = sphi 0, %s323
      %s324 = sphi 0, %s321
      %s325 = sphi 0, %s324
      %s341 = sphi 0, %s325
    $region4: #{tpu_custom_call.1} parent=1 // loop_header_branch
      %26 = sbr.rel (%p24) target = $region8
    $region5: #{tpu_custom_call.1} parent=1 // loop_body
      %s28 = ssub.s32 %s23, 1
      %s29 = ssub.s32 %s23, 2
      %s30 = sadd.s32 %s23, 1
      %s31 = ssub.s32 %s23, %s30
      %p32 = scmp.eq.s32.totalorder %s31, 0
      %s34 = sadd.s32 %s33, 1
      %s35 = scalar_select %p32, %s33, %s34
      %p38 = pneg %p32
      %p39 = scmp.eq.s32.totalorder %s23, 3
      %p40 = por %p38, %p39
      %p41 = scmp.ne.s32.totalorder %s33, %s36
      %p42 = scmp.eq.s32.totalorder %s23, 0
      %p43 = por %p41, %p42
      %p44 = scmp.ne.s32.totalorder %s33, %s36
      %p45 = scmp.eq.s32.totalorder %s28, 3
      %p46 = por %p44, %p45
      %p47 = scmp.ne.s32.totalorder %s36, %s37
      %p48 = scmp.eq.s32.totalorder %s28, 0
      %p49 = por %p47, %p48
      %p50 = scmp.ne.s32.totalorder %s36, %s37
      %p51 = scmp.eq.s32.totalorder %s29, 3
      %p52 = por %p50, %p51
      %p54 = scmp.ne.s32.totalorder %s37, %s53
      %p55 = scmp.eq.s32.totalorder %s29, 0
      %p56 = por %p54, %p55
      %s57 = ssub.s32 %s23, %s30
      %p58 = scmp.eq.s32.totalorder %s57, 0
      %s60 = sadd.s32 %s59, 1
      %s61 = scalar_select %p58, %s59, %s60
      %p64 = pneg %p58
      %p65 = scmp.eq.s32.totalorder %s23, 3
      %p66 = por %p64, %p65
      %p67 = scmp.ne.s32.totalorder %s59, %s62
      %p68 = scmp.eq.s32.totalorder %s23, 0
      %p69 = por %p67, %p68
      %p70 = scmp.ne.s32.totalorder %s59, %s62
      %p71 = scmp.eq.s32.totalorder %s28, 3
      %p72 = por %p70, %p71
      %p73 = scmp.ne.s32.totalorder %s62, %s63
      %p74 = scmp.eq.s32.totalorder %s28, 0
      %p75 = por %p73, %p74
      %p76 = scmp.ne.s32.totalorder %s62, %s63
      %p77 = scmp.eq.s32.totalorder %s29, 3
      %p78 = por %p76, %p77
      %p80 = scmp.ne.s32.totalorder %s63, %s79
      %p81 = scmp.eq.s32.totalorder %s29, 0
      %p82 = por %p80, %p81
      %s83 = ssub.s32 %s23, %s30
      %p84 = scmp.eq.s32.totalorder %s83, 0
      %s86 = sadd.s32 %s85, 1
      %s87 = scalar_select %p84, %s85, %s86
      %p90 = pneg %p84
      %p91 = scmp.eq.s32.totalorder %s23, 3
      %p92 = por %p90, %p91
      %p93 = scmp.ne.s32.totalorder %s85, %s88
      %p94 = scmp.eq.s32.totalorder %s23, 0
      %p95 = por %p93, %p94
      %p96 = scmp.ne.s32.totalorder %s85, %s88
      %p97 = scmp.eq.s32.totalorder %s28, 3
      %p98 = por %p96, %p97
      %p99 = scmp.ne.s32.totalorder %s88, %s89
      %p100 = scmp.eq.s32.totalorder %s28, 0
      %p101 = por %p99, %p100
      %p102 = scmp.ne.s32.totalorder %s88, %s89
      %p103 = scmp.eq.s32.totalorder %s29, 3
      %p104 = por %p102, %p103
      %p106 = scmp.ne.s32.totalorder %s89, %s105
      %p107 = scmp.eq.s32.totalorder %s29, 0
      %p108 = por %p106, %p107
      %s110 = sadd.s32 %s109, 1
      %p113 = scmp.eq.s32.totalorder %s23, 3
      %p114 = scmp.ne.s32.totalorder %s109, %s111
      %p115 = scmp.eq.s32.totalorder %s23, 0
      %p116 = por %p114, %p115
      %p117 = scmp.ne.s32.totalorder %s109, %s111
      %p118 = scmp.eq.s32.totalorder %s28, 3
      %p119 = por %p117, %p118
      %p120 = scmp.ne.s32.totalorder %s111, %s112
      %p121 = scmp.eq.s32.totalorder %s28, 0
      %p122 = por %p120, %p121
      %p123 = scmp.ne.s32.totalorder %s111, %s112
      %p124 = scmp.eq.s32.totalorder %s29, 3
      %p125 = por %p123, %p124
      %p127 = scmp.ne.s32.totalorder %s112, %s126
      %p128 = scmp.eq.s32.totalorder %s29, 0
      %p129 = por %p127, %p128
      %s131 = sadd.s32 %s130, 1
      %p134 = scmp.eq.s32.totalorder %s23, 3
      %p135 = scmp.ne.s32.totalorder %s130, %s132
      %p136 = scmp.eq.s32.totalorder %s23, 0
      %p137 = por %p135, %p136
      %p138 = scmp.ne.s32.totalorder %s130, %s132
      %p139 = scmp.eq.s32.totalorder %s28, 3
      %p140 = por %p138, %p139
      %p141 = scmp.ne.s32.totalorder %s132, %s133
      %p142 = scmp.eq.s32.totalorder %s28, 0
      %p143 = por %p141, %p142
      %p144 = scmp.ne.s32.totalorder %s132, %s133
      %p145 = scmp.eq.s32.totalorder %s29, 3
      %p146 = por %p144, %p145
      %p148 = scmp.ne.s32.totalorder %s133, %s147
      %p149 = scmp.eq.s32.totalorder %s29, 0
      %p150 = por %p148, %p149
      %s152 = sadd.s32 %s151, 1
      %p155 = scmp.eq.s32.totalorder %s23, 3
      %p156 = scmp.ne.s32.totalorder %s151, %s153
      %p157 = scmp.eq.s32.totalorder %s23, 0
      %p158 = por %p156, %p157
      %p159 = scmp.ne.s32.totalorder %s151, %s153
      %p160 = scmp.eq.s32.totalorder %s28, 3
      %p161 = por %p159, %p160
      %p162 = scmp.ne.s32.totalorder %s153, %s154
      %p163 = scmp.eq.s32.totalorder %s28, 0
      %p164 = por %p162, %p163
      %p165 = scmp.ne.s32.totalorder %s153, %s154
      %p166 = scmp.eq.s32.totalorder %s29, 3
      %p167 = por %p165, %p166
      %p169 = scmp.ne.s32.totalorder %s154, %s168
      %p170 = scmp.eq.s32.totalorder %s29, 0
      %p171 = por %p169, %p170
      %s173 = sadd.s32 %s172, 1
      %p176 = scmp.eq.s32.totalorder %s23, 3
      %p177 = scmp.ne.s32.totalorder %s172, %s174
      %p178 = scmp.eq.s32.totalorder %s23, 0
      %p179 = por %p177, %p178
      %p180 = scmp.ne.s32.totalorder %s172, %s174
      %p181 = scmp.eq.s32.totalorder %s28, 3
      %p182 = por %p180, %p181
      %p183 = scmp.ne.s32.totalorder %s174, %s175
      %p184 = scmp.eq.s32.totalorder %s28, 0
      %p185 = por %p183, %p184
      %p186 = scmp.ne.s32.totalorder %s174, %s175
      %p187 = scmp.eq.s32.totalorder %s29, 3
      %p188 = por %p186, %p187
      %p190 = scmp.ne.s32.totalorder %s175, %s189
      %p191 = scmp.eq.s32.totalorder %s29, 0
      %p192 = por %p190, %p191
      %s194 = sadd.s32 %s193, 1
      %p197 = scmp.eq.s32.totalorder %s23, 3
      %p198 = scmp.ne.s32.totalorder %s193, %s195
      %p199 = scmp.eq.s32.totalorder %s23, 0
      %p200 = por %p198, %p199
      %p201 = scmp.ne.s32.totalorder %s193, %s195
      %p202 = scmp.eq.s32.totalorder %s28, 3
      %p203 = por %p201, %p202
      %p204 = scmp.ne.s32.totalorder %s195, %s196
      %p205 = scmp.eq.s32.totalorder %s28, 0
      %p206 = por %p204, %p205
      %p207 = scmp.ne.s32.totalorder %s195, %s196
      %p208 = scmp.eq.s32.totalorder %s29, 3
      %p209 = por %p207, %p208
      %p211 = scmp.ne.s32.totalorder %s196, %s210
      %p212 = scmp.eq.s32.totalorder %s29, 0
      %p213 = por %p211, %p212
      %s215 = sadd.s32 %s214, 1
      %p218 = scmp.eq.s32.totalorder %s23, 3
      %p219 = scmp.ne.s32.totalorder %s214, %s216
      %p220 = scmp.eq.s32.totalorder %s23, 0
      %p221 = por %p219, %p220
      %p222 = scmp.ne.s32.totalorder %s214, %s216
      %p223 = scmp.eq.s32.totalorder %s28, 3
      %p224 = por %p222, %p223
      %p225 = scmp.ne.s32.totalorder %s216, %s217
      %p226 = scmp.eq.s32.totalorder %s28, 0
      %p227 = por %p225, %p226
      %p228 = scmp.ne.s32.totalorder %s216, %s217
      %p229 = scmp.eq.s32.totalorder %s29, 3
      %p230 = por %p228, %p229
      %p232 = scmp.ne.s32.totalorder %s217, %s231
      %p233 = scmp.eq.s32.totalorder %s29, 0
      %p234 = por %p232, %p233
      %s236 = sadd.s32 %s235, 1
      %p239 = scmp.eq.s32.totalorder %s23, 3
      %p240 = scmp.ne.s32.totalorder %s235, %s237
      %p241 = scmp.eq.s32.totalorder %s23, 0
      %p242 = por %p240, %p241
      %p243 = scmp.ne.s32.totalorder %s235, %s237
      %p244 = scmp.eq.s32.totalorder %s28, 3
      %p245 = por %p243, %p244
      %p246 = scmp.ne.s32.totalorder %s237, %s238
      %p247 = scmp.eq.s32.totalorder %s28, 0
      %p248 = por %p246, %p247
      %p249 = scmp.ne.s32.totalorder %s237, %s238
      %p250 = scmp.eq.s32.totalorder %s29, 3
      %p251 = por %p249, %p250
      %p253 = scmp.ne.s32.totalorder %s238, %s252
      %p254 = scmp.eq.s32.totalorder %s29, 0
      %p255 = por %p253, %p254
      %s257 = sadd.s32 %s256, 1
      %p260 = scmp.eq.s32.totalorder %s23, 3
      %p261 = scmp.ne.s32.totalorder %s256, %s258
      %p262 = scmp.eq.s32.totalorder %s23, 0
      %p263 = por %p261, %p262
      %p264 = scmp.ne.s32.totalorder %s256, %s258
      %p265 = scmp.eq.s32.totalorder %s28, 3
      %p266 = por %p264, %p265
      %p267 = scmp.ne.s32.totalorder %s258, %s259
      %p268 = scmp.eq.s32.totalorder %s28, 0
      %p269 = por %p267, %p268
      %p270 = scmp.ne.s32.totalorder %s258, %s259
      %p271 = scmp.eq.s32.totalorder %s29, 3
      %p272 = por %p270, %p271
      %p274 = scmp.ne.s32.totalorder %s259, %s273
      %p275 = scmp.eq.s32.totalorder %s29, 0
      %p276 = por %p274, %p275
      %s278 = sadd.s32 %s277, 1
      %p281 = scmp.eq.s32.totalorder %s23, 3
      %p282 = scmp.ne.s32.totalorder %s277, %s279
      %p283 = scmp.eq.s32.totalorder %s23, 0
      %p284 = por %p282, %p283
      %p285 = scmp.ne.s32.totalorder %s277, %s279
      %p286 = scmp.eq.s32.totalorder %s28, 3
      %p287 = por %p285, %p286
      %p288 = scmp.ne.s32.totalorder %s279, %s280
      %p289 = scmp.eq.s32.totalorder %s28, 0
      %p290 = por %p288, %p289
      %p291 = scmp.ne.s32.totalorder %s279, %s280
      %p292 = scmp.eq.s32.totalorder %s29, 3
      %p293 = por %p291, %p292
      %p295 = scmp.ne.s32.totalorder %s280, %s294
      %p296 = scmp.eq.s32.totalorder %s29, 0
      %p297 = por %p295, %p296
      %s299 = sadd.s32 %s298, 1
      %p302 = scmp.eq.s32.totalorder %s23, 3
      %p303 = scmp.ne.s32.totalorder %s298, %s300
      %p304 = scmp.eq.s32.totalorder %s23, 0
      %p305 = por %p303, %p304
      %p306 = scmp.ne.s32.totalorder %s298, %s300
      %p307 = scmp.eq.s32.totalorder %s28, 3
      %p308 = por %p306, %p307
      %p309 = scmp.ne.s32.totalorder %s300, %s301
      %p310 = scmp.eq.s32.totalorder %s28, 0
      %p311 = por %p309, %p310
      %p312 = scmp.ne.s32.totalorder %s300, %s301
      %p313 = scmp.eq.s32.totalorder %s29, 3
      %p314 = por %p312, %p313
      %p316 = scmp.ne.s32.totalorder %s301, %s315
      %p317 = scmp.eq.s32.totalorder %s29, 0
      %p318 = por %p316, %p317
      %s319 = ssub.s32 %s23, %s30
      %p320 = scmp.eq.s32.totalorder %s319, 0
      %s322 = sadd.s32 %s321, 1
      %s323 = scalar_select %p320, %s321, %s322
      %p326 = pneg %p320
      %p327 = scmp.eq.s32.totalorder %s23, 3
      %p328 = por %p326, %p327
      %p329 = scmp.ne.s32.totalorder %s321, %s324
      %p330 = scmp.eq.s32.totalorder %s23, 0
      %p331 = por %p329, %p330
      %p332 = scmp.ne.s32.totalorder %s321, %s324
      %p333 = scmp.eq.s32.totalorder %s28, 3
      %p334 = por %p332, %p333
      %p335 = scmp.ne.s32.totalorder %s324, %s325
      %p336 = scmp.eq.s32.totalorder %s28, 0
      %p337 = por %p335, %p336
      %p338 = scmp.ne.s32.totalorder %s324, %s325
      %p339 = scmp.eq.s32.totalorder %s29, 3
      %p340 = por %p338, %p339
      %p342 = scmp.ne.s32.totalorder %s325, %s341
      %p343 = scmp.eq.s32.totalorder %s29, 0
      %p344 = por %p342, %p343
      %p345 = scmp.le.s32.totalorder 1, %s23
      %p346 = scmp.lt.s32.totalorder %s23, 5
      %p347 = pnand %p345, %p346
      %p348 = pneg %p347
      // Predicated region
      $region9: #{tpu_custom_call.1} parent=5 // pred_check
        _
      $region10: #{tpu_custom_call.1} parent=5 // pred_check_branch
        %350 = sbr.rel (%p347) target = $region12
      $region11: #{tpu_custom_call.1} parent=5 // pred_region
        %s351 = ssub.s32 %s23, 1
        // Predicated region
        $region13: #{tpu_custom_call.1} parent=11 // pred_check
          %p352 = pneg %p122
        $region14: #{tpu_custom_call.1} parent=11 // pred_check_branch
          %354 = sbr.rel (%p352) target = $region16
        $region15: #{tpu_custom_call.1} parent=11 // pred_region
          %s356 = ssub.s32 2048, 2048
          %357 = vsyncadd [#allocation3], %s356
          %s358 = sshll.u32 [#allocation2], 4
          %s359 = int_to_ptr.vmem [resolvable:$true] %s358
          %364 = dma.hbm_to_vmem [thread:$0]  %s3, 2048, %s359, [#allocation3], 128, 128, 8
        $region16: #{tpu_custom_call.1} parent=11 // pred_fallthru
          _
        // Predicated region
        $region17: #{tpu_custom_call.1} parent=11 // pred_check
          %p365 = pneg %p143
        $region18: #{tpu_custom_call.1} parent=11 // pred_check_branch
          %367 = sbr.rel (%p365) target = $region20
        $region19: #{tpu_custom_call.1} parent=11 // pred_region
          _
        $region20: #{tpu_custom_call.1} parent=11 // pred_fallthru
          _
        // Predicated region
        $region21: #{tpu_custom_call.1} parent=11 // pred_check
          %p368 = pneg %p164
        $region22: #{tpu_custom_call.1} parent=11 // pred_check_branch
          %370 = sbr.rel (%p368) target = $region24
        $region23: #{tpu_custom_call.1} parent=11 // pred_region
          %s372 = ssub.s32 4096, 4096
          %373 = vsyncadd [#allocation5], %s372
          %s374 = sshll.u32 [#allocation4], 4
          %s375 = int_to_ptr.vmem [resolvable:$true] %s374
          %380 = dma.hbm_to_vmem [thread:$0]  %s5, 4096, %s375, [#allocation5], 128, 128, 8
        $region24: #{tpu_custom_call.1} parent=11 // pred_fallthru
          _
        // Predicated region
        $region25: #{tpu_custom_call.1} parent=11 // pred_check
          %p381 = pneg %p185
        $region26: #{tpu_custom_call.1} parent=11 // pred_check_branch
          %383 = sbr.rel (%p381) target = $region28
        $region27: #{tpu_custom_call.1} parent=11 // pred_region
          %s385 = ssub.s32 4096, 4096
          %386 = vsyncadd [#allocation5], %s385
          %s387 = sshll.u32 [#allocation6], 4
          %s388 = int_to_ptr.vmem [resolvable:$true] %s387
          %393 = dma.hbm_to_vmem [thread:$0]  %s6, 4096, %s388, [#allocation5], 128, 128, 8
        $region28: #{tpu_custom_call.1} parent=11 // pred_fallthru
          _
        // Predicated region
        $region29: #{tpu_custom_call.1} parent=11 // pred_check
          %p394 = pneg %p206
        $region30: #{tpu_custom_call.1} parent=11 // pred_check_branch
          %396 = sbr.rel (%p394) target = $region32
        $region31: #{tpu_custom_call.1} parent=11 // pred_region
          %s398 = ssub.s32 4096, 4096
          %399 = vsyncadd [#allocation8], %s398
          %s400 = sshll.u32 [#allocation7], 4
          %s401 = int_to_ptr.vmem [resolvable:$true] %s400
          %406 = dma.hbm_to_vmem [thread:$0]  %s7, 4096, %s401, [#allocation8], 128, 128, 8
        $region32: #{tpu_custom_call.1} parent=11 // pred_fallthru
          _
        // Predicated region
        $region33: #{tpu_custom_call.1} parent=11 // pred_check
          %p407 = pneg %p227
        $region34: #{tpu_custom_call.1} parent=11 // pred_check_branch
          %409 = sbr.rel (%p407) target = $region36
        $region35: #{tpu_custom_call.1} parent=11 // pred_region
          _
        $region36: #{tpu_custom_call.1} parent=11 // pred_fallthru
          _
        // Predicated region
        $region37: #{tpu_custom_call.1} parent=11 // pred_check
          %p410 = pneg %p248
        $region38: #{tpu_custom_call.1} parent=11 // pred_check_branch
          %412 = sbr.rel (%p410) target = $region40
        $region39: #{tpu_custom_call.1} parent=11 // pred_region
          %s414 = ssub.s32 256, 256
          %415 = vsyncadd [#allocation8], %s414
          %s416 = sshll.u32 [#allocation9], 4
          %s417 = int_to_ptr.vmem [resolvable:$true] %s416
          %422 = dma.hbm_to_vmem [thread:$0]  %s9, 256, %s417, [#allocation8], 64, 64, 4
        $region40: #{tpu_custom_call.1} parent=11 // pred_fallthru
          _
        // Predicated region
        $region41: #{tpu_custom_call.1} parent=11 // pred_check
          %p423 = pneg %p269
        $region42: #{tpu_custom_call.1} parent=11 // pred_check_branch
          %425 = sbr.rel (%p423) target = $region44
        $region43: #{tpu_custom_call.1} parent=11 // pred_region
          %s427 = ssub.s32 4096, 4096
          %428 = vsyncadd [#allocation11], %s427
          %s429 = sshll.u32 [#allocation10], 4
          %s430 = int_to_ptr.vmem [resolvable:$true] %s429
          %435 = dma.hbm_to_vmem [thread:$0]  %s10, 4096, %s430, [#allocation11], 128, 128, 8
        $region44: #{tpu_custom_call.1} parent=11 // pred_fallthru
          _
        // Predicated region
        $region45: #{tpu_custom_call.1} parent=11 // pred_check
          %p436 = pneg %p290
        $region46: #{tpu_custom_call.1} parent=11 // pred_check_branch
          %438 = sbr.rel (%p436) target = $region48
        $region47: #{tpu_custom_call.1} parent=11 // pred_region
          _
        $region48: #{tpu_custom_call.1} parent=11 // pred_fallthru
          _
        // Predicated region
        $region49: #{tpu_custom_call.1} parent=11 // pred_check
          %p439 = pneg %p311
        $region50: #{tpu_custom_call.1} parent=11 // pred_check_branch
          %441 = sbr.rel (%p439) target = $region52
        $region51: #{tpu_custom_call.1} parent=11 // pred_region
          _
        $region52: #{tpu_custom_call.1} parent=11 // pred_fallthru
          _
      $region12: #{tpu_custom_call.1} parent=5 // pred_fallthru
        _
      %p442 = scmp.lt.s32.totalorder %s23, 4
      // Predicated region
      $region53: #{tpu_custom_call.1} parent=5 // pred_check
        %p443 = pneg %p442
      $region54: #{tpu_custom_call.1} parent=5 // pred_check_branch
        %445 = sbr.rel (%p443) target = $region56
      $region55: #{tpu_custom_call.1} parent=5 // pred_region
        // Predicated region
        $region57: #{tpu_custom_call.1} parent=55 // pred_check
          %p446 = pneg %p43
        $region58: #{tpu_custom_call.1} parent=55 // pred_check_branch
          %448 = sbr.rel (%p446) target = $region60
        $region59: #{tpu_custom_call.1} parent=55 // pred_region
          %s449 = smul.u32 3, %s23
          %p450 = scmp.lt.s32.totalorder %s449, 11
          %s451 = scalar_select %p450, %s449, 11
          %s452 = smul.addr %s451, 4
          %s453 = scalar_lea.vmem %s0, %s452
          %s454 = smul.u32 3, %s23
        $region60: #{tpu_custom_call.1} parent=55 // pred_fallthru
          _
        // Predicated region
        $region61: #{tpu_custom_call.1} parent=55 // pred_check
          %p455 = pneg %p69
        $region62: #{tpu_custom_call.1} parent=55 // pred_check_branch
          %457 = sbr.rel (%p455) target = $region64
        $region63: #{tpu_custom_call.1} parent=55 // pred_region
          %s458 = smul.u32 3, %s23
          %p459 = scmp.lt.s32.totalorder %s458, 11
          %s460 = scalar_select %p459, %s458, 11
          %s461 = smul.addr %s460, 4
          %s462 = scalar_lea.vmem %s1, %s461
          %s463 = smul.u32 3, %s23
        $region64: #{tpu_custom_call.1} parent=55 // pred_fallthru
          _
        // Predicated region
        $region65: #{tpu_custom_call.1} parent=55 // pred_check
          %p464 = pneg %p95
        $region66: #{tpu_custom_call.1} parent=55 // pred_check_branch
          %466 = sbr.rel (%p464) target = $region68
        $region67: #{tpu_custom_call.1} parent=55 // pred_region
          %s467 = smul.u32 3, %s23
          %p468 = scmp.lt.s32.totalorder %s467, 11
          %s469 = scalar_select %p468, %s467, 11
          %s470 = smul.addr %s469, 8
          %s471 = scalar_lea.vmem %s2, %s470
          %s472 = smul.u32 3, %s23
        $region68: #{tpu_custom_call.1} parent=55 // pred_fallthru
          _
      $region56: #{tpu_custom_call.1} parent=5 // pred_fallthru
        _
      %p473 = scmp.le.s32.totalorder 1, %s23
      %p474 = scmp.lt.s32.totalorder %s23, 5
      %p475 = pnand %p473, %p474
      %p476 = pneg %p475
      // Predicated region
      $region69: #{tpu_custom_call.1} parent=5 // pred_check
        _
      $region70: #{tpu_custom_call.1} parent=5 // pred_check_branch
        %478 = sbr.rel (%p475) target = $region72
      $region71: #{tpu_custom_call.1} parent=5 // pred_region
        %s479 = ssub.s32 %s23, 1
        // Predicated region
        $region73: #{tpu_custom_call.1} parent=71 // pred_check
          %p480 = pneg %p122
        $region74: #{tpu_custom_call.1} parent=71 // pred_check_branch
          %482 = sbr.rel (%p480) target = $region76
        $region75: #{tpu_custom_call.1} parent=71 // pred_region
          %483 = dma.done [#allocation3], 2048
        $region76: #{tpu_custom_call.1} parent=71 // pred_fallthru
          _
        // Predicated region
        $region77: #{tpu_custom_call.1} parent=71 // pred_check
          %p484 = pneg %p164
        $region78: #{tpu_custom_call.1} parent=71 // pred_check_branch
          %486 = sbr.rel (%p484) target = $region80
        $region79: #{tpu_custom_call.1} parent=71 // pred_region
          %487 = dma.done [#allocation5], 4096
        $region80: #{tpu_custom_call.1} parent=71 // pred_fallthru
          _
        // Predicated region
        $region81: #{tpu_custom_call.1} parent=71 // pred_check
          %p488 = pneg %p185
        $region82: #{tpu_custom_call.1} parent=71 // pred_check_branch
          %490 = sbr.rel (%p488) target = $region84
        $region83: #{tpu_custom_call.1} parent=71 // pred_region
          %491 = dma.done [#allocation5], 4096
        $region84: #{tpu_custom_call.1} parent=71 // pred_fallthru
          _
        // Predicated region
        $region85: #{tpu_custom_call.1} parent=71 // pred_check
          %p492 = pneg %p206
        $region86: #{tpu_custom_call.1} parent=71 // pred_check_branch
          %494 = sbr.rel (%p492) target = $region88
        $region87: #{tpu_custom_call.1} parent=71 // pred_region
          %495 = dma.done [#allocation8], 4096
        $region88: #{tpu_custom_call.1} parent=71 // pred_fallthru
          _
        // Predicated region
        $region89: #{tpu_custom_call.1} parent=71 // pred_check
          %p496 = pneg %p248
        $region90: #{tpu_custom_call.1} parent=71 // pred_check_branch
          %498 = sbr.rel (%p496) target = $region92
        $region91: #{tpu_custom_call.1} parent=71 // pred_region
          %499 = dma.done [#allocation8], 256
        $region92: #{tpu_custom_call.1} parent=71 // pred_fallthru
          _
        // Predicated region
        $region93: #{tpu_custom_call.1} parent=71 // pred_check
          %p500 = pneg %p269
        $region94: #{tpu_custom_call.1} parent=71 // pred_check_branch
          %502 = sbr.rel (%p500) target = $region96
        $region95: #{tpu_custom_call.1} parent=71 // pred_region
          %503 = dma.done [#allocation11], 4096
        $region96: #{tpu_custom_call.1} parent=71 // pred_fallthru
          _
        %s504 = smul.u32 3, %s28
        %p505 = scmp.lt.s32.totalorder %s504, 11
        %s506 = scalar_select %p505, %s504, 11
        %s507 = smul.addr %s506, 4
        %s508 = scalar_lea.vmem %s0, %s507
        %p509 = pneg %p49
        %p510 = pneg %p46
        %s511 = smul.u32 3, %s28
        %p512 = scmp.lt.s32.totalorder %s511, 11
        %s513 = scalar_select %p512, %s511, 11
        %s514 = smul.addr %s513, 4
        %s515 = scalar_lea.vmem %s1, %s514
        %p516 = pneg %p75
        %p517 = pneg %p72
        %s518 = smul.u32 3, %s28
        %p519 = scmp.lt.s32.totalorder %s518, 11
        %s520 = scalar_select %p519, %s518, 11
        %s521 = smul.addr %s520, 8
        %s522 = scalar_lea.vmem %s2, %s521
        %p523 = pneg %p101
        %p524 = pneg %p98
        %p525 = pneg %p122
        %p526 = pneg %p119
        %p527 = pneg %p143
        %p528 = pneg %p140
        %p529 = pneg %p164
        %p530 = pneg %p161
        %p531 = pneg %p185
        %p532 = pneg %p182
        %p533 = pneg %p206
        %p534 = pneg %p203
        %p535 = pneg %p227
        %p536 = pneg %p224
        %p537 = pneg %p248
        %p538 = pneg %p245
        %p539 = pneg %p269
        %p540 = pneg %p266
        %p541 = pneg %p290
        %p542 = pneg %p287
        %p543 = pneg %p311
        %p544 = pneg %p308
        %p545 = pneg %p337
        %p546 = pneg %p334
        %s547 = smul.u32 3, %s28
        %p548 = scmp.lt.s32.totalorder %s547, 11
        %s549 = scalar_select %p548, %s547, 11
        %s550 = smul.addr %s549, 8
        %s551 = scalar_lea.vmem %s13, %s550
        %s552 = smul.u32 3, %s28
        %p553 = scmp.lt.s32.totalorder %s552, 11
        %s554 = scalar_select %p553, %s552, 11
        %s555 = smul.addr %s554, 4
        %s556 = scalar_lea.vmem %s0, %s555
        %s557 = smul.u32 3, %s28
        %s558 = smul.u32 3, %s28
        %p559 = scmp.lt.s32.totalorder %s558, 11
        %s560 = scalar_select %p559, %s558, 11
        %s561 = smul.addr %s560, 4
        %s562 = scalar_lea.vmem %s1, %s561
        %s563 = smul.u32 3, %s28
        %s564 = smul.u32 3, %s28
        %p565 = scmp.lt.s32.totalorder %s564, 11
        %s566 = scalar_select %p565, %s564, 11
        %s567 = smul.addr %s566, 8
        %s568 = scalar_lea.vmem %s2, %s567
        %s569 = smul.u32 3, %s28
        %s570 = smul.u32 3, %s28
        %p571 = scmp.lt.s32.totalorder %s570, 11
        %s572 = scalar_select %p571, %s570, 11
        %s573 = smul.addr %s572, 8
        %s574 = scalar_lea.vmem %s13, %s573
        %s575 = smul.u32 3, %s28
        %v577 = vld [vmem:[%s12] ss:$8 sm:$0x3]
        %s578 = scalar_lea.vmem %s12, 1
        %v579 = vld [vmem:[%s578] ss:$8 sm:$0x3]
        %s580 = scalar_lea.vmem %s12, 2
        %v581 = vld [vmem:[%s580] ss:$8 sm:$0x3]
        %s582 = scalar_lea.vmem %s12, 3
        %v583 = vld [vmem:[%s582] ss:$8 sm:$0x3]
        %s584 = scalar_lea.vmem %s12, 4
        %v585 = vld [vmem:[%s584] ss:$8 sm:$0x3]
        %s586 = scalar_lea.vmem %s12, 5
        %v587 = vld [vmem:[%s586] ss:$8 sm:$0x3]
        %s588 = scalar_lea.vmem %s12, 6
        %v589 = vld [vmem:[%s588] ss:$8 sm:$0x3]
        %s590 = scalar_lea.vmem %s12, 7
        %v591 = vld [vmem:[%s590] ss:$8 sm:$0x3]
        %s592 = scalar_lea.vmem %s12, 16
        %v593 = vld [vmem:[%s592] ss:$8 sm:$0x3]
        %s594 = scalar_lea.vmem %s12, 17
        %v595 = vld [vmem:[%s594] ss:$8 sm:$0x3]
        %s596 = scalar_lea.vmem %s12, 18
        %v597 = vld [vmem:[%s596] ss:$8 sm:$0x3]
        %s598 = scalar_lea.vmem %s12, 19
        %v599 = vld [vmem:[%s598] ss:$8 sm:$0x3]
        %v600 = vld [vmem:[%s12 + $0x14] ss:$0 sm:$0xff]
        %v601 = vld [vmem:[%s12 + $0x15] ss:$0 sm:$0xff]
        %v602 = vld [vmem:[#allocation10] sm:$0xff]
        %v603 = vld [vmem:[#allocation10 + $0x8] sm:$0xff]
        %v604 = vld [vmem:[#allocation10 + $0x10] sm:$0xff]
        %v605 = vld [vmem:[#allocation10 + $0x18] sm:$0xff]
        %v606 = vld [vmem:[#allocation10 + $0x20] sm:$0xff]
        %v607 = vld [vmem:[#allocation10 + $0x28] sm:$0xff]
        %v608 = vld [vmem:[#allocation10 + $0x30] sm:$0xff]
        %v609 = vld [vmem:[#allocation10 + $0x38] sm:$0xff]
        %v610 = vld [vmem:[#allocation10 + $0x40] sm:$0xff]
        %v611 = vld [vmem:[#allocation10 + $0x48] sm:$0xff]
        %v612 = vld [vmem:[#allocation10 + $0x50] sm:$0xff]
        %v613 = vld [vmem:[#allocation10 + $0x58] sm:$0xff]
        %v614 = vld [vmem:[#allocation10 + $0x60] sm:$0xff]
        %v615 = vld [vmem:[#allocation10 + $0x68] sm:$0xff]
        %v616 = vld [vmem:[#allocation10 + $0x70] sm:$0xff]
        %v617 = vld [vmem:[#allocation10 + $0x78] sm:$0xff]
        %v618 = vld [vmem:[#allocation10 + $0x80] sm:$0xff]
        %v619 = vld [vmem:[#allocation10 + $0x88] sm:$0xff]
        %v620 = vld [vmem:[#allocation10 + $0x90] sm:$0xff]
        %v621 = vld [vmem:[#allocation10 + $0x98] sm:$0xff]
        %v622 = vld [vmem:[#allocation10 + $0xa0] sm:$0xff]
        %v623 = vld [vmem:[#allocation10 + $0xa8] sm:$0xff]
        %v624 = vld [vmem:[#allocation10 + $0xb0] sm:$0xff]
        %v625 = vld [vmem:[#allocation10 + $0xb8] sm:$0xff]
        %v626 = vld [vmem:[#allocation10 + $0xc0] sm:$0xff]
        %v627 = vld [vmem:[#allocation10 + $0xc8] sm:$0xff]
        %v628 = vld [vmem:[#allocation10 + $0xd0] sm:$0xff]
        %v629 = vld [vmem:[#allocation10 + $0xd8] sm:$0xff]
        %v630 = vld [vmem:[#allocation10 + $0xe0] sm:$0xff]
        %v631 = vld [vmem:[#allocation10 + $0xe8] sm:$0xff]
        %v632 = vld [vmem:[#allocation10 + $0xf0] sm:$0xff]
        %v633 = vld [vmem:[#allocation10 + $0xf8] sm:$0xff]
        %v634 = vld [vmem:[%s562] sm:$0xf]
        %v635 = vld [vmem:[%s562 + $0x4] sm:$0xf]
        %v636 = vld [vmem:[%s562 + $0x8] sm:$0xf]
        %v637 = vld [vmem:[%s11] sm:$0xff]
        %v641 = vunpack.c.l.b16 %v634
        %v642 = vunpack.c.l.b16 %v635
        %v643 = vunpack.c.l.b16 %v636
        %v644 = vpack.c.b16 %v642, %v641
        %v645 = vpack.c.b16 %v643, %v643
        %v647 = vunpack.c.l.b16 %v637
        %v648 = vunpack.c.h.b16 %v637
        %v649 = vpack.c.b16 %v647, %v647
        %v650 = vpack.c.b16 %v648, %v648
        %vm651 = vcmask 64512
        %v653 = vsel %vm651, %v644, 0
        %v656 = vsel %vm651, %v645, 0
        %vm658 = vcmask 1043456
        %v660 = vsel %vm658, %v649, 0
        %v663 = vsel %vm658, %v650, 0
        %665 = vmatprep.subr.bf16.mxu0 %v663
        %666 = vmatpush1.bf16.msra.mxu0 %v660
        %667 = vmatprep.subr.bf16.mxu0 0
        %668 = vmatpush1.bf16.msra.mxu0 0
        %669 = vmatprep.subr.bf16.mxu0 0
        %670 = vmatpush1.bf16.msra.mxu0 0
        %671 = vmatprep.subr.bf16.mxu0 0
        %672 = vmatpush1.bf16.msra.mxu0 0
        %673 = vmatprep.subr.bf16.mxu0 0
        %674 = vmatpush1.bf16.msra.mxu0 0
        %675 = vmatprep.subr.bf16.mxu0 0
        %676 = vmatpush1.bf16.msra.mxu0 0
        %677 = vmatprep.subr.bf16.mxu0 0
        %678 = vmatpush1.bf16.msra.mxu0 0
        %679 = vmatprep.subr.bf16.mxu0 0
        %680 = vmatpush1.bf16.msra.mxu0 0
        %681 = vmatprep.subr.bf16.mxu0 0
        %682 = vmatpush1.bf16.msra.mxu0 0
        %683 = vmatprep.subr.bf16.mxu0 0
        %684 = vmatpush1.bf16.msra.mxu0 0
        %685 = vmatprep.subr.bf16.mxu0 0
        %686 = vmatpush1.bf16.msra.mxu0 0
        %687 = vmatprep.subr.bf16.mxu0 0
        %688 = vmatpush1.bf16.msra.mxu0 0
        %689 = vmatprep.subr.bf16.mxu0 0
        %690 = vmatpush1.bf16.msra.mxu0 0
        %691 = vmatprep.subr.bf16.mxu0 0
        %692 = vmatpush1.bf16.msra.mxu0 0
        %693 = vmatprep.subr.bf16.mxu0 0
        %694 = vmatpush1.bf16.msra.mxu0 0
        %695 = vmatprep.subr.bf16.mxu0 0
        %696 = vmatpush1.bf16.msra.mxu0 0
        %697 = vmatprep.mubr.bf16.mxu0 0
        %698 = vmatmul.mubr.bf16.gmra.mrb[0].mxu0 %v653
        %v699 = vpop.f32.mrb[0].mxu0
        %v700 = vadd.f32 0.0, %v699
        %v701 = vpop.f32.mrb[0].mxu0
        %v702 = vadd.f32 0.0, %v701
        %v703 = vpop.f32.mrb[0].mxu0
        %v704 = vadd.f32 0.0, %v703
        %v705 = vpop.f32.mrb[0].mxu0
        %v706 = vadd.f32 0.0, %v705
        %707 = vmatprep.mubr.bf16.mxu0 0
        %708 = vmatmul.mubr.bf16.gmra.mrb[0].mxu0 %v656
        %v709 = vpop.f32.mrb[0].mxu0
        %v710 = vadd.f32 0.0, %v709
        %v711 = vpop.f32.mrb[0].mxu0
        %v712 = vadd.f32 0.0, %v711
        %v713 = vpop.f32.mrb[0].mxu0
        %v714 = vpop.f32.mrb[0].mxu0
        %715 = vdwg.mxu0
        %v716 = vld [vmem:[%s556] sm:$0xf]
        %v717 = vld [vmem:[%s556 + $0x4] sm:$0xf]
        %v718 = vld [vmem:[%s556 + $0x8] sm:$0xf]
        %v719 = vld [vmem:[#allocation2] sm:$0xff]
        %v720 = vld [vmem:[#allocation2 + $0x8] sm:$0xff]
        %v721 = vld [vmem:[#allocation2 + $0x10] sm:$0xff]
        %v722 = vld [vmem:[#allocation2 + $0x18] sm:$0xff]
        %v723 = vld [vmem:[#allocation2 + $0x20] sm:$0xff]
        %v724 = vld [vmem:[#allocation2 + $0x28] sm:$0xff]
        %v725 = vld [vmem:[#allocation2 + $0x30] sm:$0xff]
        %v726 = vld [vmem:[#allocation2 + $0x38] sm:$0xff]
        %v727 = vld [vmem:[#allocation2 + $0x40] sm:$0xff]
        %v728 = vld [vmem:[#allocation2 + $0x48] sm:$0xff]
        %v729 = vld [vmem:[#allocation2 + $0x50] sm:$0xff]
        %v730 = vld [vmem:[#allocation2 + $0x58] sm:$0xff]
        %v731 = vld [vmem:[#allocation2 + $0x60] sm:$0xff]
        %v732 = vld [vmem:[#allocation2 + $0x68] sm:$0xff]
        %v733 = vld [vmem:[#allocation2 + $0x70] sm:$0xff]
        %v734 = vld [vmem:[#allocation2 + $0x78] sm:$0xff]
        %v736 = vlaneseq
        %v737 = vshrl.u32 %v736, 7
        %v738 = vsub.s32 0, %v737
        %v739 = vrot.slane %v577, %v738
        %v740 = vlaneseq
        %v741 = vshrl.u32 %v740, 7
        %v742 = vsub.s32 1, %v741
        %v743 = vrot.slane %v577, %v742
        %v749 = vunpack.c.l.b16 %v716
        %v750 = vunpack.c.l.b16 %v717
        %v751 = vunpack.c.l.b16 %v718
        %v752 = vpack.c.b16 %v750, %v749
        %v753 = vpack.c.b16 %v751, %v751
        %v772 = vunpack.c.l.b16 %v719
        %v773 = vunpack.c.h.b16 %v719
        %v774 = vunpack.c.l.b16 %v720
        %v775 = vunpack.c.h.b16 %v720
        %v776 = vunpack.c.l.b16 %v721
        %v777 = vunpack.c.h.b16 %v721
        %v778 = vunpack.c.l.b16 %v722
        %v779 = vunpack.c.h.b16 %v722
        %v780 = vunpack.c.l.b16 %v723
        %v781 = vunpack.c.h.b16 %v723
        %v782 = vunpack.c.l.b16 %v724
        %v783 = vunpack.c.h.b16 %v724
        %v784 = vunpack.c.l.b16 %v725
        %v785 = vunpack.c.h.b16 %v725
        %v786 = vunpack.c.l.b16 %v726
        %v787 = vunpack.c.h.b16 %v726
        %v788 = vunpack.c.l.b16 %v727
        %v789 = vunpack.c.h.b16 %v727
        %v790 = vunpack.c.l.b16 %v728
        %v791 = vunpack.c.h.b16 %v728
        %v792 = vunpack.c.l.b16 %v729
        %v793 = vunpack.c.h.b16 %v729
        %v794 = vunpack.c.l.b16 %v730
        %v795 = vunpack.c.h.b16 %v730
        %v796 = vunpack.c.l.b16 %v731
        %v797 = vunpack.c.h.b16 %v731
        %v798 = vunpack.c.l.b16 %v732
        %v799 = vunpack.c.h.b16 %v732
        %v800 = vunpack.c.l.b16 %v733
        %v801 = vunpack.c.h.b16 %v733
        %v802 = vunpack.c.l.b16 %v734
        %v803 = vunpack.c.h.b16 %v734
        %v804 = vpack.c.b16 %v774, %v772
        %v805 = vpack.c.b16 %v775, %v773
        %v806 = vpack.c.b16 %v778, %v776
        %v807 = vpack.c.b16 %v779, %v777
        %v808 = vpack.c.b16 %v782, %v780
        %v809 = vpack.c.b16 %v783, %v781
        %v810 = vpack.c.b16 %v786, %v784
        %v811 = vpack.c.b16 %v787, %v785
        %v812 = vpack.c.b16 %v790, %v788
        %v813 = vpack.c.b16 %v791, %v789
        %v814 = vpack.c.b16 %v794, %v792
        %v815 = vpack.c.b16 %v795, %v793
        %v816 = vpack.c.b16 %v798, %v796
        %v817 = vpack.c.b16 %v799, %v797
        %v818 = vpack.c.b16 %v802, %v800
        %v819 = vpack.c.b16 %v803, %v801
        %836 = vmatprep.subr.bf16.mxu0 %v805
        %837 = vmatpush1.bf16.msra.mxu0 %v804
        %838 = vmatprep.subr.bf16.mxu0 %v807
        %839 = vmatpush1.bf16.msra.mxu0 %v806
        %840 = vmatprep.subr.bf16.mxu0 %v809
        %841 = vmatpush1.bf16.msra.mxu0 %v808
        %842 = vmatprep.subr.bf16.mxu0 %v811
        %843 = vmatpush1.bf16.msra.mxu0 %v810
        %844 = vmatprep.subr.bf16.mxu0 %v813
        %845 = vmatpush1.bf16.msra.mxu0 %v812
        %846 = vmatprep.subr.bf16.mxu0 %v815
        %847 = vmatpush1.bf16.msra.mxu0 %v814
        %848 = vmatprep.subr.bf16.mxu0 %v817
        %849 = vmatpush1.bf16.msra.mxu0 %v816
        %850 = vmatprep.subr.bf16.mxu0 %v819
        %851 = vmatpush1.bf16.msra.mxu0 %v818
        %852 = vmatprep.subr.bf16.mxu0 0
        %853 = vmatpush1.bf16.msra.mxu0 0
        %854 = vmatprep.subr.bf16.mxu0 0
        %855 = vmatpush1.bf16.msra.mxu0 0
        %856 = vmatprep.subr.bf16.mxu0 0
        %857 = vmatpush1.bf16.msra.mxu0 0
        %858 = vmatprep.subr.bf16.mxu0 0
        %859 = vmatpush1.bf16.msra.mxu0 0
        %860 = vmatprep.subr.bf16.mxu0 0
        %861 = vmatpush1.bf16.msra.mxu0 0
        %862 = vmatprep.subr.bf16.mxu0 0
        %863 = vmatpush1.bf16.msra.mxu0 0
        %864 = vmatprep.subr.bf16.mxu0 0
        %865 = vmatpush1.bf16.msra.mxu0 0
        %866 = vmatprep.subr.bf16.mxu0 0
        %867 = vmatpush1.bf16.msra.mxu0 0
        %868 = vmatprep.mubr.bf16.mxu0 0
        %869 = vmatmul.mubr.bf16.gmra.mrb[0].mxu0 %v752
        %v870 = vpop.f32.mrb[0].mxu0
        %v871 = vadd.f32 %v739, %v870
        %v872 = vpop.f32.mrb[0].mxu0
        %v873 = vadd.f32 %v743, %v872
        %v874 = vpop.f32.mrb[0].mxu0
        %v875 = vadd.f32 %v739, %v874
        %v876 = vpop.f32.mrb[0].mxu0
        %v877 = vadd.f32 %v743, %v876
        %878 = vmatprep.mubr.bf16.mxu0 0
        %879 = vmatmul.mubr.bf16.gmra.mrb[0].mxu0 %v753
        %v880 = vpop.f32.mrb[0].mxu0
        %v881 = vadd.f32 %v739, %v880
        %v882 = vpop.f32.mrb[0].mxu0
        %v883 = vadd.f32 %v743, %v882
        %v884 = vpop.f32.mrb[0].mxu0
        %v885 = vpop.f32.mrb[0].mxu0
        %886 = vdwg.mxu0
        %v887 = vpack.c.bf16 %v875, %v871
        %v888 = vpack.c.bf16 %v877, %v873
        %v889 = vpack.c.bf16 %v881, %v881
        %v890 = vpack.c.bf16 %v883, %v883
        %v923 = vunpack.c.l.b16 %v602
        %v924 = vunpack.c.h.b16 %v602
        %v925 = vunpack.c.l.b16 %v603
        %v926 = vunpack.c.h.b16 %v603
        %v927 = vunpack.c.l.b16 %v604
        %v928 = vunpack.c.h.b16 %v604
        %v929 = vunpack.c.l.b16 %v605
        %v930 = vunpack.c.h.b16 %v605
        %v931 = vunpack.c.l.b16 %v606
        %v932 = vunpack.c.h.b16 %v606
        %v933 = vunpack.c.l.b16 %v607
        %v934 = vunpack.c.h.b16 %v607
        %v935 = vunpack.c.l.b16 %v608
        %v936 = vunpack.c.h.b16 %v608
        %v937 = vunpack.c.l.b16 %v609
        %v938 = vunpack.c.h.b16 %v609
        %v939 = vunpack.c.l.b16 %v610
        %v940 = vunpack.c.h.b16 %v610
        %v941 = vunpack.c.l.b16 %v611
        %v942 = vunpack.c.h.b16 %v611
        %v943 = vunpack.c.l.b16 %v612
        %v944 = vunpack.c.h.b16 %v612
        %v945 = vunpack.c.l.b16 %v613
        %v946 = vunpack.c.h.b16 %v613
        %v947 = vunpack.c.l.b16 %v614
        %v948 = vunpack.c.h.b16 %v614
        %v949 = vunpack.c.l.b16 %v615
        %v950 = vunpack.c.h.b16 %v615
        %v951 = vunpack.c.l.b16 %v616
        %v952 = vunpack.c.h.b16 %v616
        %v953 = vunpack.c.l.b16 %v617
        %v954 = vunpack.c.h.b16 %v617
        %v955 = vunpack.c.l.b16 %v618
        %v956 = vunpack.c.h.b16 %v618
        %v957 = vunpack.c.l.b16 %v619
        %v958 = vunpack.c.h.b16 %v619
        %v959 = vunpack.c.l.b16 %v620
        %v960 = vunpack.c.h.b16 %v620
        %v961 = vunpack.c.l.b16 %v621
        %v962 = vunpack.c.h.b16 %v621
        %v963 = vunpack.c.l.b16 %v622
        %v964 = vunpack.c.h.b16 %v622
        %v965 = vunpack.c.l.b16 %v623
        %v966 = vunpack.c.h.b16 %v623
        %v967 = vunpack.c.l.b16 %v624
        %v968 = vunpack.c.h.b16 %v624
        %v969 = vunpack.c.l.b16 %v625
        %v970 = vunpack.c.h.b16 %v625
        %v971 = vunpack.c.l.b16 %v626
        %v972 = vunpack.c.h.b16 %v626
        %v973 = vunpack.c.l.b16 %v627
        %v974 = vunpack.c.h.b16 %v627
        %v975 = vunpack.c.l.b16 %v628
        %v976 = vunpack.c.h.b16 %v628
        %v977 = vunpack.c.l.b16 %v629
        %v978 = vunpack.c.h.b16 %v629
        %v979 = vunpack.c.l.b16 %v630
        %v980 = vunpack.c.h.b16 %v630
        %v981 = vunpack.c.l.b16 %v631
        %v982 = vunpack.c.h.b16 %v631
        %v983 = vunpack.c.l.b16 %v632
        %v984 = vunpack.c.h.b16 %v632
        %v985 = vunpack.c.l.b16 %v633
        %v986 = vunpack.c.h.b16 %v633
        %v987 = vpack.c.b16 %v925, %v923
        %v988 = vpack.c.b16 %v926, %v924
        %v989 = vpack.c.b16 %v929, %v927
        %v990 = vpack.c.b16 %v930, %v928
        %v991 = vpack.c.b16 %v933, %v931
        %v992 = vpack.c.b16 %v934, %v932
        %v993 = vpack.c.b16 %v937, %v935
        %v994 = vpack.c.b16 %v938, %v936
        %v995 = vpack.c.b16 %v941, %v939
        %v996 = vpack.c.b16 %v942, %v940
        %v997 = vpack.c.b16 %v945, %v943
        %v998 = vpack.c.b16 %v946, %v944
        %v999 = vpack.c.b16 %v949, %v947
        %v1000 = vpack.c.b16 %v950, %v948
        %v1001 = vpack.c.b16 %v953, %v951
        %v1002 = vpack.c.b16 %v954, %v952
        %v1003 = vpack.c.b16 %v957, %v955
        %v1004 = vpack.c.b16 %v958, %v956
        %v1005 = vpack.c.b16 %v961, %v959
        %v1006 = vpack.c.b16 %v962, %v960
        %v1007 = vpack.c.b16 %v965, %v963
        %v1008 = vpack.c.b16 %v966, %v964
        %v1009 = vpack.c.b16 %v969, %v967
        %v1010 = vpack.c.b16 %v970, %v968
        %v1011 = vpack.c.b16 %v973, %v971
        %v1012 = vpack.c.b16 %v974, %v972
        %v1013 = vpack.c.b16 %v977, %v975
        %v1014 = vpack.c.b16 %v978, %v976
        %v1015 = vpack.c.b16 %v981, %v979
        %v1016 = vpack.c.b16 %v982, %v980
        %v1017 = vpack.c.b16 %v985, %v983
        %v1018 = vpack.c.b16 %v986, %v984
        %1051 = vmatprep.subr.bf16.mxu0 %v988
        %1052 = vmatpush1.bf16.msra.mxu0 %v987
        %1053 = vmatprep.subr.bf16.mxu0 %v990
        %1054 = vmatpush1.bf16.msra.mxu0 %v989
        %1055 = vmatprep.subr.bf16.mxu0 %v992
        %1056 = vmatpush1.bf16.msra.mxu0 %v991
        %1057 = vmatprep.subr.bf16.mxu0 %v994
        %1058 = vmatpush1.bf16.msra.mxu0 %v993
        %1059 = vmatprep.subr.bf16.mxu0 %v996
        %1060 = vmatpush1.bf16.msra.mxu0 %v995
        %1061 = vmatprep.subr.bf16.mxu0 %v998
        %1062 = vmatpush1.bf16.msra.mxu0 %v997
        %1063 = vmatprep.subr.bf16.mxu0 %v1000
        %1064 = vmatpush1.bf16.msra.mxu0 %v999
        %1065 = vmatprep.subr.bf16.mxu0 %v1002
        %1066 = vmatpush1.bf16.msra.mxu0 %v1001
        %1067 = vmatprep.subr.bf16.mxu0 %v1004
        %1068 = vmatpush1.bf16.msra.mxu0 %v1003
        %1069 = vmatprep.subr.bf16.mxu0 %v1006
        %1070 = vmatpush1.bf16.msra.mxu0 %v1005
        %1071 = vmatprep.subr.bf16.mxu0 %v1008
        %1072 = vmatpush1.bf16.msra.mxu0 %v1007
        %1073 = vmatprep.subr.bf16.mxu0 %v1010
        %1074 = vmatpush1.bf16.msra.mxu0 %v1009
        %1075 = vmatprep.subr.bf16.mxu0 %v1012
        %1076 = vmatpush1.bf16.msra.mxu0 %v1011
        %1077 = vmatprep.subr.bf16.mxu0 %v1014
        %1078 = vmatpush1.bf16.msra.mxu0 %v1013
        %1079 = vmatprep.subr.bf16.mxu0 %v1016
        %1080 = vmatpush1.bf16.msra.mxu0 %v1015
        %1081 = vmatprep.subr.bf16.mxu0 %v1018
        %1082 = vmatpush1.bf16.msra.mxu0 %v1017
        %1083 = vmatprep.mubr.bf16.mxu0 %v888
        %1084 = vmatmul.mubr.bf16.gmra.mrb[0].mxu0 %v887
        %v1085 = vpop.f32.mrb[0].mxu0
        %v1086 = vadd.f32 0.0, %v1085
        %v1087 = vpop.f32.mrb[0].mxu0
        %v1088 = vadd.f32 0.0, %v1087
        %v1089 = vpop.f32.mrb[0].mxu0
        %v1090 = vadd.f32 0.0, %v1089
        %v1091 = vpop.f32.mrb[0].mxu0
        %v1092 = vadd.f32 0.0, %v1091
        %1093 = vmatprep.mubr.bf16.mxu0 %v890
        %1094 = vmatmul.mubr.bf16.gmra.mrb[0].mxu0 %v889
        %v1095 = vpop.f32.mrb[0].mxu0
        %v1096 = vadd.f32 0.0, %v1095
        %v1097 = vpop.f32.mrb[0].mxu0
        %v1098 = vadd.f32 0.0, %v1097
        %v1099 = vpop.f32.mrb[0].mxu0
        %v1100 = vpop.f32.mrb[0].mxu0
        %1101 = vdwg.mxu0
        %v1102 = vsub.f32 %v871, %v1086
        %v1103 = vsub.f32 %v873, %v1088
        %v1104 = vsub.f32 %v875, %v1090
        %v1105 = vsub.f32 %v877, %v1092
        %v1106 = vsub.f32 %v881, %v1096
        %v1107 = vsub.f32 %v883, %v1098
        %v1108 = vmul.f32 %v1102, %v1102
        %v1109 = vmul.f32 %v1103, %v1103
        %v1110 = vmul.f32 %v1104, %v1104
        %v1111 = vmul.f32 %v1105, %v1105
        %v1112 = vmul.f32 %v1106, %v1106
        %v1113 = vmul.f32 %v1107, %v1107
        %v1114 = vpack.c.bf16 %v1110, %v1108
        %v1115 = vpack.c.bf16 %v1111, %v1109
        %v1116 = vpack.c.bf16 %v1112, %v1112
        %v1117 = vpack.c.bf16 %v1113, %v1113
        %1118 = vmatprep.subr.bf16.mxu0 %v988
        %1119 = vmatpush1.bf16.msra.mxu0 %v987
        %1120 = vmatprep.subr.bf16.mxu0 %v990
        %1121 = vmatpush1.bf16.msra.mxu0 %v989
        %1122 = vmatprep.subr.bf16.mxu0 %v992
        %1123 = vmatpush1.bf16.msra.mxu0 %v991
        %1124 = vmatprep.subr.bf16.mxu0 %v994
        %1125 = vmatpush1.bf16.msra.mxu0 %v993
        %1126 = vmatprep.subr.bf16.mxu0 %v996
        %1127 = vmatpush1.bf16.msra.mxu0 %v995
        %1128 = vmatprep.subr.bf16.mxu0 %v998
        %1129 = vmatpush1.bf16.msra.mxu0 %v997
        %1130 = vmatprep.subr.bf16.mxu0 %v1000
        %1131 = vmatpush1.bf16.msra.mxu0 %v999
        %1132 = vmatprep.subr.bf16.mxu0 %v1002
        %1133 = vmatpush1.bf16.msra.mxu0 %v1001
        %1134 = vmatprep.subr.bf16.mxu0 %v1004
        %1135 = vmatpush1.bf16.msra.mxu0 %v1003
        %1136 = vmatprep.subr.bf16.mxu0 %v1006
        %1137 = vmatpush1.bf16.msra.mxu0 %v1005
        %1138 = vmatprep.subr.bf16.mxu0 %v1008
        %1139 = vmatpush1.bf16.msra.mxu0 %v1007
        %1140 = vmatprep.subr.bf16.mxu0 %v1010
        %1141 = vmatpush1.bf16.msra.mxu0 %v1009
        %1142 = vmatprep.subr.bf16.mxu0 %v1012
        %1143 = vmatpush1.bf16.msra.mxu0 %v1011
        %1144 = vmatprep.subr.bf16.mxu0 %v1014
        %1145 = vmatpush1.bf16.msra.mxu0 %v1013
        %1146 = vmatprep.subr.bf16.mxu0 %v1016
        %1147 = vmatpush1.bf16.msra.mxu0 %v1015
        %1148 = vmatprep.subr.bf16.mxu0 %v1018
        %1149 = vmatpush1.bf16.msra.mxu0 %v1017
        %1150 = vmatprep.mubr.bf16.mxu0 %v1115
        %1151 = vmatmul.mubr.bf16.gmra.mrb[0].mxu0 %v1114
        %v1152 = vpop.f32.mrb[0].mxu0
        %v1153 = vadd.f32 1e-05, %v1152
        %v1154 = vpop.f32.mrb[0].mxu0
        %v1155 = vadd.f32 1e-05, %v1154
        %v1156 = vpop.f32.mrb[0].mxu0
        %v1157 = vadd.f32 1e-05, %v1156
        %v1158 = vpop.f32.mrb[0].mxu0
        %v1159 = vadd.f32 1e-05, %v1158
        %1160 = vmatprep.mubr.bf16.mxu0 %v1117
        %1161 = vmatmul.mubr.bf16.gmra.mrb[0].mxu0 %v1116
        %v1162 = vpop.f32.mrb[0].mxu0
        %v1163 = vadd.f32 1e-05, %v1162
        %v1164 = vpop.f32.mrb[0].mxu0
        %v1165 = vadd.f32 1e-05, %v1164
        %v1166 = vpop.f32.mrb[0].mxu0
        %v1167 = vpop.f32.mrb[0].mxu0
        %1168 = vdwg.mxu0
        %v1169 = vrsqrt.pop %v1153
        %v1170 = vrsqrt.pop %v1155
        %v1171 = vrsqrt.pop %v1157
        %v1172 = vrsqrt.pop %v1159
        %v1173 = vrsqrt.pop %v1163
        %v1174 = vrsqrt.pop %v1165
        %v1175 = vmul.f32 %v1102, %v1169
        %v1176 = vmul.f32 %v1103, %v1170
        %v1177 = vmul.f32 %v1104, %v1171
        %v1178 = vmul.f32 %v1105, %v1172
        %v1179 = vmul.f32 %v1106, %v1173
        %v1180 = vmul.f32 %v1107, %v1174
        %v1182 = vlaneseq
        %v1183 = vshrl.u32 %v1182, 7
        %v1184 = vsub.s32 0, %v1183
        %v1185 = vrot.slane %v579, %v1184
        %v1186 = vlaneseq
        %v1187 = vshrl.u32 %v1186, 7
        %v1188 = vsub.s32 1, %v1187
        %v1189 = vrot.slane %v579, %v1188
        %v1192 = vmul.f32 %v1175, %v1185
        %v1193 = vmul.f32 %v1176, %v1189
        %v1194 = vmul.f32 %v1177, %v1185
        %v1195 = vmul.f32 %v1178, %v1189
        %v1196 = vmul.f32 %v1179, %v1185
        %v1197 = vmul.f32 %v1180, %v1189
        %v1199 = vlaneseq
        %v1200 = vshrl.u32 %v1199, 7
        %v1201 = vsub.s32 0, %v1200
        %v1202 = vrot.slane %v581, %v1201
        %v1203 = vlaneseq
        %v1204 = vshrl.u32 %v1203, 7
        %v1205 = vsub.s32 1, %v1204
        %v1206 = vrot.slane %v581, %v1205
        %v1209 = vadd.f32 %v1192, %v1202
        %v1210 = vadd.f32 %v1193, %v1206
        %v1211 = vadd.f32 %v1194, %v1202
        %v1212 = vadd.f32 %v1195, %v1206
        %v1213 = vadd.f32 %v1196, %v1202
        %v1214 = vadd.f32 %v1197, %v1206
        %v1215 = vmax.f32 %v1209, 0.0
        %v1216 = vmax.f32 %v1210, 0.0
        %v1217 = vmax.f32 %v1211, 0.0
        %v1218 = vmax.f32 %v1212, 0.0
        %v1219 = vmax.f32 %v1213, 0.0
        %v1220 = vmax.f32 %v1214, 0.0
        %v1221 = vpack.c.bf16 %v1217, %v1215
        %v1222 = vpack.c.bf16 %v1218, %v1216
        %v1223 = vpack.c.bf16 %v1219, %v1219
        %v1224 = vpack.c.bf16 %v1220, %v1220
        %v1225 = vld [vmem:[%s4] sm:$0xff]
        %v1226 = vld [vmem:[%s4 + $0x8] sm:$0xff]
        %v1227 = vld [vmem:[%s4 + $0x10] sm:$0xff]
        %v1228 = vld [vmem:[%s4 + $0x18] sm:$0xff]
        %v1229 = vld [vmem:[%s4 + $0x20] sm:$0xff]
        %v1230 = vld [vmem:[%s4 + $0x28] sm:$0xff]
        %v1231 = vld [vmem:[%s4 + $0x30] sm:$0xff]
        %v1232 = vld [vmem:[%s4 + $0x38] sm:$0xff]
        %v1233 = vld [vmem:[%s4 + $0x40] sm:$0xff]
        %v1234 = vld [vmem:[%s4 + $0x48] sm:$0xff]
        %v1235 = vld [vmem:[%s4 + $0x50] sm:$0xff]
        %v1236 = vld [vmem:[%s4 + $0x58] sm:$0xff]
        %v1237 = vld [vmem:[%s4 + $0x60] sm:$0xff]
        %v1238 = vld [vmem:[%s4 + $0x68] sm:$0xff]
        %v1239 = vld [vmem:[%s4 + $0x70] sm:$0xff]
        %v1240 = vld [vmem:[%s4 + $0x78] sm:$0xff]
        %v1241 = vld [vmem:[%s4 + $0x80] sm:$0xff]
        %v1242 = vld [vmem:[%s4 + $0x88] sm:$0xff]
        %v1243 = vld [vmem:[%s4 + $0x90] sm:$0xff]
        %v1244 = vld [vmem:[%s4 + $0x98] sm:$0xff]
        %v1245 = vld [vmem:[%s4 + $0xa0] sm:$0xff]
        %v1246 = vld [vmem:[%s4 + $0xa8] sm:$0xff]
        %v1247 = vld [vmem:[%s4 + $0xb0] sm:$0xff]
        %v1248 = vld [vmem:[%s4 + $0xb8] sm:$0xff]
        %v1249 = vld [vmem:[%s4 + $0xc0] sm:$0xff]
        %v1250 = vld [vmem:[%s4 + $0xc8] sm:$0xff]
        %v1251 = vld [vmem:[%s4 + $0xd0] sm:$0xff]
        %v1252 = vld [vmem:[%s4 + $0xd8] sm:$0xff]
        %v1253 = vld [vmem:[%s4 + $0xe0] sm:$0xff]
        %v1254 = vld [vmem:[%s4 + $0xe8] sm:$0xff]
        %v1255 = vld [vmem:[%s4 + $0xf0] sm:$0xff]
        %v1256 = vld [vmem:[%s4 + $0xf8] sm:$0xff]
        %v1258 = vlaneseq
        %v1259 = vshrl.u32 %v1258, 7
        %v1260 = vsub.s32 0, %v1259
        %v1261 = vrot.slane %v583, %v1260
        %v1262 = vlaneseq
        %v1263 = vshrl.u32 %v1262, 7
        %v1264 = vsub.s32 1, %v1263
        %v1265 = vrot.slane %v583, %v1264
        %v1300 = vunpack.c.l.b16 %v1225
        %v1301 = vunpack.c.h.b16 %v1225
        %v1302 = vunpack.c.l.b16 %v1226
        %v1303 = vunpack.c.h.b16 %v1226
        %v1304 = vunpack.c.l.b16 %v1227
        %v1305 = vunpack.c.h.b16 %v1227
        %v1306 = vunpack.c.l.b16 %v1228
        %v1307 = vunpack.c.h.b16 %v1228
        %v1308 = vunpack.c.l.b16 %v1229
        %v1309 = vunpack.c.h.b16 %v1229
        %v1310 = vunpack.c.l.b16 %v1230
        %v1311 = vunpack.c.h.b16 %v1230
        %v1312 = vunpack.c.l.b16 %v1231
        %v1313 = vunpack.c.h.b16 %v1231
        %v1314 = vunpack.c.l.b16 %v1232
        %v1315 = vunpack.c.h.b16 %v1232
        %v1316 = vunpack.c.l.b16 %v1233
        %v1317 = vunpack.c.h.b16 %v1233
        %v1318 = vunpack.c.l.b16 %v1234
        %v1319 = vunpack.c.h.b16 %v1234
        %v1320 = vunpack.c.l.b16 %v1235
        %v1321 = vunpack.c.h.b16 %v1235
        %v1322 = vunpack.c.l.b16 %v1236
        %v1323 = vunpack.c.h.b16 %v1236
        %v1324 = vunpack.c.l.b16 %v1237
        %v1325 = vunpack.c.h.b16 %v1237
        %v1326 = vunpack.c.l.b16 %v1238
        %v1327 = vunpack.c.h.b16 %v1238
        %v1328 = vunpack.c.l.b16 %v1239
        %v1329 = vunpack.c.h.b16 %v1239
        %v1330 = vunpack.c.l.b16 %v1240
        %v1331 = vunpack.c.h.b16 %v1240
        %v1332 = vunpack.c.l.b16 %v1241
        %v1333 = vunpack.c.h.b16 %v1241
        %v1334 = vunpack.c.l.b16 %v1242
        %v1335 = vunpack.c.h.b16 %v1242
        %v1336 = vunpack.c.l.b16 %v1243
        %v1337 = vunpack.c.h.b16 %v1243
        %v1338 = vunpack.c.l.b16 %v1244
        %v1339 = vunpack.c.h.b16 %v1244
        %v1340 = vunpack.c.l.b16 %v1245
        %v1341 = vunpack.c.h.b16 %v1245
        %v1342 = vunpack.c.l.b16 %v1246
        %v1343 = vunpack.c.h.b16 %v1246
        %v1344 = vunpack.c.l.b16 %v1247
        %v1345 = vunpack.c.h.b16 %v1247
        %v1346 = vunpack.c.l.b16 %v1248
        %v1347 = vunpack.c.h.b16 %v1248
        %v1348 = vunpack.c.l.b16 %v1249
        %v1349 = vunpack.c.h.b16 %v1249
        %v1350 = vunpack.c.l.b16 %v1250
        %v1351 = vunpack.c.h.b16 %v1250
        %v1352 = vunpack.c.l.b16 %v1251
        %v1353 = vunpack.c.h.b16 %v1251
        %v1354 = vunpack.c.l.b16 %v1252
        %v1355 = vunpack.c.h.b16 %v1252
        %v1356 = vunpack.c.l.b16 %v1253
        %v1357 = vunpack.c.h.b16 %v1253
        %v1358 = vunpack.c.l.b16 %v1254
        %v1359 = vunpack.c.h.b16 %v1254
        %v1360 = vunpack.c.l.b16 %v1255
        %v1361 = vunpack.c.h.b16 %v1255
        %v1362 = vunpack.c.l.b16 %v1256
        %v1363 = vunpack.c.h.b16 %v1256
        %v1364 = vpack.c.b16 %v1302, %v1300
        %v1365 = vpack.c.b16 %v1303, %v1301
        %v1366 = vpack.c.b16 %v1306, %v1304
        %v1367 = vpack.c.b16 %v1307, %v1305
        %v1368 = vpack.c.b16 %v1310, %v1308
        %v1369 = vpack.c.b16 %v1311, %v1309
        %v1370 = vpack.c.b16 %v1314, %v1312
        %v1371 = vpack.c.b16 %v1315, %v1313
        %v1372 = vpack.c.b16 %v1318, %v1316
        %v1373 = vpack.c.b16 %v1319, %v1317
        %v1374 = vpack.c.b16 %v1322, %v1320
        %v1375 = vpack.c.b16 %v1323, %v1321
        %v1376 = vpack.c.b16 %v1326, %v1324
        %v1377 = vpack.c.b16 %v1327, %v1325
        %v1378 = vpack.c.b16 %v1330, %v1328
        %v1379 = vpack.c.b16 %v1331, %v1329
        %v1380 = vpack.c.b16 %v1334, %v1332
        %v1381 = vpack.c.b16 %v1335, %v1333
        %v1382 = vpack.c.b16 %v1338, %v1336
        %v1383 = vpack.c.b16 %v1339, %v1337
        %v1384 = vpack.c.b16 %v1342, %v1340
        %v1385 = vpack.c.b16 %v1343, %v1341
        %v1386 = vpack.c.b16 %v1346, %v1344
        %v1387 = vpack.c.b16 %v1347, %v1345
        %v1388 = vpack.c.b16 %v1350, %v1348
        %v1389 = vpack.c.b16 %v1351, %v1349
        %v1390 = vpack.c.b16 %v1354, %v1352
        %v1391 = vpack.c.b16 %v1355, %v1353
        %v1392 = vpack.c.b16 %v1358, %v1356
        %v1393 = vpack.c.b16 %v1359, %v1357
        %v1394 = vpack.c.b16 %v1362, %v1360
        %v1395 = vpack.c.b16 %v1363, %v1361
        %1428 = vmatprep.subr.bf16.mxu0 %v1365
        %1429 = vmatpush1.bf16.msra.mxu0 %v1364
        %1430 = vmatprep.subr.bf16.mxu0 %v1367
        %1431 = vmatpush1.bf16.msra.mxu0 %v1366
        %1432 = vmatprep.subr.bf16.mxu0 %v1369
        %1433 = vmatpush1.bf16.msra.mxu0 %v1368
        %1434 = vmatprep.subr.bf16.mxu0 %v1371
        %1435 = vmatpush1.bf16.msra.mxu0 %v1370
        %1436 = vmatprep.subr.bf16.mxu0 %v1373
        %1437 = vmatpush1.bf16.msra.mxu0 %v1372
        %1438 = vmatprep.subr.bf16.mxu0 %v1375
        %1439 = vmatpush1.bf16.msra.mxu0 %v1374
        %1440 = vmatprep.subr.bf16.mxu0 %v1377
        %1441 = vmatpush1.bf16.msra.mxu0 %v1376
        %1442 = vmatprep.subr.bf16.mxu0 %v1379
        %1443 = vmatpush1.bf16.msra.mxu0 %v1378
        %1444 = vmatprep.subr.bf16.mxu0 %v1381
        %1445 = vmatpush1.bf16.msra.mxu0 %v1380
        %1446 = vmatprep.subr.bf16.mxu0 %v1383
        %1447 = vmatpush1.bf16.msra.mxu0 %v1382
        %1448 = vmatprep.subr.bf16.mxu0 %v1385
        %1449 = vmatpush1.bf16.msra.mxu0 %v1384
        %1450 = vmatprep.subr.bf16.mxu0 %v1387
        %1451 = vmatpush1.bf16.msra.mxu0 %v1386
        %1452 = vmatprep.subr.bf16.mxu0 %v1389
        %1453 = vmatpush1.bf16.msra.mxu0 %v1388
        %1454 = vmatprep.subr.bf16.mxu0 %v1391
        %1455 = vmatpush1.bf16.msra.mxu0 %v1390
        %1456 = vmatprep.subr.bf16.mxu0 %v1393
        %1457 = vmatpush1.bf16.msra.mxu0 %v1392
        %1458 = vmatprep.subr.bf16.mxu0 %v1395
        %1459 = vmatpush1.bf16.msra.mxu0 %v1394
        %1460 = vmatprep.mubr.bf16.mxu0 %v1222
        %1461 = vmatmul.mubr.bf16.gmra.mrb[0].mxu0 %v1221
        %v1462 = vpop.f32.mrb[0].mxu0
        %v1463 = vadd.f32 %v1261, %v1462
        %v1464 = vpop.f32.mrb[0].mxu0
        %v1465 = vadd.f32 %v1265, %v1464
        %v1466 = vpop.f32.mrb[0].mxu0
        %v1467 = vadd.f32 %v1261, %v1466
        %v1468 = vpop.f32.mrb[0].mxu0
        %v1469 = vadd.f32 %v1265, %v1468
        %1470 = vmatprep.mubr.bf16.mxu0 %v1224
        %1471 = vmatmul.mubr.bf16.gmra.mrb[0].mxu0 %v1223
        %v1472 = vpop.f32.mrb[0].mxu0
        %v1473 = vadd.f32 %v1261, %v1472
        %v1474 = vpop.f32.mrb[0].mxu0
        %v1475 = vadd.f32 %v1265, %v1474
        %v1476 = vpop.f32.mrb[0].mxu0
        %v1477 = vpop.f32.mrb[0].mxu0
        %1478 = vdwg.mxu0
        %v1479 = vpack.c.bf16 %v1467, %v1463
        %v1480 = vpack.c.bf16 %v1469, %v1465
        %v1481 = vpack.c.bf16 %v1473, %v1473
        %v1482 = vpack.c.bf16 %v1475, %v1475
        %1483 = vmatprep.subr.bf16.mxu0 %v988
        %1484 = vmatpush1.bf16.msra.mxu0 %v987
        %1485 = vmatprep.subr.bf16.mxu0 %v990
        %1486 = vmatpush1.bf16.msra.mxu0 %v989
        %1487 = vmatprep.subr.bf16.mxu0 %v992
        %1488 = vmatpush1.bf16.msra.mxu0 %v991
        %1489 = vmatprep.subr.bf16.mxu0 %v994
        %1490 = vmatpush1.bf16.msra.mxu0 %v993
        %1491 = vmatprep.subr.bf16.mxu0 %v996
        %1492 = vmatpush1.bf16.msra.mxu0 %v995
        %1493 = vmatprep.subr.bf16.mxu0 %v998
        %1494 = vmatpush1.bf16.msra.mxu0 %v997
        %1495 = vmatprep.subr.bf16.mxu0 %v1000
        %1496 = vmatpush1.bf16.msra.mxu0 %v999
        %1497 = vmatprep.subr.bf16.mxu0 %v1002
        %1498 = vmatpush1.bf16.msra.mxu0 %v1001
        %1499 = vmatprep.subr.bf16.mxu0 %v1004
        %1500 = vmatpush1.bf16.msra.mxu0 %v1003
        %1501 = vmatprep.subr.bf16.mxu0 %v1006
        %1502 = vmatpush1.bf16.msra.mxu0 %v1005
        %1503 = vmatprep.subr.bf16.mxu0 %v1008
        %1504 = vmatpush1.bf16.msra.mxu0 %v1007
        %1505 = vmatprep.subr.bf16.mxu0 %v1010
        %1506 = vmatpush1.bf16.msra.mxu0 %v1009
        %1507 = vmatprep.subr.bf16.mxu0 %v1012
        %1508 = vmatpush1.bf16.msra.mxu0 %v1011
        %1509 = vmatprep.subr.bf16.mxu0 %v1014
        %1510 = vmatpush1.bf16.msra.mxu0 %v1013
        %1511 = vmatprep.subr.bf16.mxu0 %v1016
        %1512 = vmatpush1.bf16.msra.mxu0 %v1015
        %1513 = vmatprep.subr.bf16.mxu0 %v1018
        %1514 = vmatpush1.bf16.msra.mxu0 %v1017
        %1515 = vmatprep.mubr.bf16.mxu0 %v1480
        %1516 = vmatmul.mubr.bf16.gmra.mrb[0].mxu0 %v1479
        %v1517 = vpop.f32.mrb[0].mxu0
        %v1518 = vadd.f32 0.0, %v1517
        %v1519 = vpop.f32.mrb[0].mxu0
        %v1520 = vadd.f32 0.0, %v1519
        %v1521 = vpop.f32.mrb[0].mxu0
        %v1522 = vadd.f32 0.0, %v1521
        %v1523 = vpop.f32.mrb[0].mxu0
        %v1524 = vadd.f32 0.0, %v1523
        %1525 = vmatprep.mubr.bf16.mxu0 %v1482
        %1526 = vmatmul.mubr.bf16.gmra.mrb[0].mxu0 %v1481
        %v1527 = vpop.f32.mrb[0].mxu0
        %v1528 = vadd.f32 0.0, %v1527
        %v1529 = vpop.f32.mrb[0].mxu0
        %v1530 = vadd.f32 0.0, %v1529
        %v1531 = vpop.f32.mrb[0].mxu0
        %v1532 = vpop.f32.mrb[0].mxu0
        %1533 = vdwg.mxu0
        %v1534 = vsub.f32 %v1463, %v1518
        %v1535 = vsub.f32 %v1465, %v1520
        %v1536 = vsub.f32 %v1467, %v1522
        %v1537 = vsub.f32 %v1469, %v1524
        %v1538 = vsub.f32 %v1473, %v1528
        %v1539 = vsub.f32 %v1475, %v1530
        %v1540 = vmul.f32 %v1534, %v1534
        %v1541 = vmul.f32 %v1535, %v1535
        %v1542 = vmul.f32 %v1536, %v1536
        %v1543 = vmul.f32 %v1537, %v1537
        %v1544 = vmul.f32 %v1538, %v1538
        %v1545 = vmul.f32 %v1539, %v1539
        %v1546 = vpack.c.bf16 %v1542, %v1540
        %v1547 = vpack.c.bf16 %v1543, %v1541
        %v1548 = vpack.c.bf16 %v1544, %v1544
        %v1549 = vpack.c.bf16 %v1545, %v1545
        %1550 = vmatprep.subr.bf16.mxu0 %v988
        %1551 = vmatpush1.bf16.msra.mxu0 %v987
        %1552 = vmatprep.subr.bf16.mxu0 %v990
        %1553 = vmatpush1.bf16.msra.mxu0 %v989
        %1554 = vmatprep.subr.bf16.mxu0 %v992
        %1555 = vmatpush1.bf16.msra.mxu0 %v991
        %1556 = vmatprep.subr.bf16.mxu0 %v994
        %1557 = vmatpush1.bf16.msra.mxu0 %v993
        %1558 = vmatprep.subr.bf16.mxu0 %v996
        %1559 = vmatpush1.bf16.msra.mxu0 %v995
        %1560 = vmatprep.subr.bf16.mxu0 %v998
        %1561 = vmatpush1.bf16.msra.mxu0 %v997
        %1562 = vmatprep.subr.bf16.mxu0 %v1000
        %1563 = vmatpush1.bf16.msra.mxu0 %v999
        %1564 = vmatprep.subr.bf16.mxu0 %v1002
        %1565 = vmatpush1.bf16.msra.mxu0 %v1001
        %1566 = vmatprep.subr.bf16.mxu0 %v1004
        %1567 = vmatpush1.bf16.msra.mxu0 %v1003
        %1568 = vmatprep.subr.bf16.mxu0 %v1006
        %1569 = vmatpush1.bf16.msra.mxu0 %v1005
        %1570 = vmatprep.subr.bf16.mxu0 %v1008
        %1571 = vmatpush1.bf16.msra.mxu0 %v1007
        %1572 = vmatprep.subr.bf16.mxu0 %v1010
        %1573 = vmatpush1.bf16.msra.mxu0 %v1009
        %1574 = vmatprep.subr.bf16.mxu0 %v1012
        %1575 = vmatpush1.bf16.msra.mxu0 %v1011
        %1576 = vmatprep.subr.bf16.mxu0 %v1014
        %1577 = vmatpush1.bf16.msra.mxu0 %v1013
        %1578 = vmatprep.subr.bf16.mxu0 %v1016
        %1579 = vmatpush1.bf16.msra.mxu0 %v1015
        %1580 = vmatprep.subr.bf16.mxu0 %v1018
        %1581 = vmatpush1.bf16.msra.mxu0 %v1017
        %1582 = vmatprep.mubr.bf16.mxu0 %v1547
        %1583 = vmatmul.mubr.bf16.gmra.mrb[0].mxu0 %v1546
        %v1584 = vpop.f32.mrb[0].mxu0
        %v1585 = vadd.f32 1e-05, %v1584
        %v1586 = vpop.f32.mrb[0].mxu0
        %v1587 = vadd.f32 1e-05, %v1586
        %v1588 = vpop.f32.mrb[0].mxu0
        %v1589 = vadd.f32 1e-05, %v1588
        %v1590 = vpop.f32.mrb[0].mxu0
        %v1591 = vadd.f32 1e-05, %v1590
        %1592 = vmatprep.mubr.bf16.mxu0 %v1549
        %1593 = vmatmul.mubr.bf16.gmra.mrb[0].mxu0 %v1548
        %v1594 = vpop.f32.mrb[0].mxu0
        %v1595 = vadd.f32 1e-05, %v1594
        %v1596 = vpop.f32.mrb[0].mxu0
        %v1597 = vadd.f32 1e-05, %v1596
        %v1598 = vpop.f32.mrb[0].mxu0
        %v1599 = vpop.f32.mrb[0].mxu0
        %1600 = vdwg.mxu0
        %v1601 = vrsqrt.pop %v1585
        %v1602 = vrsqrt.pop %v1587
        %v1603 = vrsqrt.pop %v1589
        %v1604 = vrsqrt.pop %v1591
        %v1605 = vrsqrt.pop %v1595
        %v1606 = vrsqrt.pop %v1597
        %v1607 = vmul.f32 %v1534, %v1601
        %v1608 = vmul.f32 %v1535, %v1602
        %v1609 = vmul.f32 %v1536, %v1603
        %v1610 = vmul.f32 %v1537, %v1604
        %v1611 = vmul.f32 %v1538, %v1605
        %v1612 = vmul.f32 %v1539, %v1606
        %v1614 = vlaneseq
        %v1615 = vshrl.u32 %v1614, 7
        %v1616 = vsub.s32 0, %v1615
        %v1617 = vrot.slane %v585, %v1616
        %v1618 = vlaneseq
        %v1619 = vshrl.u32 %v1618, 7
        %v1620 = vsub.s32 1, %v1619
        %v1621 = vrot.slane %v585, %v1620
        %v1624 = vmul.f32 %v1607, %v1617
        %v1625 = vmul.f32 %v1608, %v1621
        %v1626 = vmul.f32 %v1609, %v1617
        %v1627 = vmul.f32 %v1610, %v1621
        %v1628 = vmul.f32 %v1611, %v1617
        %v1629 = vmul.f32 %v1612, %v1621
        %v1631 = vlaneseq
        %v1632 = vshrl.u32 %v1631, 7
        %v1633 = vsub.s32 0, %v1632
        %v1634 = vrot.slane %v587, %v1633
        %v1635 = vlaneseq
        %v1636 = vshrl.u32 %v1635, 7
        %v1637 = vsub.s32 1, %v1636
        %v1638 = vrot.slane %v587, %v1637
        %v1641 = vadd.f32 %v1624, %v1634
        %v1642 = vadd.f32 %v1625, %v1638
        %v1643 = vadd.f32 %v1626, %v1634
        %v1644 = vadd.f32 %v1627, %v1638
        %v1645 = vadd.f32 %v1628, %v1634
        %v1646 = vadd.f32 %v1629, %v1638
        %v1647 = vmax.f32 %v1641, 0.0
        %v1648 = vmax.f32 %v1642, 0.0
        %v1649 = vmax.f32 %v1643, 0.0
        %v1650 = vmax.f32 %v1644, 0.0
        %v1651 = vmax.f32 %v1645, 0.0
        %v1652 = vmax.f32 %v1646, 0.0
        %v1653 = vmul.f32 %v1647, %v700
        %v1654 = vmul.f32 %v1648, %v702
        %v1655 = vmul.f32 %v1649, %v704
        %v1656 = vmul.f32 %v1650, %v706
        %v1657 = vmul.f32 %v1651, %v710
        %v1658 = vmul.f32 %v1652, %v712
        %v1659 = vmax.f32 %v1653, %v1654
        %v1660 = vmax.f32 %v1655, %v1656
        %v1661 = vmax.f32 %v1657, %v1658
        %1662 = vrot.lane.b32.xlu0 %v1659, 64
        %v1663 = vpop.permute.xlu0 %1662
        %1664 = vrot.lane.b32.xlu0 %v1660, 64
        %v1665 = vpop.permute.xlu0 %1664
        %1666 = vrot.lane.b32.xlu0 %v1661, 64
        %v1667 = vpop.permute.xlu0 %1666
        %v1668 = vlaneseq
        %v1669 = vand.u32 %v1668, 127
        %v1670 = vmax.f32 %v1659, %v1663
        %v1671 = vmax.f32 %v1660, %v1665
        %v1672 = vmax.f32 %v1661, %v1667
        %1673 = vrot.lane.b32.xlu0 %v1670, 32
        %v1674 = vpop.permute.xlu0 %1673
        %1675 = vrot.lane.b32.xlu0 %v1671, 32
        %v1676 = vpop.permute.xlu0 %1675
        %1677 = vrot.lane.b32.xlu0 %v1672, 32
        %v1678 = vpop.permute.xlu0 %1677
        %v1679 = vmax.f32 %v1670, %v1674
        %v1680 = vmax.f32 %v1671, %v1676
        %v1681 = vmax.f32 %v1672, %v1678
        %v1682 = vpack.c.bf16 %v1655, %v1653
        %v1683 = vpack.c.bf16 %v1656, %v1654
        %v1684 = vpack.c.bf16 %v1657, %v1657
        %v1685 = vpack.c.bf16 %v1658, %v1658
        %v1686 = vld [vmem:[#allocation4] sm:$0xff]
        %v1687 = vld [vmem:[#allocation4 + $0x8] sm:$0xff]
        %v1688 = vld [vmem:[#allocation4 + $0x10] sm:$0xff]
        %v1689 = vld [vmem:[#allocation4 + $0x18] sm:$0xff]
        %v1690 = vld [vmem:[#allocation4 + $0x20] sm:$0xff]
        %v1691 = vld [vmem:[#allocation4 + $0x28] sm:$0xff]
        %v1692 = vld [vmem:[#allocation4 + $0x30] sm:$0xff]
        %v1693 = vld [vmem:[#allocation4 + $0x38] sm:$0xff]
        %v1694 = vld [vmem:[#allocation4 + $0x40] sm:$0xff]
        %v1695 = vld [vmem:[#allocation4 + $0x48] sm:$0xff]
        %v1696 = vld [vmem:[#allocation4 + $0x50] sm:$0xff]
        %v1697 = vld [vmem:[#allocation4 + $0x58] sm:$0xff]
        %v1698 = vld [vmem:[#allocation4 + $0x60] sm:$0xff]
        %v1699 = vld [vmem:[#allocation4 + $0x68] sm:$0xff]
        %v1700 = vld [vmem:[#allocation4 + $0x70] sm:$0xff]
        %v1701 = vld [vmem:[#allocation4 + $0x78] sm:$0xff]
        %v1702 = vld [vmem:[#allocation4 + $0x80] sm:$0xff]
        %v1703 = vld [vmem:[#allocation4 + $0x88] sm:$0xff]
        %v1704 = vld [vmem:[#allocation4 + $0x90] sm:$0xff]
        %v1705 = vld [vmem:[#allocation4 + $0x98] sm:$0xff]
        %v1706 = vld [vmem:[#allocation4 + $0xa0] sm:$0xff]
        %v1707 = vld [vmem:[#allocation4 + $0xa8] sm:$0xff]
        %v1708 = vld [vmem:[#allocation4 + $0xb0] sm:$0xff]
        %v1709 = vld [vmem:[#allocation4 + $0xb8] sm:$0xff]
        %v1710 = vld [vmem:[#allocation4 + $0xc0] sm:$0xff]
        %v1711 = vld [vmem:[#allocation4 + $0xc8] sm:$0xff]
        %v1712 = vld [vmem:[#allocation4 + $0xd0] sm:$0xff]
        %v1713 = vld [vmem:[#allocation4 + $0xd8] sm:$0xff]
        %v1714 = vld [vmem:[#allocation4 + $0xe0] sm:$0xff]
        %v1715 = vld [vmem:[#allocation4 + $0xe8] sm:$0xff]
        %v1716 = vld [vmem:[#allocation4 + $0xf0] sm:$0xff]
        %v1717 = vld [vmem:[#allocation4 + $0xf8] sm:$0xff]
        %v1718 = vpack.c.bf16 %v1680, %v1679
        %v1719 = vpack.c.bf16 %v1681, %v1681
        %v1720 = vld [vmem:[#allocation6] sm:$0xff]
        %v1721 = vld [vmem:[#allocation6 + $0x8] sm:$0xff]
        %v1722 = vld [vmem:[#allocation6 + $0x10] sm:$0xff]
        %v1723 = vld [vmem:[#allocation6 + $0x18] sm:$0xff]
        %v1724 = vld [vmem:[#allocation6 + $0x20] sm:$0xff]
        %v1725 = vld [vmem:[#allocation6 + $0x28] sm:$0xff]
        %v1726 = vld [vmem:[#allocation6 + $0x30] sm:$0xff]
        %v1727 = vld [vmem:[#allocation6 + $0x38] sm:$0xff]
        %v1728 = vld [vmem:[#allocation6 + $0x40] sm:$0xff]
        %v1729 = vld [vmem:[#allocation6 + $0x48] sm:$0xff]
        %v1730 = vld [vmem:[#allocation6 + $0x50] sm:$0xff]
        %v1731 = vld [vmem:[#allocation6 + $0x58] sm:$0xff]
        %v1732 = vld [vmem:[#allocation6 + $0x60] sm:$0xff]
        %v1733 = vld [vmem:[#allocation6 + $0x68] sm:$0xff]
        %v1734 = vld [vmem:[#allocation6 + $0x70] sm:$0xff]
        %v1735 = vld [vmem:[#allocation6 + $0x78] sm:$0xff]
        %v1736 = vld [vmem:[#allocation6 + $0x80] sm:$0xff]
        %v1737 = vld [vmem:[#allocation6 + $0x88] sm:$0xff]
        %v1738 = vld [vmem:[#allocation6 + $0x90] sm:$0xff]
        %v1739 = vld [vmem:[#allocation6 + $0x98] sm:$0xff]
        %v1740 = vld [vmem:[#allocation6 + $0xa0] sm:$0xff]
        %v1741 = vld [vmem:[#allocation6 + $0xa8] sm:$0xff]
        %v1742 = vld [vmem:[#allocation6 + $0xb0] sm:$0xff]
        %v1743 = vld [vmem:[#allocation6 + $0xb8] sm:$0xff]
        %v1744 = vld [vmem:[#allocation6 + $0xc0] sm:$0xff]
        %v1745 = vld [vmem:[#allocation6 + $0xc8] sm:$0xff]
        %v1746 = vld [vmem:[#allocation6 + $0xd0] sm:$0xff]
        %v1747 = vld [vmem:[#allocation6 + $0xd8] sm:$0xff]
        %v1748 = vld [vmem:[#allocation6 + $0xe0] sm:$0xff]
        %v1749 = vld [vmem:[#allocation6 + $0xe8] sm:$0xff]
        %v1750 = vld [vmem:[#allocation6 + $0xf0] sm:$0xff]
        %v1751 = vld [vmem:[#allocation6 + $0xf8] sm:$0xff]
        %v1784 = vunpack.c.l.b16 %v1720
        %v1785 = vunpack.c.h.b16 %v1720
        %v1786 = vunpack.c.l.b16 %v1721
        %v1787 = vunpack.c.h.b16 %v1721
        %v1788 = vunpack.c.l.b16 %v1722
        %v1789 = vunpack.c.h.b16 %v1722
        %v1790 = vunpack.c.l.b16 %v1723
        %v1791 = vunpack.c.h.b16 %v1723
        %v1792 = vunpack.c.l.b16 %v1724
        %v1793 = vunpack.c.h.b16 %v1724
        %v1794 = vunpack.c.l.b16 %v1725
        %v1795 = vunpack.c.h.b16 %v1725
        %v1796 = vunpack.c.l.b16 %v1726
        %v1797 = vunpack.c.h.b16 %v1726
        %v1798 = vunpack.c.l.b16 %v1727
        %v1799 = vunpack.c.h.b16 %v1727
        %v1800 = vunpack.c.l.b16 %v1728
        %v1801 = vunpack.c.h.b16 %v1728
        %v1802 = vunpack.c.l.b16 %v1729
        %v1803 = vunpack.c.h.b16 %v1729
        %v1804 = vunpack.c.l.b16 %v1730
        %v1805 = vunpack.c.h.b16 %v1730
        %v1806 = vunpack.c.l.b16 %v1731
        %v1807 = vunpack.c.h.b16 %v1731
        %v1808 = vunpack.c.l.b16 %v1732
        %v1809 = vunpack.c.h.b16 %v1732
        %v1810 = vunpack.c.l.b16 %v1733
        %v1811 = vunpack.c.h.b16 %v1733
        %v1812 = vunpack.c.l.b16 %v1734
        %v1813 = vunpack.c.h.b16 %v1734
        %v1814 = vunpack.c.l.b16 %v1735
        %v1815 = vunpack.c.h.b16 %v1735
        %v1816 = vunpack.c.l.b16 %v1736
        %v1817 = vunpack.c.h.b16 %v1736
        %v1818 = vunpack.c.l.b16 %v1737
        %v1819 = vunpack.c.h.b16 %v1737
        %v1820 = vunpack.c.l.b16 %v1738
        %v1821 = vunpack.c.h.b16 %v1738
        %v1822 = vunpack.c.l.b16 %v1739
        %v1823 = vunpack.c.h.b16 %v1739
        %v1824 = vunpack.c.l.b16 %v1740
        %v1825 = vunpack.c.h.b16 %v1740
        %v1826 = vunpack.c.l.b16 %v1741
        %v1827 = vunpack.c.h.b16 %v1741
        %v1828 = vunpack.c.l.b16 %v1742
        %v1829 = vunpack.c.h.b16 %v1742
        %v1830 = vunpack.c.l.b16 %v1743
        %v1831 = vunpack.c.h.b16 %v1743
        %v1832 = vunpack.c.l.b16 %v1744
        %v1833 = vunpack.c.h.b16 %v1744
        %v1834 = vunpack.c.l.b16 %v1745
        %v1835 = vunpack.c.h.b16 %v1745
        %v1836 = vunpack.c.l.b16 %v1746
        %v1837 = vunpack.c.h.b16 %v1746
        %v1838 = vunpack.c.l.b16 %v1747
        %v1839 = vunpack.c.h.b16 %v1747
        %v1840 = vunpack.c.l.b16 %v1748
        %v1841 = vunpack.c.h.b16 %v1748
        %v1842 = vunpack.c.l.b16 %v1749
        %v1843 = vunpack.c.h.b16 %v1749
        %v1844 = vunpack.c.l.b16 %v1750
        %v1845 = vunpack.c.h.b16 %v1750
        %v1846 = vunpack.c.l.b16 %v1751
        %v1847 = vunpack.c.h.b16 %v1751
        %v1848 = vpack.c.b16 %v1786, %v1784
        %v1849 = vpack.c.b16 %v1787, %v1785
        %v1850 = vpack.c.b16 %v1790, %v1788
        %v1851 = vpack.c.b16 %v1791, %v1789
        %v1852 = vpack.c.b16 %v1794, %v1792
        %v1853 = vpack.c.b16 %v1795, %v1793
        %v1854 = vpack.c.b16 %v1798, %v1796
        %v1855 = vpack.c.b16 %v1799, %v1797
        %v1856 = vpack.c.b16 %v1802, %v1800
        %v1857 = vpack.c.b16 %v1803, %v1801
        %v1858 = vpack.c.b16 %v1806, %v1804
        %v1859 = vpack.c.b16 %v1807, %v1805
        %v1860 = vpack.c.b16 %v1810, %v1808
        %v1861 = vpack.c.b16 %v1811, %v1809
        %v1862 = vpack.c.b16 %v1814, %v1812
        %v1863 = vpack.c.b16 %v1815, %v1813
        %v1864 = vpack.c.b16 %v1818, %v1816
        %v1865 = vpack.c.b16 %v1819, %v1817
        %v1866 = vpack.c.b16 %v1822, %v1820
        %v1867 = vpack.c.b16 %v1823, %v1821
        %v1868 = vpack.c.b16 %v1826, %v1824
        %v1869 = vpack.c.b16 %v1827, %v1825
        %v1870 = vpack.c.b16 %v1830, %v1828
        %v1871 = vpack.c.b16 %v1831, %v1829
        %v1872 = vpack.c.b16 %v1834, %v1832
        %v1873 = vpack.c.b16 %v1835, %v1833
        %v1874 = vpack.c.b16 %v1838, %v1836
        %v1875 = vpack.c.b16 %v1839, %v1837
        %v1876 = vpack.c.b16 %v1842, %v1840
        %v1877 = vpack.c.b16 %v1843, %v1841
        %v1878 = vpack.c.b16 %v1846, %v1844
        %v1879 = vpack.c.b16 %v1847, %v1845
        %1912 = vmatprep.subr.bf16.mxu0 %v1849
        %1913 = vmatpush1.bf16.msra.mxu0 %v1848
        %1914 = vmatprep.subr.bf16.mxu0 %v1851
        %1915 = vmatpush1.bf16.msra.mxu0 %v1850
        %1916 = vmatprep.subr.bf16.mxu0 %v1853
        %1917 = vmatpush1.bf16.msra.mxu0 %v1852
        %1918 = vmatprep.subr.bf16.mxu0 %v1855
        %1919 = vmatpush1.bf16.msra.mxu0 %v1854
        %1920 = vmatprep.subr.bf16.mxu0 %v1857
        %1921 = vmatpush1.bf16.msra.mxu0 %v1856
        %1922 = vmatprep.subr.bf16.mxu0 %v1859
        %1923 = vmatpush1.bf16.msra.mxu0 %v1858
        %1924 = vmatprep.subr.bf16.mxu0 %v1861
        %1925 = vmatpush1.bf16.msra.mxu0 %v1860
        %1926 = vmatprep.subr.bf16.mxu0 %v1863
        %1927 = vmatpush1.bf16.msra.mxu0 %v1862
        %1928 = vmatprep.subr.bf16.mxu0 %v1865
        %1929 = vmatpush1.bf16.msra.mxu0 %v1864
        %1930 = vmatprep.subr.bf16.mxu0 %v1867
        %1931 = vmatpush1.bf16.msra.mxu0 %v1866
        %1932 = vmatprep.subr.bf16.mxu0 %v1869
        %1933 = vmatpush1.bf16.msra.mxu0 %v1868
        %1934 = vmatprep.subr.bf16.mxu0 %v1871
        %1935 = vmatpush1.bf16.msra.mxu0 %v1870
        %1936 = vmatprep.subr.bf16.mxu0 %v1873
        %1937 = vmatpush1.bf16.msra.mxu0 %v1872
        %1938 = vmatprep.subr.bf16.mxu0 %v1875
        %1939 = vmatpush1.bf16.msra.mxu0 %v1874
        %1940 = vmatprep.subr.bf16.mxu0 %v1877
        %1941 = vmatpush1.bf16.msra.mxu0 %v1876
        %1942 = vmatprep.subr.bf16.mxu0 %v1879
        %1943 = vmatpush1.bf16.msra.mxu0 %v1878
        %1944 = vmatprep.mubr.bf16.mxu0 %v1718
        %1945 = vmatmul.mubr.bf16.gmra.mrb[0].mxu0 %v1718
        %v1946 = vpop.f32.mrb[0].mxu0
        %v1947 = vadd.f32 0.0, %v1946
        %v1948 = vpop.f32.mrb[0].mxu0
        %v1949 = vadd.f32 0.0, %v1948
        %v1950 = vpop.f32.mrb[0].mxu0
        %v1951 = vadd.f32 0.0, %v1950
        %v1952 = vpop.f32.mrb[0].mxu0
        %v1953 = vadd.f32 0.0, %v1952
        %1954 = vmatprep.mubr.bf16.mxu0 %v1719
        %1955 = vmatmul.mubr.bf16.gmra.mrb[0].mxu0 %v1719
        %v1956 = vpop.f32.mrb[0].mxu0
        %v1957 = vadd.f32 0.0, %v1956
        %v1958 = vpop.f32.mrb[0].mxu0
        %v1959 = vadd.f32 0.0, %v1958
        %v1960 = vpop.f32.mrb[0].mxu0
        %v1961 = vpop.f32.mrb[0].mxu0
        %1962 = vdwg.mxu0
        %v1995 = vunpack.c.l.b16 %v1686
        %v1996 = vunpack.c.h.b16 %v1686
        %v1997 = vunpack.c.l.b16 %v1687
        %v1998 = vunpack.c.h.b16 %v1687
        %v1999 = vunpack.c.l.b16 %v1688
        %v2000 = vunpack.c.h.b16 %v1688
        %v2001 = vunpack.c.l.b16 %v1689
        %v2002 = vunpack.c.h.b16 %v1689
        %v2003 = vunpack.c.l.b16 %v1690
        %v2004 = vunpack.c.h.b16 %v1690
        %v2005 = vunpack.c.l.b16 %v1691
        %v2006 = vunpack.c.h.b16 %v1691
        %v2007 = vunpack.c.l.b16 %v1692
        %v2008 = vunpack.c.h.b16 %v1692
        %v2009 = vunpack.c.l.b16 %v1693
        %v2010 = vunpack.c.h.b16 %v1693
        %v2011 = vunpack.c.l.b16 %v1694
        %v2012 = vunpack.c.h.b16 %v1694
        %v2013 = vunpack.c.l.b16 %v1695
        %v2014 = vunpack.c.h.b16 %v1695
        %v2015 = vunpack.c.l.b16 %v1696
        %v2016 = vunpack.c.h.b16 %v1696
        %v2017 = vunpack.c.l.b16 %v1697
        %v2018 = vunpack.c.h.b16 %v1697
        %v2019 = vunpack.c.l.b16 %v1698
        %v2020 = vunpack.c.h.b16 %v1698
        %v2021 = vunpack.c.l.b16 %v1699
        %v2022 = vunpack.c.h.b16 %v1699
        %v2023 = vunpack.c.l.b16 %v1700
        %v2024 = vunpack.c.h.b16 %v1700
        %v2025 = vunpack.c.l.b16 %v1701
        %v2026 = vunpack.c.h.b16 %v1701
        %v2027 = vunpack.c.l.b16 %v1702
        %v2028 = vunpack.c.h.b16 %v1702
        %v2029 = vunpack.c.l.b16 %v1703
        %v2030 = vunpack.c.h.b16 %v1703
        %v2031 = vunpack.c.l.b16 %v1704
        %v2032 = vunpack.c.h.b16 %v1704
        %v2033 = vunpack.c.l.b16 %v1705
        %v2034 = vunpack.c.h.b16 %v1705
        %v2035 = vunpack.c.l.b16 %v1706
        %v2036 = vunpack.c.h.b16 %v1706
        %v2037 = vunpack.c.l.b16 %v1707
        %v2038 = vunpack.c.h.b16 %v1707
        %v2039 = vunpack.c.l.b16 %v1708
        %v2040 = vunpack.c.h.b16 %v1708
        %v2041 = vunpack.c.l.b16 %v1709
        %v2042 = vunpack.c.h.b16 %v1709
        %v2043 = vunpack.c.l.b16 %v1710
        %v2044 = vunpack.c.h.b16 %v1710
        %v2045 = vunpack.c.l.b16 %v1711
        %v2046 = vunpack.c.h.b16 %v1711
        %v2047 = vunpack.c.l.b16 %v1712
        %v2048 = vunpack.c.h.b16 %v1712
        %v2049 = vunpack.c.l.b16 %v1713
        %v2050 = vunpack.c.h.b16 %v1713
        %v2051 = vunpack.c.l.b16 %v1714
        %v2052 = vunpack.c.h.b16 %v1714
        %v2053 = vunpack.c.l.b16 %v1715
        %v2054 = vunpack.c.h.b16 %v1715
        %v2055 = vunpack.c.l.b16 %v1716
        %v2056 = vunpack.c.h.b16 %v1716
        %v2057 = vunpack.c.l.b16 %v1717
        %v2058 = vunpack.c.h.b16 %v1717
        %v2059 = vpack.c.b16 %v1997, %v1995
        %v2060 = vpack.c.b16 %v1998, %v1996
        %v2061 = vpack.c.b16 %v2001, %v1999
        %v2062 = vpack.c.b16 %v2002, %v2000
        %v2063 = vpack.c.b16 %v2005, %v2003
        %v2064 = vpack.c.b16 %v2006, %v2004
        %v2065 = vpack.c.b16 %v2009, %v2007
        %v2066 = vpack.c.b16 %v2010, %v2008
        %v2067 = vpack.c.b16 %v2013, %v2011
        %v2068 = vpack.c.b16 %v2014, %v2012
        %v2069 = vpack.c.b16 %v2017, %v2015
        %v2070 = vpack.c.b16 %v2018, %v2016
        %v2071 = vpack.c.b16 %v2021, %v2019
        %v2072 = vpack.c.b16 %v2022, %v2020
        %v2073 = vpack.c.b16 %v2025, %v2023
        %v2074 = vpack.c.b16 %v2026, %v2024
        %v2075 = vpack.c.b16 %v2029, %v2027
        %v2076 = vpack.c.b16 %v2030, %v2028
        %v2077 = vpack.c.b16 %v2033, %v2031
        %v2078 = vpack.c.b16 %v2034, %v2032
        %v2079 = vpack.c.b16 %v2037, %v2035
        %v2080 = vpack.c.b16 %v2038, %v2036
        %v2081 = vpack.c.b16 %v2041, %v2039
        %v2082 = vpack.c.b16 %v2042, %v2040
        %v2083 = vpack.c.b16 %v2045, %v2043
        %v2084 = vpack.c.b16 %v2046, %v2044
        %v2085 = vpack.c.b16 %v2049, %v2047
        %v2086 = vpack.c.b16 %v2050, %v2048
        %v2087 = vpack.c.b16 %v2053, %v2051
        %v2088 = vpack.c.b16 %v2054, %v2052
        %v2089 = vpack.c.b16 %v2057, %v2055
        %v2090 = vpack.c.b16 %v2058, %v2056
        %2123 = vmatprep.subr.bf16.mxu0 %v2060
        %2124 = vmatpush1.bf16.msra.mxu0 %v2059
        %2125 = vmatprep.subr.bf16.mxu0 %v2062
        %2126 = vmatpush1.bf16.msra.mxu0 %v2061
        %2127 = vmatprep.subr.bf16.mxu0 %v2064
        %2128 = vmatpush1.bf16.msra.mxu0 %v2063
        %2129 = vmatprep.subr.bf16.mxu0 %v2066
        %2130 = vmatpush1.bf16.msra.mxu0 %v2065
        %2131 = vmatprep.subr.bf16.mxu0 %v2068
        %2132 = vmatpush1.bf16.msra.mxu0 %v2067
        %2133 = vmatprep.subr.bf16.mxu0 %v2070
        %2134 = vmatpush1.bf16.msra.mxu0 %v2069
        %2135 = vmatprep.subr.bf16.mxu0 %v2072
        %2136 = vmatpush1.bf16.msra.mxu0 %v2071
        %2137 = vmatprep.subr.bf16.mxu0 %v2074
        %2138 = vmatpush1.bf16.msra.mxu0 %v2073
        %2139 = vmatprep.subr.bf16.mxu0 %v2076
        %2140 = vmatpush1.bf16.msra.mxu0 %v2075
        %2141 = vmatprep.subr.bf16.mxu0 %v2078
        %2142 = vmatpush1.bf16.msra.mxu0 %v2077
        %2143 = vmatprep.subr.bf16.mxu0 %v2080
        %2144 = vmatpush1.bf16.msra.mxu0 %v2079
        %2145 = vmatprep.subr.bf16.mxu0 %v2082
        %2146 = vmatpush1.bf16.msra.mxu0 %v2081
        %2147 = vmatprep.subr.bf16.mxu0 %v2084
        %2148 = vmatpush1.bf16.msra.mxu0 %v2083
        %2149 = vmatprep.subr.bf16.mxu0 %v2086
        %2150 = vmatpush1.bf16.msra.mxu0 %v2085
        %2151 = vmatprep.subr.bf16.mxu0 %v2088
        %2152 = vmatpush1.bf16.msra.mxu0 %v2087
        %2153 = vmatprep.subr.bf16.mxu0 %v2090
        %2154 = vmatpush1.bf16.msra.mxu0 %v2089
        %2155 = vmatprep.mubr.bf16.mxu0 %v1683
        %2156 = vmatmul.mubr.bf16.gmra.mrb[0].mxu0 %v1682
        %v2157 = vpop.f32.mrb[0].mxu0
        %v2158 = vadd.f32 %v1947, %v2157
        %v2159 = vpop.f32.mrb[0].mxu0
        %v2160 = vadd.f32 %v1949, %v2159
        %v2161 = vpop.f32.mrb[0].mxu0
        %v2162 = vadd.f32 %v1951, %v2161
        %v2163 = vpop.f32.mrb[0].mxu0
        %v2164 = vadd.f32 %v1953, %v2163
        %2165 = vmatprep.mubr.bf16.mxu0 %v1685
        %2166 = vmatmul.mubr.bf16.gmra.mrb[0].mxu0 %v1684
        %v2167 = vpop.f32.mrb[0].mxu0
        %v2168 = vadd.f32 %v1957, %v2167
        %v2169 = vpop.f32.mrb[0].mxu0
        %v2170 = vadd.f32 %v1959, %v2169
        %v2171 = vpop.f32.mrb[0].mxu0
        %v2172 = vpop.f32.mrb[0].mxu0
        %2173 = vdwg.mxu0
        %v2175 = vlaneseq
        %v2176 = vshrl.u32 %v2175, 7
        %v2177 = vsub.s32 0, %v2176
        %v2178 = vrot.slane %v589, %v2177
        %v2179 = vlaneseq
        %v2180 = vshrl.u32 %v2179, 7
        %v2181 = vsub.s32 1, %v2180
        %v2182 = vrot.slane %v589, %v2181
        %v2185 = vadd.f32 %v2158, %v2178
        %v2186 = vadd.f32 %v2160, %v2182
        %v2187 = vadd.f32 %v2162, %v2178
        %v2188 = vadd.f32 %v2164, %v2182
        %v2189 = vadd.f32 %v2168, %v2178
        %v2190 = vadd.f32 %v2170, %v2182
        %v2191 = vpack.c.bf16 %v2187, %v2185
        %v2192 = vpack.c.bf16 %v2188, %v2186
        %v2193 = vpack.c.bf16 %v2189, %v2189
        %v2194 = vpack.c.bf16 %v2190, %v2190
        %2195 = vmatprep.subr.bf16.mxu0 %v988
        %2196 = vmatpush1.bf16.msra.mxu0 %v987
        %2197 = vmatprep.subr.bf16.mxu0 %v990
        %2198 = vmatpush1.bf16.msra.mxu0 %v989
        %2199 = vmatprep.subr.bf16.mxu0 %v992
        %2200 = vmatpush1.bf16.msra.mxu0 %v991
        %2201 = vmatprep.subr.bf16.mxu0 %v994
        %2202 = vmatpush1.bf16.msra.mxu0 %v993
        %2203 = vmatprep.subr.bf16.mxu0 %v996
        %2204 = vmatpush1.bf16.msra.mxu0 %v995
        %2205 = vmatprep.subr.bf16.mxu0 %v998
        %2206 = vmatpush1.bf16.msra.mxu0 %v997
        %2207 = vmatprep.subr.bf16.mxu0 %v1000
        %2208 = vmatpush1.bf16.msra.mxu0 %v999
        %2209 = vmatprep.subr.bf16.mxu0 %v1002
        %2210 = vmatpush1.bf16.msra.mxu0 %v1001
        %2211 = vmatprep.subr.bf16.mxu0 %v1004
        %2212 = vmatpush1.bf16.msra.mxu0 %v1003
        %2213 = vmatprep.subr.bf16.mxu0 %v1006
        %2214 = vmatpush1.bf16.msra.mxu0 %v1005
        %2215 = vmatprep.subr.bf16.mxu0 %v1008
        %2216 = vmatpush1.bf16.msra.mxu0 %v1007
        %2217 = vmatprep.subr.bf16.mxu0 %v1010
        %2218 = vmatpush1.bf16.msra.mxu0 %v1009
        %2219 = vmatprep.subr.bf16.mxu0 %v1012
        %2220 = vmatpush1.bf16.msra.mxu0 %v1011
        %2221 = vmatprep.subr.bf16.mxu0 %v1014
        %2222 = vmatpush1.bf16.msra.mxu0 %v1013
        %2223 = vmatprep.subr.bf16.mxu0 %v1016
        %2224 = vmatpush1.bf16.msra.mxu0 %v1015
        %2225 = vmatprep.subr.bf16.mxu0 %v1018
        %2226 = vmatpush1.bf16.msra.mxu0 %v1017
        %2227 = vmatprep.mubr.bf16.mxu0 %v2192
        %2228 = vmatmul.mubr.bf16.gmra.mrb[0].mxu0 %v2191
        %v2229 = vpop.f32.mrb[0].mxu0
        %v2230 = vadd.f32 0.0, %v2229
        %v2231 = vpop.f32.mrb[0].mxu0
        %v2232 = vadd.f32 0.0, %v2231
        %v2233 = vpop.f32.mrb[0].mxu0
        %v2234 = vadd.f32 0.0, %v2233
        %v2235 = vpop.f32.mrb[0].mxu0
        %v2236 = vadd.f32 0.0, %v2235
        %2237 = vmatprep.mubr.bf16.mxu0 %v2194
        %2238 = vmatmul.mubr.bf16.gmra.mrb[0].mxu0 %v2193
        %v2239 = vpop.f32.mrb[0].mxu0
        %v2240 = vadd.f32 0.0, %v2239
        %v2241 = vpop.f32.mrb[0].mxu0
        %v2242 = vadd.f32 0.0, %v2241
        %v2243 = vpop.f32.mrb[0].mxu0
        %v2244 = vpop.f32.mrb[0].mxu0
        %2245 = vdwg.mxu0
        %v2246 = vsub.f32 %v2185, %v2230
        %v2247 = vsub.f32 %v2186, %v2232
        %v2248 = vsub.f32 %v2187, %v2234
        %v2249 = vsub.f32 %v2188, %v2236
        %v2250 = vsub.f32 %v2189, %v2240
        %v2251 = vsub.f32 %v2190, %v2242
        %v2252 = vmul.f32 %v2246, %v2246
        %v2253 = vmul.f32 %v2247, %v2247
        %v2254 = vmul.f32 %v2248, %v2248
        %v2255 = vmul.f32 %v2249, %v2249
        %v2256 = vmul.f32 %v2250, %v2250
        %v2257 = vmul.f32 %v2251, %v2251
        %v2258 = vpack.c.bf16 %v2254, %v2252
        %v2259 = vpack.c.bf16 %v2255, %v2253
        %v2260 = vpack.c.bf16 %v2256, %v2256
        %v2261 = vpack.c.bf16 %v2257, %v2257
        %2262 = vmatprep.subr.bf16.mxu0 %v988
        %2263 = vmatpush1.bf16.msra.mxu0 %v987
        %2264 = vmatprep.subr.bf16.mxu0 %v990
        %2265 = vmatpush1.bf16.msra.mxu0 %v989
        %2266 = vmatprep.subr.bf16.mxu0 %v992
        %2267 = vmatpush1.bf16.msra.mxu0 %v991
        %2268 = vmatprep.subr.bf16.mxu0 %v994
        %2269 = vmatpush1.bf16.msra.mxu0 %v993
        %2270 = vmatprep.subr.bf16.mxu0 %v996
        %2271 = vmatpush1.bf16.msra.mxu0 %v995
        %2272 = vmatprep.subr.bf16.mxu0 %v998
        %2273 = vmatpush1.bf16.msra.mxu0 %v997
        %2274 = vmatprep.subr.bf16.mxu0 %v1000
        %2275 = vmatpush1.bf16.msra.mxu0 %v999
        %2276 = vmatprep.subr.bf16.mxu0 %v1002
        %2277 = vmatpush1.bf16.msra.mxu0 %v1001
        %2278 = vmatprep.subr.bf16.mxu0 %v1004
        %2279 = vmatpush1.bf16.msra.mxu0 %v1003
        %2280 = vmatprep.subr.bf16.mxu0 %v1006
        %2281 = vmatpush1.bf16.msra.mxu0 %v1005
        %2282 = vmatprep.subr.bf16.mxu0 %v1008
        %2283 = vmatpush1.bf16.msra.mxu0 %v1007
        %2284 = vmatprep.subr.bf16.mxu0 %v1010
        %2285 = vmatpush1.bf16.msra.mxu0 %v1009
        %2286 = vmatprep.subr.bf16.mxu0 %v1012
        %2287 = vmatpush1.bf16.msra.mxu0 %v1011
        %2288 = vmatprep.subr.bf16.mxu0 %v1014
        %2289 = vmatpush1.bf16.msra.mxu0 %v1013
        %2290 = vmatprep.subr.bf16.mxu0 %v1016
        %2291 = vmatpush1.bf16.msra.mxu0 %v1015
        %2292 = vmatprep.subr.bf16.mxu0 %v1018
        %2293 = vmatpush1.bf16.msra.mxu0 %v1017
        %2294 = vmatprep.mubr.bf16.mxu0 %v2259
        %2295 = vmatmul.mubr.bf16.gmra.mrb[0].mxu0 %v2258
        %v2296 = vpop.f32.mrb[0].mxu0
        %v2297 = vadd.f32 1e-05, %v2296
        %v2298 = vpop.f32.mrb[0].mxu0
        %v2299 = vadd.f32 1e-05, %v2298
        %v2300 = vpop.f32.mrb[0].mxu0
        %v2301 = vadd.f32 1e-05, %v2300
        %v2302 = vpop.f32.mrb[0].mxu0
        %v2303 = vadd.f32 1e-05, %v2302
        %2304 = vmatprep.mubr.bf16.mxu0 %v2261
        %2305 = vmatmul.mubr.bf16.gmra.mrb[0].mxu0 %v2260
        %v2306 = vpop.f32.mrb[0].mxu0
        %v2307 = vadd.f32 1e-05, %v2306
        %v2308 = vpop.f32.mrb[0].mxu0
        %v2309 = vadd.f32 1e-05, %v2308
        %v2310 = vpop.f32.mrb[0].mxu0
        %v2311 = vpop.f32.mrb[0].mxu0
        %2312 = vdwg.mxu0
        %v2313 = vrsqrt.pop %v2297
        %v2314 = vrsqrt.pop %v2299
        %v2315 = vrsqrt.pop %v2301
        %v2316 = vrsqrt.pop %v2303
        %v2317 = vrsqrt.pop %v2307
        %v2318 = vrsqrt.pop %v2309
        %v2319 = vmul.f32 %v2246, %v2313
        %v2320 = vmul.f32 %v2247, %v2314
        %v2321 = vmul.f32 %v2248, %v2315
        %v2322 = vmul.f32 %v2249, %v2316
        %v2323 = vmul.f32 %v2250, %v2317
        %v2324 = vmul.f32 %v2251, %v2318
        %v2326 = vlaneseq
        %v2327 = vshrl.u32 %v2326, 7
        %v2328 = vsub.s32 0, %v2327
        %v2329 = vrot.slane %v591, %v2328
        %v2330 = vlaneseq
        %v2331 = vshrl.u32 %v2330, 7
        %v2332 = vsub.s32 1, %v2331
        %v2333 = vrot.slane %v591, %v2332
        %v2336 = vmul.f32 %v2319, %v2329
        %v2337 = vmul.f32 %v2320, %v2333
        %v2338 = vmul.f32 %v2321, %v2329
        %v2339 = vmul.f32 %v2322, %v2333
        %v2340 = vmul.f32 %v2323, %v2329
        %v2341 = vmul.f32 %v2324, %v2333
        %v2343 = vlaneseq
        %v2344 = vshrl.u32 %v2343, 7
        %v2345 = vsub.s32 0, %v2344
        %v2346 = vrot.slane %v593, %v2345
        %v2347 = vlaneseq
        %v2348 = vshrl.u32 %v2347, 7
        %v2349 = vsub.s32 1, %v2348
        %v2350 = vrot.slane %v593, %v2349
        %v2353 = vadd.f32 %v2336, %v2346
        %v2354 = vadd.f32 %v2337, %v2350
        %v2355 = vadd.f32 %v2338, %v2346
        %v2356 = vadd.f32 %v2339, %v2350
        %v2357 = vadd.f32 %v2340, %v2346
        %v2358 = vadd.f32 %v2341, %v2350
        %v2359 = vmax.f32 %v2353, 0.0
        %v2360 = vmax.f32 %v2354, 0.0
        %v2361 = vmax.f32 %v2355, 0.0
        %v2362 = vmax.f32 %v2356, 0.0
        %v2363 = vmax.f32 %v2357, 0.0
        %v2364 = vmax.f32 %v2358, 0.0
        %v2365 = vpack.c.bf16 %v2361, %v2359
        %v2366 = vpack.c.bf16 %v2362, %v2360
        %v2367 = vpack.c.bf16 %v2363, %v2363
        %v2368 = vpack.c.bf16 %v2364, %v2364
        %v2369 = vld [vmem:[#allocation7] sm:$0xff]
        %v2370 = vld [vmem:[#allocation7 + $0x8] sm:$0xff]
        %v2371 = vld [vmem:[#allocation7 + $0x10] sm:$0xff]
        %v2372 = vld [vmem:[#allocation7 + $0x18] sm:$0xff]
        %v2373 = vld [vmem:[#allocation7 + $0x20] sm:$0xff]
        %v2374 = vld [vmem:[#allocation7 + $0x28] sm:$0xff]
        %v2375 = vld [vmem:[#allocation7 + $0x30] sm:$0xff]
        %v2376 = vld [vmem:[#allocation7 + $0x38] sm:$0xff]
        %v2377 = vld [vmem:[#allocation7 + $0x40] sm:$0xff]
        %v2378 = vld [vmem:[#allocation7 + $0x48] sm:$0xff]
        %v2379 = vld [vmem:[#allocation7 + $0x50] sm:$0xff]
        %v2380 = vld [vmem:[#allocation7 + $0x58] sm:$0xff]
        %v2381 = vld [vmem:[#allocation7 + $0x60] sm:$0xff]
        %v2382 = vld [vmem:[#allocation7 + $0x68] sm:$0xff]
        %v2383 = vld [vmem:[#allocation7 + $0x70] sm:$0xff]
        %v2384 = vld [vmem:[#allocation7 + $0x78] sm:$0xff]
        %v2385 = vld [vmem:[#allocation7 + $0x80] sm:$0xff]
        %v2386 = vld [vmem:[#allocation7 + $0x88] sm:$0xff]
        %v2387 = vld [vmem:[#allocation7 + $0x90] sm:$0xff]
        %v2388 = vld [vmem:[#allocation7 + $0x98] sm:$0xff]
        %v2389 = vld [vmem:[#allocation7 + $0xa0] sm:$0xff]
        %v2390 = vld [vmem:[#allocation7 + $0xa8] sm:$0xff]
        %v2391 = vld [vmem:[#allocation7 + $0xb0] sm:$0xff]
        %v2392 = vld [vmem:[#allocation7 + $0xb8] sm:$0xff]
        %v2393 = vld [vmem:[#allocation7 + $0xc0] sm:$0xff]
        %v2394 = vld [vmem:[#allocation7 + $0xc8] sm:$0xff]
        %v2395 = vld [vmem:[#allocation7 + $0xd0] sm:$0xff]
        %v2396 = vld [vmem:[#allocation7 + $0xd8] sm:$0xff]
        %v2397 = vld [vmem:[#allocation7 + $0xe0] sm:$0xff]
        %v2398 = vld [vmem:[#allocation7 + $0xe8] sm:$0xff]
        %v2399 = vld [vmem:[#allocation7 + $0xf0] sm:$0xff]
        %v2400 = vld [vmem:[#allocation7 + $0xf8] sm:$0xff]
        %v2402 = vlaneseq
        %v2403 = vshrl.u32 %v2402, 7
        %v2404 = vsub.s32 0, %v2403
        %v2405 = vrot.slane %v595, %v2404
        %v2406 = vlaneseq
        %v2407 = vshrl.u32 %v2406, 7
        %v2408 = vsub.s32 1, %v2407
        %v2409 = vrot.slane %v595, %v2408
        %v2444 = vunpack.c.l.b16 %v2369
        %v2445 = vunpack.c.h.b16 %v2369
        %v2446 = vunpack.c.l.b16 %v2370
        %v2447 = vunpack.c.h.b16 %v2370
        %v2448 = vunpack.c.l.b16 %v2371
        %v2449 = vunpack.c.h.b16 %v2371
        %v2450 = vunpack.c.l.b16 %v2372
        %v2451 = vunpack.c.h.b16 %v2372
        %v2452 = vunpack.c.l.b16 %v2373
        %v2453 = vunpack.c.h.b16 %v2373
        %v2454 = vunpack.c.l.b16 %v2374
        %v2455 = vunpack.c.h.b16 %v2374
        %v2456 = vunpack.c.l.b16 %v2375
        %v2457 = vunpack.c.h.b16 %v2375
        %v2458 = vunpack.c.l.b16 %v2376
        %v2459 = vunpack.c.h.b16 %v2376
        %v2460 = vunpack.c.l.b16 %v2377
        %v2461 = vunpack.c.h.b16 %v2377
        %v2462 = vunpack.c.l.b16 %v2378
        %v2463 = vunpack.c.h.b16 %v2378
        %v2464 = vunpack.c.l.b16 %v2379
        %v2465 = vunpack.c.h.b16 %v2379
        %v2466 = vunpack.c.l.b16 %v2380
        %v2467 = vunpack.c.h.b16 %v2380
        %v2468 = vunpack.c.l.b16 %v2381
        %v2469 = vunpack.c.h.b16 %v2381
        %v2470 = vunpack.c.l.b16 %v2382
        %v2471 = vunpack.c.h.b16 %v2382
        %v2472 = vunpack.c.l.b16 %v2383
        %v2473 = vunpack.c.h.b16 %v2383
        %v2474 = vunpack.c.l.b16 %v2384
        %v2475 = vunpack.c.h.b16 %v2384
        %v2476 = vunpack.c.l.b16 %v2385
        %v2477 = vunpack.c.h.b16 %v2385
        %v2478 = vunpack.c.l.b16 %v2386
        %v2479 = vunpack.c.h.b16 %v2386
        %v2480 = vunpack.c.l.b16 %v2387
        %v2481 = vunpack.c.h.b16 %v2387
        %v2482 = vunpack.c.l.b16 %v2388
        %v2483 = vunpack.c.h.b16 %v2388
        %v2484 = vunpack.c.l.b16 %v2389
        %v2485 = vunpack.c.h.b16 %v2389
        %v2486 = vunpack.c.l.b16 %v2390
        %v2487 = vunpack.c.h.b16 %v2390
        %v2488 = vunpack.c.l.b16 %v2391
        %v2489 = vunpack.c.h.b16 %v2391
        %v2490 = vunpack.c.l.b16 %v2392
        %v2491 = vunpack.c.h.b16 %v2392
        %v2492 = vunpack.c.l.b16 %v2393
        %v2493 = vunpack.c.h.b16 %v2393
        %v2494 = vunpack.c.l.b16 %v2394
        %v2495 = vunpack.c.h.b16 %v2394
        %v2496 = vunpack.c.l.b16 %v2395
        %v2497 = vunpack.c.h.b16 %v2395
        %v2498 = vunpack.c.l.b16 %v2396
        %v2499 = vunpack.c.h.b16 %v2396
        %v2500 = vunpack.c.l.b16 %v2397
        %v2501 = vunpack.c.h.b16 %v2397
        %v2502 = vunpack.c.l.b16 %v2398
        %v2503 = vunpack.c.h.b16 %v2398
        %v2504 = vunpack.c.l.b16 %v2399
        %v2505 = vunpack.c.h.b16 %v2399
        %v2506 = vunpack.c.l.b16 %v2400
        %v2507 = vunpack.c.h.b16 %v2400
        %v2508 = vpack.c.b16 %v2446, %v2444
        %v2509 = vpack.c.b16 %v2447, %v2445
        %v2510 = vpack.c.b16 %v2450, %v2448
        %v2511 = vpack.c.b16 %v2451, %v2449
        %v2512 = vpack.c.b16 %v2454, %v2452
        %v2513 = vpack.c.b16 %v2455, %v2453
        %v2514 = vpack.c.b16 %v2458, %v2456
        %v2515 = vpack.c.b16 %v2459, %v2457
        %v2516 = vpack.c.b16 %v2462, %v2460
        %v2517 = vpack.c.b16 %v2463, %v2461
        %v2518 = vpack.c.b16 %v2466, %v2464
        %v2519 = vpack.c.b16 %v2467, %v2465
        %v2520 = vpack.c.b16 %v2470, %v2468
        %v2521 = vpack.c.b16 %v2471, %v2469
        %v2522 = vpack.c.b16 %v2474, %v2472
        %v2523 = vpack.c.b16 %v2475, %v2473
        %v2524 = vpack.c.b16 %v2478, %v2476
        %v2525 = vpack.c.b16 %v2479, %v2477
        %v2526 = vpack.c.b16 %v2482, %v2480
        %v2527 = vpack.c.b16 %v2483, %v2481
        %v2528 = vpack.c.b16 %v2486, %v2484
        %v2529 = vpack.c.b16 %v2487, %v2485
        %v2530 = vpack.c.b16 %v2490, %v2488
        %v2531 = vpack.c.b16 %v2491, %v2489
        %v2532 = vpack.c.b16 %v2494, %v2492
        %v2533 = vpack.c.b16 %v2495, %v2493
        %v2534 = vpack.c.b16 %v2498, %v2496
        %v2535 = vpack.c.b16 %v2499, %v2497
        %v2536 = vpack.c.b16 %v2502, %v2500
        %v2537 = vpack.c.b16 %v2503, %v2501
        %v2538 = vpack.c.b16 %v2506, %v2504
        %v2539 = vpack.c.b16 %v2507, %v2505
        %2572 = vmatprep.subr.bf16.mxu0 %v2509
        %2573 = vmatpush1.bf16.msra.mxu0 %v2508
        %2574 = vmatprep.subr.bf16.mxu0 %v2511
        %2575 = vmatpush1.bf16.msra.mxu0 %v2510
        %2576 = vmatprep.subr.bf16.mxu0 %v2513
        %2577 = vmatpush1.bf16.msra.mxu0 %v2512
        %2578 = vmatprep.subr.bf16.mxu0 %v2515
        %2579 = vmatpush1.bf16.msra.mxu0 %v2514
        %2580 = vmatprep.subr.bf16.mxu0 %v2517
        %2581 = vmatpush1.bf16.msra.mxu0 %v2516
        %2582 = vmatprep.subr.bf16.mxu0 %v2519
        %2583 = vmatpush1.bf16.msra.mxu0 %v2518
        %2584 = vmatprep.subr.bf16.mxu0 %v2521
        %2585 = vmatpush1.bf16.msra.mxu0 %v2520
        %2586 = vmatprep.subr.bf16.mxu0 %v2523
        %2587 = vmatpush1.bf16.msra.mxu0 %v2522
        %2588 = vmatprep.subr.bf16.mxu0 %v2525
        %2589 = vmatpush1.bf16.msra.mxu0 %v2524
        %2590 = vmatprep.subr.bf16.mxu0 %v2527
        %2591 = vmatpush1.bf16.msra.mxu0 %v2526
        %2592 = vmatprep.subr.bf16.mxu0 %v2529
        %2593 = vmatpush1.bf16.msra.mxu0 %v2528
        %2594 = vmatprep.subr.bf16.mxu0 %v2531
        %2595 = vmatpush1.bf16.msra.mxu0 %v2530
        %2596 = vmatprep.subr.bf16.mxu0 %v2533
        %2597 = vmatpush1.bf16.msra.mxu0 %v2532
        %2598 = vmatprep.subr.bf16.mxu0 %v2535
        %2599 = vmatpush1.bf16.msra.mxu0 %v2534
        %2600 = vmatprep.subr.bf16.mxu0 %v2537
        %2601 = vmatpush1.bf16.msra.mxu0 %v2536
        %2602 = vmatprep.subr.bf16.mxu0 %v2539
        %2603 = vmatpush1.bf16.msra.mxu0 %v2538
        %2604 = vmatprep.mubr.bf16.mxu0 %v2366
        %2605 = vmatmul.mubr.bf16.gmra.mrb[0].mxu0 %v2365
        %v2606 = vpop.f32.mrb[0].mxu0
        %v2607 = vadd.f32 %v2405, %v2606
        %v2608 = vpop.f32.mrb[0].mxu0
        %v2609 = vadd.f32 %v2409, %v2608
        %v2610 = vpop.f32.mrb[0].mxu0
        %v2611 = vadd.f32 %v2405, %v2610
        %v2612 = vpop.f32.mrb[0].mxu0
        %v2613 = vadd.f32 %v2409, %v2612
        %2614 = vmatprep.mubr.bf16.mxu0 %v2368
        %2615 = vmatmul.mubr.bf16.gmra.mrb[0].mxu0 %v2367
        %v2616 = vpop.f32.mrb[0].mxu0
        %v2617 = vadd.f32 %v2405, %v2616
        %v2618 = vpop.f32.mrb[0].mxu0
        %v2619 = vadd.f32 %v2409, %v2618
        %v2620 = vpop.f32.mrb[0].mxu0
        %v2621 = vpop.f32.mrb[0].mxu0
        %2622 = vdwg.mxu0
        %v2623 = vpack.c.bf16 %v2611, %v2607
        %v2624 = vpack.c.bf16 %v2613, %v2609
        %v2625 = vpack.c.bf16 %v2617, %v2617
        %v2626 = vpack.c.bf16 %v2619, %v2619
        %2627 = vmatprep.subr.bf16.mxu0 %v988
        %2628 = vmatpush1.bf16.msra.mxu0 %v987
        %2629 = vmatprep.subr.bf16.mxu0 %v990
        %2630 = vmatpush1.bf16.msra.mxu0 %v989
        %2631 = vmatprep.subr.bf16.mxu0 %v992
        %2632 = vmatpush1.bf16.msra.mxu0 %v991
        %2633 = vmatprep.subr.bf16.mxu0 %v994
        %2634 = vmatpush1.bf16.msra.mxu0 %v993
        %2635 = vmatprep.subr.bf16.mxu0 %v996
        %2636 = vmatpush1.bf16.msra.mxu0 %v995
        %2637 = vmatprep.subr.bf16.mxu0 %v998
        %2638 = vmatpush1.bf16.msra.mxu0 %v997
        %2639 = vmatprep.subr.bf16.mxu0 %v1000
        %2640 = vmatpush1.bf16.msra.mxu0 %v999
        %2641 = vmatprep.subr.bf16.mxu0 %v1002
        %2642 = vmatpush1.bf16.msra.mxu0 %v1001
        %2643 = vmatprep.subr.bf16.mxu0 %v1004
        %2644 = vmatpush1.bf16.msra.mxu0 %v1003
        %2645 = vmatprep.subr.bf16.mxu0 %v1006
        %2646 = vmatpush1.bf16.msra.mxu0 %v1005
        %2647 = vmatprep.subr.bf16.mxu0 %v1008
        %2648 = vmatpush1.bf16.msra.mxu0 %v1007
        %2649 = vmatprep.subr.bf16.mxu0 %v1010
        %2650 = vmatpush1.bf16.msra.mxu0 %v1009
        %2651 = vmatprep.subr.bf16.mxu0 %v1012
        %2652 = vmatpush1.bf16.msra.mxu0 %v1011
        %2653 = vmatprep.subr.bf16.mxu0 %v1014
        %2654 = vmatpush1.bf16.msra.mxu0 %v1013
        %2655 = vmatprep.subr.bf16.mxu0 %v1016
        %2656 = vmatpush1.bf16.msra.mxu0 %v1015
        %2657 = vmatprep.subr.bf16.mxu0 %v1018
        %2658 = vmatpush1.bf16.msra.mxu0 %v1017
        %2659 = vmatprep.mubr.bf16.mxu0 %v2624
        %2660 = vmatmul.mubr.bf16.gmra.mrb[0].mxu0 %v2623
        %v2661 = vpop.f32.mrb[0].mxu0
        %v2662 = vadd.f32 0.0, %v2661
        %v2663 = vpop.f32.mrb[0].mxu0
        %v2664 = vadd.f32 0.0, %v2663
        %v2665 = vpop.f32.mrb[0].mxu0
        %v2666 = vadd.f32 0.0, %v2665
        %v2667 = vpop.f32.mrb[0].mxu0
        %v2668 = vadd.f32 0.0, %v2667
        %2669 = vmatprep.mubr.bf16.mxu0 %v2626
        %2670 = vmatmul.mubr.bf16.gmra.mrb[0].mxu0 %v2625
        %v2671 = vpop.f32.mrb[0].mxu0
        %v2672 = vadd.f32 0.0, %v2671
        %v2673 = vpop.f32.mrb[0].mxu0
        %v2674 = vadd.f32 0.0, %v2673
        %v2675 = vpop.f32.mrb[0].mxu0
        %v2676 = vpop.f32.mrb[0].mxu0
        %2677 = vdwg.mxu0
        %v2678 = vsub.f32 %v2607, %v2662
        %v2679 = vsub.f32 %v2609, %v2664
        %v2680 = vsub.f32 %v2611, %v2666
        %v2681 = vsub.f32 %v2613, %v2668
        %v2682 = vsub.f32 %v2617, %v2672
        %v2683 = vsub.f32 %v2619, %v2674
        %v2684 = vmul.f32 %v2678, %v2678
        %v2685 = vmul.f32 %v2679, %v2679
        %v2686 = vmul.f32 %v2680, %v2680
        %v2687 = vmul.f32 %v2681, %v2681
        %v2688 = vmul.f32 %v2682, %v2682
        %v2689 = vmul.f32 %v2683, %v2683
        %v2690 = vpack.c.bf16 %v2686, %v2684
        %v2691 = vpack.c.bf16 %v2687, %v2685
        %v2692 = vpack.c.bf16 %v2688, %v2688
        %v2693 = vpack.c.bf16 %v2689, %v2689
        %2694 = vmatprep.subr.bf16.mxu0 %v988
        %2695 = vmatpush1.bf16.msra.mxu0 %v987
        %2696 = vmatprep.subr.bf16.mxu0 %v990
        %2697 = vmatpush1.bf16.msra.mxu0 %v989
        %2698 = vmatprep.subr.bf16.mxu0 %v992
        %2699 = vmatpush1.bf16.msra.mxu0 %v991
        %2700 = vmatprep.subr.bf16.mxu0 %v994
        %2701 = vmatpush1.bf16.msra.mxu0 %v993
        %2702 = vmatprep.subr.bf16.mxu0 %v996
        %2703 = vmatpush1.bf16.msra.mxu0 %v995
        %2704 = vmatprep.subr.bf16.mxu0 %v998
        %2705 = vmatpush1.bf16.msra.mxu0 %v997
        %2706 = vmatprep.subr.bf16.mxu0 %v1000
        %2707 = vmatpush1.bf16.msra.mxu0 %v999
        %2708 = vmatprep.subr.bf16.mxu0 %v1002
        %2709 = vmatpush1.bf16.msra.mxu0 %v1001
        %2710 = vmatprep.subr.bf16.mxu0 %v1004
        %2711 = vmatpush1.bf16.msra.mxu0 %v1003
        %2712 = vmatprep.subr.bf16.mxu0 %v1006
        %2713 = vmatpush1.bf16.msra.mxu0 %v1005
        %2714 = vmatprep.subr.bf16.mxu0 %v1008
        %2715 = vmatpush1.bf16.msra.mxu0 %v1007
        %2716 = vmatprep.subr.bf16.mxu0 %v1010
        %2717 = vmatpush1.bf16.msra.mxu0 %v1009
        %2718 = vmatprep.subr.bf16.mxu0 %v1012
        %2719 = vmatpush1.bf16.msra.mxu0 %v1011
        %2720 = vmatprep.subr.bf16.mxu0 %v1014
        %2721 = vmatpush1.bf16.msra.mxu0 %v1013
        %2722 = vmatprep.subr.bf16.mxu0 %v1016
        %2723 = vmatpush1.bf16.msra.mxu0 %v1015
        %2724 = vmatprep.subr.bf16.mxu0 %v1018
        %2725 = vmatpush1.bf16.msra.mxu0 %v1017
        %2726 = vmatprep.mubr.bf16.mxu0 %v2691
        %2727 = vmatmul.mubr.bf16.gmra.mrb[0].mxu0 %v2690
        %v2728 = vpop.f32.mrb[0].mxu0
        %v2729 = vadd.f32 1e-05, %v2728
        %v2730 = vpop.f32.mrb[0].mxu0
        %v2731 = vadd.f32 1e-05, %v2730
        %v2732 = vpop.f32.mrb[0].mxu0
        %v2733 = vadd.f32 1e-05, %v2732
        %v2734 = vpop.f32.mrb[0].mxu0
        %v2735 = vadd.f32 1e-05, %v2734
        %2736 = vmatprep.mubr.bf16.mxu0 %v2693
        %2737 = vmatmul.mubr.bf16.gmra.mrb[0].mxu0 %v2692
        %v2738 = vpop.f32.mrb[0].mxu0
        %v2739 = vadd.f32 1e-05, %v2738
        %v2740 = vpop.f32.mrb[0].mxu0
        %v2741 = vadd.f32 1e-05, %v2740
        %v2742 = vpop.f32.mrb[0].mxu0
        %v2743 = vpop.f32.mrb[0].mxu0
        %2744 = vdwg.mxu0
        %v2745 = vrsqrt.pop %v2729
        %v2746 = vrsqrt.pop %v2731
        %v2747 = vrsqrt.pop %v2733
        %v2748 = vrsqrt.pop %v2735
        %v2749 = vrsqrt.pop %v2739
        %v2750 = vrsqrt.pop %v2741
        %v2751 = vmul.f32 %v2678, %v2745
        %v2752 = vmul.f32 %v2679, %v2746
        %v2753 = vmul.f32 %v2680, %v2747
        %v2754 = vmul.f32 %v2681, %v2748
        %v2755 = vmul.f32 %v2682, %v2749
        %v2756 = vmul.f32 %v2683, %v2750
        %v2758 = vlaneseq
        %v2759 = vshrl.u32 %v2758, 7
        %v2760 = vsub.s32 0, %v2759
        %v2761 = vrot.slane %v597, %v2760
        %v2762 = vlaneseq
        %v2763 = vshrl.u32 %v2762, 7
        %v2764 = vsub.s32 1, %v2763
        %v2765 = vrot.slane %v597, %v2764
        %v2768 = vmul.f32 %v2751, %v2761
        %v2769 = vmul.f32 %v2752, %v2765
        %v2770 = vmul.f32 %v2753, %v2761
        %v2771 = vmul.f32 %v2754, %v2765
        %v2772 = vmul.f32 %v2755, %v2761
        %v2773 = vmul.f32 %v2756, %v2765
        %v2775 = vlaneseq
        %v2776 = vshrl.u32 %v2775, 7
        %v2777 = vsub.s32 0, %v2776
        %v2778 = vrot.slane %v599, %v2777
        %v2779 = vlaneseq
        %v2780 = vshrl.u32 %v2779, 7
        %v2781 = vsub.s32 1, %v2780
        %v2782 = vrot.slane %v599, %v2781
        %v2785 = vadd.f32 %v2768, %v2778
        %v2786 = vadd.f32 %v2769, %v2782
        %v2787 = vadd.f32 %v2770, %v2778
        %v2788 = vadd.f32 %v2771, %v2782
        %v2789 = vadd.f32 %v2772, %v2778
        %v2790 = vadd.f32 %v2773, %v2782
        %v2791 = vmax.f32 %v2785, 0.0
        %v2792 = vmax.f32 %v2786, 0.0
        %v2793 = vmax.f32 %v2787, 0.0
        %v2794 = vmax.f32 %v2788, 0.0
        %v2795 = vmax.f32 %v2789, 0.0
        %v2796 = vmax.f32 %v2790, 0.0
        %v2797 = vmul.f32 %v2791, %v700
        %v2798 = vmul.f32 %v2792, %v702
        %v2799 = vmul.f32 %v2793, %v704
        %v2800 = vmul.f32 %v2794, %v706
        %v2801 = vmul.f32 %v2795, %v710
        %v2802 = vmul.f32 %v2796, %v712
        %v2803 = vmax.f32 %v2797, %v2798
        %v2804 = vmax.f32 %v2799, %v2800
        %v2805 = vmax.f32 %v2801, %v2802
        %2806 = vrot.lane.b32.xlu0 %v2803, 64
        %v2807 = vpop.permute.xlu0 %2806
        %2808 = vrot.lane.b32.xlu0 %v2804, 64
        %v2809 = vpop.permute.xlu0 %2808
        %2810 = vrot.lane.b32.xlu0 %v2805, 64
        %v2811 = vpop.permute.xlu0 %2810
        %v2812 = vmax.f32 %v2803, %v2807
        %v2813 = vmax.f32 %v2804, %v2809
        %v2814 = vmax.f32 %v2805, %v2811
        %2815 = vrot.lane.b32.xlu0 %v2812, 32
        %v2816 = vpop.permute.xlu0 %2815
        %2817 = vrot.lane.b32.xlu0 %v2813, 32
        %v2818 = vpop.permute.xlu0 %2817
        %2819 = vrot.lane.b32.xlu0 %v2814, 32
        %v2820 = vpop.permute.xlu0 %2819
        %v2821 = vmax.f32 %v2812, %v2816
        %v2822 = vmax.f32 %v2813, %v2818
        %v2823 = vmax.f32 %v2814, %v2820
        %v2824 = vpack.c.bf16 %v2822, %v2821
        %v2825 = vpack.c.bf16 %v2823, %v2823
        %v2826 = vld [vmem:[%s8] sm:$0xf]
        %v2827 = vld [vmem:[%s8 + $0x4] sm:$0xf]
        %v2828 = vld [vmem:[%s8 + $0x8] sm:$0xf]
        %v2829 = vld [vmem:[%s8 + $0xc] sm:$0xf]
        %v2830 = vld [vmem:[%s8 + $0x10] sm:$0xf]
        %v2831 = vld [vmem:[%s8 + $0x14] sm:$0xf]
        %v2832 = vld [vmem:[%s8 + $0x18] sm:$0xf]
        %v2833 = vld [vmem:[%s8 + $0x1c] sm:$0xf]
        %v2834 = vld [vmem:[%s8 + $0x20] sm:$0xf]
        %v2835 = vld [vmem:[%s8 + $0x24] sm:$0xf]
        %v2836 = vld [vmem:[%s8 + $0x28] sm:$0xf]
        %v2837 = vld [vmem:[%s8 + $0x2c] sm:$0xf]
        %v2838 = vld [vmem:[%s8 + $0x30] sm:$0xf]
        %v2839 = vld [vmem:[%s8 + $0x34] sm:$0xf]
        %v2840 = vld [vmem:[%s8 + $0x38] sm:$0xf]
        %v2841 = vld [vmem:[%s8 + $0x3c] sm:$0xf]
        %v2842 = vld [vmem:[%s8 + $0x40] sm:$0xf]
        %v2843 = vld [vmem:[%s8 + $0x44] sm:$0xf]
        %v2844 = vld [vmem:[%s8 + $0x48] sm:$0xf]
        %v2845 = vld [vmem:[%s8 + $0x4c] sm:$0xf]
        %v2846 = vld [vmem:[%s8 + $0x50] sm:$0xf]
        %v2847 = vld [vmem:[%s8 + $0x54] sm:$0xf]
        %v2848 = vld [vmem:[%s8 + $0x58] sm:$0xf]
        %v2849 = vld [vmem:[%s8 + $0x5c] sm:$0xf]
        %v2850 = vld [vmem:[%s8 + $0x60] sm:$0xf]
        %v2851 = vld [vmem:[%s8 + $0x64] sm:$0xf]
        %v2852 = vld [vmem:[%s8 + $0x68] sm:$0xf]
        %v2853 = vld [vmem:[%s8 + $0x6c] sm:$0xf]
        %v2854 = vld [vmem:[%s8 + $0x70] sm:$0xf]
        %v2855 = vld [vmem:[%s8 + $0x74] sm:$0xf]
        %v2856 = vld [vmem:[%s8 + $0x78] sm:$0xf]
        %v2857 = vld [vmem:[%s8 + $0x7c] sm:$0xf]
        %v2890 = vunpack.c.l.b16 %v2826
        %v2891 = vunpack.c.l.b16 %v2827
        %v2892 = vunpack.c.l.b16 %v2828
        %v2893 = vunpack.c.l.b16 %v2829
        %v2894 = vunpack.c.l.b16 %v2830
        %v2895 = vunpack.c.l.b16 %v2831
        %v2896 = vunpack.c.l.b16 %v2832
        %v2897 = vunpack.c.l.b16 %v2833
        %v2898 = vunpack.c.l.b16 %v2834
        %v2899 = vunpack.c.l.b16 %v2835
        %v2900 = vunpack.c.l.b16 %v2836
        %v2901 = vunpack.c.l.b16 %v2837
        %v2902 = vunpack.c.l.b16 %v2838
        %v2903 = vunpack.c.l.b16 %v2839
        %v2904 = vunpack.c.l.b16 %v2840
        %v2905 = vunpack.c.l.b16 %v2841
        %v2906 = vunpack.c.l.b16 %v2842
        %v2907 = vunpack.c.l.b16 %v2843
        %v2908 = vunpack.c.l.b16 %v2844
        %v2909 = vunpack.c.l.b16 %v2845
        %v2910 = vunpack.c.l.b16 %v2846
        %v2911 = vunpack.c.l.b16 %v2847
        %v2912 = vunpack.c.l.b16 %v2848
        %v2913 = vunpack.c.l.b16 %v2849
        %v2914 = vunpack.c.l.b16 %v2850
        %v2915 = vunpack.c.l.b16 %v2851
        %v2916 = vunpack.c.l.b16 %v2852
        %v2917 = vunpack.c.l.b16 %v2853
        %v2918 = vunpack.c.l.b16 %v2854
        %v2919 = vunpack.c.l.b16 %v2855
        %v2920 = vunpack.c.l.b16 %v2856
        %v2921 = vunpack.c.l.b16 %v2857
        %v2922 = vpack.c.b16 %v2891, %v2890
        %v2923 = vpack.c.b16 %v2893, %v2892
        %v2924 = vpack.c.b16 %v2895, %v2894
        %v2925 = vpack.c.b16 %v2897, %v2896
        %v2926 = vpack.c.b16 %v2899, %v2898
        %v2927 = vpack.c.b16 %v2901, %v2900
        %v2928 = vpack.c.b16 %v2903, %v2902
        %v2929 = vpack.c.b16 %v2905, %v2904
        %v2930 = vpack.c.b16 %v2907, %v2906
        %v2931 = vpack.c.b16 %v2909, %v2908
        %v2932 = vpack.c.b16 %v2911, %v2910
        %v2933 = vpack.c.b16 %v2913, %v2912
        %v2934 = vpack.c.b16 %v2915, %v2914
        %v2935 = vpack.c.b16 %v2917, %v2916
        %v2936 = vpack.c.b16 %v2919, %v2918
        %v2937 = vpack.c.b16 %v2921, %v2920
        %2954 = vmatprep.subr.bf16.mxu0 0
        %2955 = vmatpush1.bf16.msra.mxu0 %v2922
        %2956 = vmatprep.subr.bf16.mxu0 0
        %2957 = vmatpush1.bf16.msra.mxu0 %v2923
        %2958 = vmatprep.subr.bf16.mxu0 0
        %2959 = vmatpush1.bf16.msra.mxu0 %v2924
        %2960 = vmatprep.subr.bf16.mxu0 0
        %2961 = vmatpush1.bf16.msra.mxu0 %v2925
        %2962 = vmatprep.subr.bf16.mxu0 0
        %2963 = vmatpush1.bf16.msra.mxu0 %v2926
        %2964 = vmatprep.subr.bf16.mxu0 0
        %2965 = vmatpush1.bf16.msra.mxu0 %v2927
        %2966 = vmatprep.subr.bf16.mxu0 0
        %2967 = vmatpush1.bf16.msra.mxu0 %v2928
        %2968 = vmatprep.subr.bf16.mxu0 0
        %2969 = vmatpush1.bf16.msra.mxu0 %v2929
        %2970 = vmatprep.subr.bf16.mxu0 0
        %2971 = vmatpush1.bf16.msra.mxu0 %v2930
        %2972 = vmatprep.subr.bf16.mxu0 0
        %2973 = vmatpush1.bf16.msra.mxu0 %v2931
        %2974 = vmatprep.subr.bf16.mxu0 0
        %2975 = vmatpush1.bf16.msra.mxu0 %v2932
        %2976 = vmatprep.subr.bf16.mxu0 0
        %2977 = vmatpush1.bf16.msra.mxu0 %v2933
        %2978 = vmatprep.subr.bf16.mxu0 0
        %2979 = vmatpush1.bf16.msra.mxu0 %v2934
        %2980 = vmatprep.subr.bf16.mxu0 0
        %2981 = vmatpush1.bf16.msra.mxu0 %v2935
        %2982 = vmatprep.subr.bf16.mxu0 0
        %2983 = vmatpush1.bf16.msra.mxu0 %v2936
        %2984 = vmatprep.subr.bf16.mxu0 0
        %2985 = vmatpush1.bf16.msra.mxu0 %v2937
        %2986 = vmatprep.mubr.bf16.mxu0 %v2824
        %2987 = vmatmul.mubr.bf16.gmra.mrb[0].mxu0 %v2824
        %v2988 = vpop.f32.mrb[0].mxu0
        %v2989 = vadd.f32 %v600, %v2988
        %v2990 = vpop.f32.mrb[0].mxu0
        %v2991 = vpop.f32.mrb[0].mxu0
        %v2992 = vadd.f32 %v600, %v2991
        %v2993 = vpop.f32.mrb[0].mxu0
        %2994 = vmatprep.mubr.bf16.mxu0 %v2825
        %2995 = vmatmul.mubr.bf16.gmra.mrb[0].mxu0 %v2825
        %v2996 = vpop.f32.mrb[0].mxu0
        %v2997 = vadd.f32 %v600, %v2996
        %v2998 = vpop.f32.mrb[0].mxu0
        %v2999 = vpop.f32.mrb[0].mxu0
        %v3000 = vpop.f32.mrb[0].mxu0
        %3001 = vdwg.mxu0
        %v3002 = vmax.f32 %v2989, 0.0
        %v3003 = vmax.f32 %v2992, 0.0
        %v3004 = vmax.f32 %v2997, 0.0
        %v3005 = vpack.c.bf16 %v3003, %v3002
        %v3006 = vpack.c.bf16 %v3004, %v3004
        %v3007 = vld [vmem:[#allocation9] sm:$0xf]
        %v3008 = vld [vmem:[#allocation9 + $0x4] sm:$0xf]
        %v3009 = vld [vmem:[#allocation9 + $0x8] sm:$0xf]
        %v3010 = vld [vmem:[#allocation9 + $0xc] sm:$0xf]
        %v3015 = vunpack.c.l.b16 %v3007
        %v3016 = vunpack.c.l.b16 %v3008
        %v3017 = vunpack.c.l.b16 %v3009
        %v3018 = vunpack.c.l.b16 %v3010
        %v3019 = vpack.c.b16 %v3016, %v3015
        %v3020 = vpack.c.b16 %v3018, %v3017
        %vm3023 = vcmask 261120
        %v3025 = vsel %vm3023, %v3005, 0
        %v3028 = vsel %vm3023, %v3006, 0
        %3030 = vmatprep.subr.bf16.mxu0 0
        %3031 = vmatpush1.bf16.msra.mxu0 %v3019
        %3032 = vmatprep.subr.bf16.mxu0 0
        %3033 = vmatpush1.bf16.msra.mxu0 %v3020
        %3034 = vmatprep.subr.bf16.mxu0 0
        %3035 = vmatpush1.bf16.msra.mxu0 0
        %3036 = vmatprep.subr.bf16.mxu0 0
        %3037 = vmatpush1.bf16.msra.mxu0 0
        %3038 = vmatprep.subr.bf16.mxu0 0
        %3039 = vmatpush1.bf16.msra.mxu0 0
        %3040 = vmatprep.subr.bf16.mxu0 0
        %3041 = vmatpush1.bf16.msra.mxu0 0
        %3042 = vmatprep.subr.bf16.mxu0 0
        %3043 = vmatpush1.bf16.msra.mxu0 0
        %3044 = vmatprep.subr.bf16.mxu0 0
        %3045 = vmatpush1.bf16.msra.mxu0 0
        %3046 = vmatprep.subr.bf16.mxu0 0
        %3047 = vmatpush1.bf16.msra.mxu0 0
        %3048 = vmatprep.subr.bf16.mxu0 0
        %3049 = vmatpush1.bf16.msra.mxu0 0
        %3050 = vmatprep.subr.bf16.mxu0 0
        %3051 = vmatpush1.bf16.msra.mxu0 0
        %3052 = vmatprep.subr.bf16.mxu0 0
        %3053 = vmatpush1.bf16.msra.mxu0 0
        %3054 = vmatprep.subr.bf16.mxu0 0
        %3055 = vmatpush1.bf16.msra.mxu0 0
        %3056 = vmatprep.subr.bf16.mxu0 0
        %3057 = vmatpush1.bf16.msra.mxu0 0
        %3058 = vmatprep.subr.bf16.mxu0 0
        %3059 = vmatpush1.bf16.msra.mxu0 0
        %3060 = vmatprep.subr.bf16.mxu0 0
        %3061 = vmatpush1.bf16.msra.mxu0 0
        %3062 = vmatprep.mubr.bf16.mxu0 0
        %3063 = vmatmul.mubr.bf16.gmra.mrb[0].mxu0 %v3025
        %v3064 = vpop.f32.mrb[0].mxu0
        %v3065 = vadd.f32 %v601, %v3064
        %v3066 = vpop.f32.mrb[0].mxu0
        %v3067 = vpop.f32.mrb[0].mxu0
        %v3068 = vadd.f32 %v601, %v3067
        %v3069 = vpop.f32.mrb[0].mxu0
        %3070 = vmatprep.mubr.bf16.mxu0 0
        %3071 = vmatmul.mubr.bf16.gmra.mrb[0].mxu0 %v3028
        %v3072 = vpop.f32.mrb[0].mxu0
        %v3073 = vadd.f32 %v601, %v3072
        %v3074 = vpop.f32.mrb[0].mxu0
        %v3075 = vpop.f32.mrb[0].mxu0
        %v3076 = vpop.f32.mrb[0].mxu0
        %3077 = vdwg.mxu0
        %v3078 = vld [vmem:[%s568] sm:$0xff]
        %v3079 = vld [vmem:[%s568 + $0x8] sm:$0xff]
        %v3080 = vld [vmem:[%s568 + $0x10] sm:$0xff]
        %3082 = vset.pattern.permute.xlu0 0
        %3083 = vperm.xlu0 %3082, %v3078
        %v3084 = vpop.permute.xlu0 %3083
        %3087 = vset.pattern.permute.xlu0 0
        %3088 = vperm.xlu0 %3087, %v3079
        %v3089 = vpop.permute.xlu0 %3088
        %3092 = vset.pattern.permute.xlu0 0
        %3093 = vperm.xlu0 %3092, %v3080
        %v3094 = vpop.permute.xlu0 %3093
        %v3096 = vmul.f32 %v3065, %v3084
        %v3097 = vmul.f32 %v3068, %v3089
        %v3098 = vmul.f32 %v3073, %v3094
        %vm3099 = vcmask 523264
        %3100 = vst.msk [vmem:[%s574] sm:$0xff] %vm3099, %v3096
        %3101 = vst.msk [vmem:[%s574 + $0x8] sm:$0xff] %vm3099, %v3097
        %3102 = vst.msk [vmem:[%s574 + $0x10] sm:$0xff] %vm3099, %v3098
        %s3103 = smul.u32 3, %s28
        %p3104 = scmp.lt.s32.totalorder %s3103, 11
        %s3105 = scalar_select %p3104, %s3103, 11
        %s3106 = smul.addr %s3105, 8
        %s3107 = scalar_lea.vmem %s13, %s3106
        // Predicated region
        $region97: #{tpu_custom_call.1} parent=71 // pred_check
          %p3108 = pneg %p334
        $region98: #{tpu_custom_call.1} parent=71 // pred_check_branch
          %3110 = sbr.rel (%p3108) target = $region100
        $region99: #{tpu_custom_call.1} parent=71 // pred_region
          %s3111 = smul.u32 3, %s28
        $region100: #{tpu_custom_call.1} parent=71 // pred_fallthru
          _
      $region72: #{tpu_custom_call.1} parent=5 // pred_fallthru
        _
      %p3112 = scmp.le.s32.totalorder 2, %s23
      // Predicated region
      $region101: #{tpu_custom_call.1} parent=5 // pred_check
        %p3113 = pneg %p3112
      $region102: #{tpu_custom_call.1} parent=5 // pred_check_branch
        %3115 = sbr.rel (%p3113) target = $region104
      $region103: #{tpu_custom_call.1} parent=5 // pred_region
        %s3116 = ssub.s32 %s23, 2
        // Predicated region
        $region105: #{tpu_custom_call.1} parent=103 // pred_check
          %p3117 = pneg %p340
        $region106: #{tpu_custom_call.1} parent=103 // pred_check_branch
          %3119 = sbr.rel (%p3117) target = $region108
        $region107: #{tpu_custom_call.1} parent=103 // pred_region
          %s3120 = smul.u32 3, %s29
          %p3121 = scmp.lt.s32.totalorder %s3120, 11
          %s3122 = scalar_select %p3121, %s3120, 11
          %s3123 = smul.addr %s3122, 8
          %s3124 = scalar_lea.vmem %s13, %s3123
        $region108: #{tpu_custom_call.1} parent=103 // pred_fallthru
          _
      $region104: #{tpu_custom_call.1} parent=5 // pred_fallthru
        _
    $region6: #{tpu_custom_call.1} parent=1 // loop_footer
      %s27 = sadd.s32 1, %s23
    $region7: #{tpu_custom_call.1} parent=1 // loop_footer_branch
      %22 = sbr.rel target = $region3
    $region8: #{tpu_custom_call.1} parent=1 // loop_exit
      _
    %3125 = vsyncpa [#allocation3], 1
    %s3126 = scalar_lea.sflag [#allocation3], 1
    %3127 = vsyncpa %s3126, 1
    %3128 = vsyncpa [#allocation5], 1
    %3129 = vsyncpa [#allocation8], 1
    %3130 = vsyncpa [#allocation11], 1

</llo_original>
